<compile_context>
chip_gen: v6e
topology: v6e:2x2x1
jax: 0.10.0
libtpu: 0.0.40
codegen_flags: <defaults>
</compile_context>

<pallas_src>
import jax
import jax.numpy as jnp
import numpy as np
from jax.experimental import pallas as pl
from jax.experimental.pallas import tpu as pltpu

NEG_SLOPE = 0.2          # GATv2Conv default negative_slope
GN_EPS = 1e-5            # GraphNorm eps
NEG_INF = -1e30          # only used by the pure-JAX reference


# ----------------------------- fused Pallas kernel -----------------------------

def make_gnn_kernel(num_layers, num_mlp):
    """Whole-network kernel: num_layers x (GATv2 + GraphNorm + ReLU) then num_mlp linears."""
    n_graph = 7  # x, e_flat, adj_flat, tsrc, tdst, gt, rexp

    def kernel(*refs):
        out_ref = refs[-1]
        x_ref, e_ref, adj_ref, tsrc_ref, tdst_ref, gt_ref, rexp_ref = refs[:n_graph]
        pr = refs[n_graph:-1]

        x = x_ref[...]          # (N, F)
        e = e_ref[...]          # (N*N, EP)   dense edge attrs (dst-major), zero-padded lanes
        adj = adj_ref[...]      # (N*N, 1)    1.0 on real edges + self loops, else 0.0
        tsrc = tsrc_ref[...]    # (N*N, N)    row r -> one-hot(src(r))
        tdst = tdst_ref[...]    # (N*N, N)    row r -> one-hot(dst(r))
        gt = gt_ref[...]        # (N, N*N)    transpose of tdst (group-sum over sources)
        rexp = rexp_ref[...]    # (H, H*C)    head -> channel expander

        idx = 0
        for _ in range(num_layers):
            wl, bl, wr, br, we, att_bd, bias, gnw, gnb, gnms = [
                pr[idx + k][...] for k in range(10)]
            idx += 10

            # --- GATv2Conv (all pairs at once, MXU matmuls) ---
            xl = jnp.dot(x, wl, preferred_element_type=jnp.float32) + bl      # (N, HC)
            xr = jnp.dot(x, wr, preferred_element_type=jnp.float32) + br      # (N, HC)
            ep = jnp.dot(e, we, preferred_element_type=jnp.float32)           # (N*N, HC)
            xl_rep = jnp.dot(tsrc, xl, preferred_element_type=jnp.float32)    # (N*N, HC) = x_l[src]
            xr_rep = jnp.dot(tdst, xr, preferred_element_type=jnp.float32)    # (N*N, HC) = x_r[dst]
            s = ep + xl_rep + xr_rep
            s = jnp.where(s > 0, s, NEG_SLOPE * s)                            # leaky_relu
            logits = jnp.dot(s, att_bd, preferred_element_type=jnp.float32)   # (N*N, H)

            # softmax over incoming edges of each dst node (per head).
            # Subtract a per-head global max (constant within every softmax group -> exact).
            gmax = jnp.max(logits, axis=0, keepdims=True)                     # (1, H)
            p = jnp.exp(logits - gmax) * adj                                  # zero on non-edges
            denom = jnp.dot(gt, p, preferred_element_type=jnp.float32)        # (N, H)
            inv_rep = jnp.dot(tdst, 1.0 / denom,
                              preferred_element_type=jnp.float32)             # (N*N, H)
            alpha = p * inv_rep                                               # (N*N, H)

            # aggregate messages: out[i, h*C+c] = sum_j alpha[i,j,h] * x_l[j, h*C+c]
            aexp = jnp.dot(alpha, rexp, preferred_element_type=jnp.float32)   # (N*N, HC)
            out = jnp.dot(gt, aexp * xl_rep,
                          preferred_element_type=jnp.float32) + bias          # (N, HC)

            # --- GraphNorm + ReLU (fused) ---
            mean = jnp.mean(out, axis=0, keepdims=True)
            cen = out - mean * gnms
            var = jnp.mean(cen * cen, axis=0, keepdims=True)
            y = gnw * cen / jnp.sqrt(var + GN_EPS) + gnb
            x = jnp.maximum(y, 0.0)
            # dropout: identity in eval mode

        # --- fused 3-layer MLP ---
        for k in range(num_mlp):
            w, b = pr[idx][...], pr[idx + 1][...]
            idx += 2
            x = jnp.dot(x, w, preferred_element_type=jnp.float32) + b
            if k < num_mlp - 1:
                x = jnp.maximum(x, 0.0)

        out_ref[...] = x

    return kernel


def gnn_forward(params_flat, x, e_flat_pad, adj_flat, consts,
                num_layers, num_mlp, output_dim):
    n = x.shape[0]
    kernel = make_gnn_kernel(num_layers, num_mlp)
    inputs = [x, e_flat_pad, adj_flat,
              consts["tsrc"], consts["tdst"], consts["gt"], consts["rexp"]] + list(params_flat)
    vmem = lambda: pl.BlockSpec(memory_space=pltpu.MemorySpace.VMEM)
    return pl.pallas_call(
        kernel,
        out_shape=jax.ShapeDtypeStruct((n, output_dim), jnp.float32),
        in_specs=[vmem() for _ in inputs],
        out_specs=vmem(),
    )(*inputs)


# ----------------------------- parameters & constants -----------------------------

def _glorot(key, shape):
    fan_in, fan_out = shape[0], shape[1]
    lim = np.sqrt(6.0 / (fan_in + fan_out))
    return jax.random.uniform(key, shape, jnp.float32, -lim, lim)


def _kaiming(key, fan_in, fan_out):
    std = np.sqrt(2.0 / fan_in)
    return jax.random.normal(key, (fan_in, fan_out), jnp.float32) * std


def init_params(key, input_dim, hidden_dim, edge_dim, output_dim, heads, num_layers):
    hc = hidden_dim * heads
    params = {"layers": [], "norms": [], "mlp": []}
    for i in range(num_layers):
        in_dim = input_dim if i == 0 else hc
        key, k1, k2, k3, k4 = jax.random.split(key, 5)
        params["layers"].append({
            "W_l": _glorot(k1, (in_dim, hc)), "b_l": jnp.zeros((hc,), jnp.float32),
            "W_r": _glorot(k2, (in_dim, hc)), "b_r": jnp.zeros((hc,), jnp.float32),
            "W_e": _glorot(k3, (edge_dim, hc)),                 # lin_edge (no bias)
            "att": _glorot(k4, (heads, hidden_dim)),
            "bias": jnp.zeros((hc,), jnp.float32),
        })
        params["norms"].append({                                # PyG GraphNorm defaults
            "weight": jnp.ones((hc,), jnp.float32),
            "bias": jnp.zeros((hc,), jnp.float32),
            "mean_scale": jnp.ones((hc,), jnp.float32),
        })
    for fi, fo in [(hc, 128), (128, 64), (64, output_dim)]:
        key, k = jax.random.split(key)
        params["mlp"].append({"W": _kaiming(k, fi, fo),
                              "b": jnp.zeros((fo,), jnp.float32)})
    return params


def build_graph_constants(n, heads, hidden_dim):
    """Selector matrices turning broadcast / segmented-softmax / aggregation into matmuls."""
    hc = heads * hidden_dim
    r = np.arange(n * n)
    tsrc = (r[:, None] % n == np.arange(n)[None, :]).astype(np.float32)   # (N*N, N)
    tdst = (r[:, None] // n == np.arange(n)[None, :]).astype(np.float32)  # (N*N, N)
    gt = np.ascontiguousarray(tdst.T)                                     # (N, N*N)
    sel = (np.arange(hc)[:, None] // hidden_dim ==
           np.arange(heads)[None, :]).astype(np.float32)                  # (HC, H)
    rexp = np.ascontiguousarray(sel.T)                                    # (H, HC)
    return {"tsrc": jnp.asarray(tsrc), "tdst": jnp.asarray(tdst),
            "gt": jnp.asarray(gt), "rexp": jnp.asarray(rexp)}


def prepare_params(params, heads, hidden_dim, edge_dim_pad):
    """Flatten / pad / reshape parameters once (hoisted out of the forward path)."""
    hc = heads * hidden_dim
    sel = (jnp.arange(hc)[:, None] // hidden_dim ==
           jnp.arange(heads)[None, :]).astype(jnp.float32)                # (HC, H)
    flat = []
    for lp, npar in zip(params["layers"], params["norms"]):
        we = lp["W_e"]
        we_pad = jnp.pad(we, ((0, edge_dim_pad - we.shape[0]), (0, 0)))   # lane-align K dim
        att_bd = sel * lp["att"].reshape(hc)[:, None]                     # block-diag (HC, H)
        flat += [lp["W_l"], lp["b_l"].reshape(1, hc),
                 lp["W_r"], lp["b_r"].reshape(1, hc),
                 we_pad, att_bd, lp["bias"].reshape(1, hc),
                 npar["weight"].reshape(1, hc), npar["bias"].reshape(1, hc),
                 npar["mean_scale"].reshape(1, hc)]
    for m in params["mlp"]:
        flat += [m["W"], m["b"].reshape(1, m["W"].shape[1])]
    return flat


# ----------------------------- graph glue (plain JAX) -----------------------------

def densify_graph(edge_index, edge_attr, num_nodes):
    src, dst = edge_index[0], edge_index[1]
    ed = edge_attr.shape[1]
    # self-loop edge features = mean of incoming edge features (add_self_loops fill_value='mean')
    sums = jnp.zeros((num_nodes, ed), jnp.float32).at[dst].add(edge_attr)
    cnt = jnp.zeros((num_nodes,), jnp.float32).at[dst].add(1.0)
    self_attr = sums / jnp.maximum(cnt, 1.0)[:, None]
    diag = jnp.arange(num_nodes)
    e_dense = jnp.zeros((num_nodes, num_nodes, ed), jnp.float32)
    e_dense = e_dense.at[dst, src].set(edge_attr)
    e_dense = e_dense.at[diag, diag].set(self_attr)
    adj = jnp.zeros((num_nodes, num_nodes), jnp.float32).at[dst, src].set(1.0)
    adj = adj.at[diag, diag].set(1.0)
    return e_dense, adj                     # both indexed [dst, src]


# ----------------------------- pure-JAX reference -----------------------------

def ref_forward(params, x, e_dense, mask3, heads, hidden_dim):
    n = x.shape[0]
    c = hidden_dim
    hc = heads * c
    for lp, npar in zip(params["layers"], params["norms"]):
        xl = x @ lp["W_l"] + lp["b_l"]
        xr = x @ lp["W_r"] + lp["b_r"]
        ep = (e_dense.reshape(n * n, -1) @ lp["W_e"]).reshape(n, n, heads, c)
        s = xl.reshape(1, n, heads, c) + xr.reshape(n, 1, heads, c) + ep
        s = jnp.where(s > 0, s, NEG_SLOPE * s)
        logits = jnp.einsum("ijhc,hc->ijh", s, lp["att"]) + mask3
        alpha = jax.nn.softmax(logits, axis=1)
        out = jnp.einsum("ijh,jhc->ihc", alpha, xl.reshape(n, heads, c)).reshape(n, hc)
        out = out + lp["bias"]
        mean = out.mean(axis=0, keepdims=True)
        cen = out - mean * npar["mean_scale"]
        var = (cen * cen).mean(axis=0, keepdims=True)
        x = jnp.maximum(npar["weight"] * cen / jnp.sqrt(var + GN_EPS) + npar["bias"], 0.0)
    h = jnp.maximum(x @ params["mlp"][0]["W"] + params["mlp"][0]["b"], 0.0)
    h = jnp.maximum(h @ params["mlp"][1]["W"] + params["mlp"][1]["b"], 0.0)
    return h @ params["mlp"][2]["W"] + params["mlp"][2]["b"]


# ----------------------------- main -----------------------------

if __name__ == "__main__":
    N, INPUT_DIM, HIDDEN_DIM, HEADS = 16, 12, 8, 4
    EDGE_DIM, OUTPUT_DIM, NUM_LAYERS, NUM_EDGES = 101, 1, 2, 48
    EDGE_DIM_PAD = ((EDGE_DIM + 127) // 128) * 128          # 101 -> 128 (lane aligned)

    key = jax.random.PRNGKey(0)
    k_x, k_e, k_perm, k_p = jax.random.split(key, 4)

    x = jax.random.normal(k_x, (N, INPUT_DIM), jnp.float32)

    # deterministic set of unique directed edges (no self-loops; conv adds them itself)
    pairs = np.array([(s, d) for s in range(N) for d in range(N) if s != d], dtype=np.int32)
    perm = np.asarray(jax.random.permutation(k_perm, pairs.shape[0]))
    edge_index = jnp.asarray(pairs[perm[:NUM_EDGES]].T)      # (2, E): [src; dst]
    edge_attr = jax.random.normal(k_e, (NUM_EDGES, EDGE_DIM), jnp.float32)

    params = init_params(k_p, INPUT_DIM, HIDDEN_DIM, EDGE_DIM, OUTPUT_DIM, HEADS, NUM_LAYERS)
    e_dense, adj = densify_graph(edge_index, edge_attr, N)

    # kernel-side inputs: padded flat edges, flat adjacency, selector constants, flat params
    e_flat_pad = jnp.pad(e_dense.reshape(N * N, EDGE_DIM),
                         ((0, 0), (0, EDGE_DIM_PAD - EDGE_DIM)))
    adj_flat = adj.reshape(N * N, 1)
    consts = build_graph_constants(N, HEADS, HIDDEN_DIM)
    params_flat = prepare_params(params, HEADS, HIDDEN_DIM, EDGE_DIM_PAD)

    out = gnn_forward(params_flat, x, e_flat_pad, adj_flat, consts,
                      NUM_LAYERS, 3, OUTPUT_DIM)
    out = jax.block_until_ready(out)

    mask3 = jnp.where(adj > 0, 0.0, NEG_INF)[:, :, None].astype(jnp.float32)
    ref = ref_forward(params, x, e_dense, mask3, HEADS, HIDDEN_DIM)
    assert out.shape == (N, OUTPUT_DIM)
    np.testing.assert_allclose(np.asarray(out), np.asarray(ref), rtol=1e-2, atol=1e-2)
    print("KERNEL_OK")
</pallas_src>

<mosaic_0001>
module attributes {stable_mosaic.version = 11 : i64} {
  func.func @kernel(%arg0: memref<16x12xf32, #tpu.memory_space<vmem>>, %arg1: memref<256x128xf32, #tpu.memory_space<vmem>>, %arg2: memref<256x1xf32, #tpu.memory_space<vmem>>, %arg3: memref<256x16xf32, #tpu.memory_space<vmem>>, %arg4: memref<256x16xf32, #tpu.memory_space<vmem>>, %arg5: memref<16x256xf32, #tpu.memory_space<vmem>>, %arg6: memref<4x32xf32, #tpu.memory_space<vmem>>, %arg7: memref<12x32xf32, #tpu.memory_space<vmem>>, %arg8: memref<1x32xf32, #tpu.memory_space<vmem>>, %arg9: memref<12x32xf32, #tpu.memory_space<vmem>>, %arg10: memref<1x32xf32, #tpu.memory_space<vmem>>, %arg11: memref<128x32xf32, #tpu.memory_space<vmem>>, %arg12: memref<32x4xf32, #tpu.memory_space<vmem>>, %arg13: memref<1x32xf32, #tpu.memory_space<vmem>>, %arg14: memref<1x32xf32, #tpu.memory_space<vmem>>, %arg15: memref<1x32xf32, #tpu.memory_space<vmem>>, %arg16: memref<1x32xf32, #tpu.memory_space<vmem>>, %arg17: memref<32x32xf32, #tpu.memory_space<vmem>>, %arg18: memref<1x32xf32, #tpu.memory_space<vmem>>, %arg19: memref<32x32xf32, #tpu.memory_space<vmem>>, %arg20: memref<1x32xf32, #tpu.memory_space<vmem>>, %arg21: memref<128x32xf32, #tpu.memory_space<vmem>>, %arg22: memref<32x4xf32, #tpu.memory_space<vmem>>, %arg23: memref<1x32xf32, #tpu.memory_space<vmem>>, %arg24: memref<1x32xf32, #tpu.memory_space<vmem>>, %arg25: memref<1x32xf32, #tpu.memory_space<vmem>>, %arg26: memref<1x32xf32, #tpu.memory_space<vmem>>, %arg27: memref<32x128xf32, #tpu.memory_space<vmem>>, %arg28: memref<1x128xf32, #tpu.memory_space<vmem>>, %arg29: memref<128x64xf32, #tpu.memory_space<vmem>>, %arg30: memref<1x64xf32, #tpu.memory_space<vmem>>, %arg31: memref<64x1xf32, #tpu.memory_space<vmem>>, %arg32: memref<1x1xf32, #tpu.memory_space<vmem>>, %arg33: memref<16x1xf32, #tpu.memory_space<vmem>>) attributes {dimension_semantics = [], scalar_prefetch = 0 : i64, scratch_operands = 0 : i64, tpu.core_type = #tpu.core_type<tc>} {
    %c0 = arith.constant 0 : index
    %c0_0 = arith.constant 0 : index
    %0 = vector.load %arg0[%c0, %c0_0] : memref<16x12xf32, #tpu.memory_space<vmem>>, vector<16x12xf32>
    %c0_1 = arith.constant 0 : index
    %c0_2 = arith.constant 0 : index
    %1 = vector.load %arg1[%c0_1, %c0_2] : memref<256x128xf32, #tpu.memory_space<vmem>>, vector<256x128xf32>
    %c0_3 = arith.constant 0 : index
    %c0_4 = arith.constant 0 : index
    %2 = vector.load %arg2[%c0_3, %c0_4] : memref<256x1xf32, #tpu.memory_space<vmem>>, vector<256x1xf32>
    %c0_5 = arith.constant 0 : index
    %c0_6 = arith.constant 0 : index
    %3 = vector.load %arg3[%c0_5, %c0_6] : memref<256x16xf32, #tpu.memory_space<vmem>>, vector<256x16xf32>
    %c0_7 = arith.constant 0 : index
    %c0_8 = arith.constant 0 : index
    %4 = vector.load %arg4[%c0_7, %c0_8] : memref<256x16xf32, #tpu.memory_space<vmem>>, vector<256x16xf32>
    %c0_9 = arith.constant 0 : index
    %c0_10 = arith.constant 0 : index
    %5 = vector.load %arg5[%c0_9, %c0_10] : memref<16x256xf32, #tpu.memory_space<vmem>>, vector<16x256xf32>
    %c0_11 = arith.constant 0 : index
    %c0_12 = arith.constant 0 : index
    %6 = vector.load %arg6[%c0_11, %c0_12] : memref<4x32xf32, #tpu.memory_space<vmem>>, vector<4x32xf32>
    %c0_13 = arith.constant 0 : index
    %c0_14 = arith.constant 0 : index
    %7 = vector.load %arg7[%c0_13, %c0_14] : memref<12x32xf32, #tpu.memory_space<vmem>>, vector<12x32xf32>
    %c0_15 = arith.constant 0 : index
    %c0_16 = arith.constant 0 : index
    %8 = vector.load %arg8[%c0_15, %c0_16] : memref<1x32xf32, #tpu.memory_space<vmem>>, vector<1x32xf32>
    %c0_17 = arith.constant 0 : index
    %c0_18 = arith.constant 0 : index
    %9 = vector.load %arg9[%c0_17, %c0_18] : memref<12x32xf32, #tpu.memory_space<vmem>>, vector<12x32xf32>
    %c0_19 = arith.constant 0 : index
    %c0_20 = arith.constant 0 : index
    %10 = vector.load %arg10[%c0_19, %c0_20] : memref<1x32xf32, #tpu.memory_space<vmem>>, vector<1x32xf32>
    %c0_21 = arith.constant 0 : index
    %c0_22 = arith.constant 0 : index
    %11 = vector.load %arg11[%c0_21, %c0_22] : memref<128x32xf32, #tpu.memory_space<vmem>>, vector<128x32xf32>
    %c0_23 = arith.constant 0 : index
    %c0_24 = arith.constant 0 : index
    %12 = vector.load %arg12[%c0_23, %c0_24] : memref<32x4xf32, #tpu.memory_space<vmem>>, vector<32x4xf32>
    %c0_25 = arith.constant 0 : index
    %c0_26 = arith.constant 0 : index
    %13 = vector.load %arg13[%c0_25, %c0_26] : memref<1x32xf32, #tpu.memory_space<vmem>>, vector<1x32xf32>
    %c0_27 = arith.constant 0 : index
    %c0_28 = arith.constant 0 : index
    %14 = vector.load %arg14[%c0_27, %c0_28] : memref<1x32xf32, #tpu.memory_space<vmem>>, vector<1x32xf32>
    %c0_29 = arith.constant 0 : index
    %c0_30 = arith.constant 0 : index
    %15 = vector.load %arg15[%c0_29, %c0_30] : memref<1x32xf32, #tpu.memory_space<vmem>>, vector<1x32xf32>
    %c0_31 = arith.constant 0 : index
    %c0_32 = arith.constant 0 : index
    %16 = vector.load %arg16[%c0_31, %c0_32] : memref<1x32xf32, #tpu.memory_space<vmem>>, vector<1x32xf32>
    %cst = arith.constant dense<0.000000e+00> : vector<16x32xf32>
    %17 = tpu.matmul %0, %7, %cst {dimension_numbers = #tpu.dot_dimension_numbers<[1], [0], [0], [1], [0, 0, 1, 1], [], []>} : vector<16x12xf32>, vector<12x32xf32>, vector<16x32xf32> -> vector<16x32xf32>
    %18 = vector.broadcast %8 : vector<1x32xf32> to vector<16x32xf32>
    %19 = arith.addf %17, %18 : vector<16x32xf32>
    %cst_33 = arith.constant dense<0.000000e+00> : vector<16x32xf32>
    %20 = tpu.matmul %0, %9, %cst_33 {dimension_numbers = #tpu.dot_dimension_numbers<[1], [0], [0], [1], [0, 0, 1, 1], [], []>} : vector<16x12xf32>, vector<12x32xf32>, vector<16x32xf32> -> vector<16x32xf32>
    %21 = vector.broadcast %10 : vector<1x32xf32> to vector<16x32xf32>
    %22 = arith.addf %20, %21 : vector<16x32xf32>
    %cst_34 = arith.constant dense<0.000000e+00> : vector<256x32xf32>
    %23 = tpu.matmul %1, %11, %cst_34 {dimension_numbers = #tpu.dot_dimension_numbers<[1], [0], [0], [1], [0, 0, 1, 1], [], []>} : vector<256x128xf32>, vector<128x32xf32>, vector<256x32xf32> -> vector<256x32xf32>
    %cst_35 = arith.constant dense<0.000000e+00> : vector<256x32xf32>
    %24 = tpu.matmul %3, %19, %cst_35 {dimension_numbers = #tpu.dot_dimension_numbers<[1], [0], [0], [1], [0, 0, 1, 1], [], []>} : vector<256x16xf32>, vector<16x32xf32>, vector<256x32xf32> -> vector<256x32xf32>
    %cst_36 = arith.constant dense<0.000000e+00> : vector<256x32xf32>
    %25 = tpu.matmul %4, %22, %cst_36 {dimension_numbers = #tpu.dot_dimension_numbers<[1], [0], [0], [1], [0, 0, 1, 1], [], []>} : vector<256x16xf32>, vector<16x32xf32>, vector<256x32xf32> -> vector<256x32xf32>
    %26 = arith.addf %23, %24 : vector<256x32xf32>
    %27 = arith.addf %26, %25 : vector<256x32xf32>
    %cst_37 = arith.constant 0.000000e+00 : f32
    %28 = vector.broadcast %cst_37 : f32 to vector<256x32xf32>
    %29 = arith.cmpf ogt, %27, %28 : vector<256x32xf32>
    %cst_38 = arith.constant 2.000000e-01 : f32
    %30 = vector.broadcast %cst_38 : f32 to vector<256x32xf32>
    %31 = arith.mulf %30, %27 : vector<256x32xf32>
    %32 = arith.select %29, %27, %31 : vector<256x32xi1>, vector<256x32xf32>
    %cst_39 = arith.constant dense<0.000000e+00> : vector<256x4xf32>
    %33 = tpu.matmul %32, %12, %cst_39 {dimension_numbers = #tpu.dot_dimension_numbers<[1], [0], [0], [1], [0, 0, 1, 1], [], []>} : vector<256x32xf32>, vector<32x4xf32>, vector<256x4xf32> -> vector<256x4xf32>
    %cst_40 = arith.constant dense<0xFF800000> : vector<4xf32>
    %34 = vector.multi_reduction <maximumf>, %33, %cst_40 [0] : vector<256x4xf32> to vector<4xf32>
    %35 = vector.shape_cast %34 : vector<4xf32> to vector<1x4xf32>
    %36 = vector.broadcast %35 : vector<1x4xf32> to vector<256x4xf32>
    %37 = arith.subf %33, %36 : vector<256x4xf32>
    %38 = math.exp %37 : vector<256x4xf32>
    %39 = vector.broadcast %2 : vector<256x1xf32> to vector<256x4xf32>
    %40 = arith.mulf %38, %39 : vector<256x4xf32>
    %cst_41 = arith.constant dense<0.000000e+00> : vector<16x4xf32>
    %41 = tpu.matmul %5, %40, %cst_41 {dimension_numbers = #tpu.dot_dimension_numbers<[1], [0], [0], [1], [0, 0, 1, 1], [], []>} : vector<16x256xf32>, vector<256x4xf32>, vector<16x4xf32> -> vector<16x4xf32>
    %cst_42 = arith.constant 1.000000e+00 : f32
    %42 = vector.broadcast %cst_42 : f32 to vector<16x4xf32>
    %43 = arith.divf %42, %41 : vector<16x4xf32>
    %cst_43 = arith.constant dense<0.000000e+00> : vector<256x4xf32>
    %44 = tpu.matmul %4, %43, %cst_43 {dimension_numbers = #tpu.dot_dimension_numbers<[1], [0], [0], [1], [0, 0, 1, 1], [], []>} : vector<256x16xf32>, vector<16x4xf32>, vector<256x4xf32> -> vector<256x4xf32>
    %45 = arith.mulf %40, %44 : vector<256x4xf32>
    %cst_44 = arith.constant dense<0.000000e+00> : vector<256x32xf32>
    %46 = tpu.matmul %45, %6, %cst_44 {dimension_numbers = #tpu.dot_dimension_numbers<[1], [0], [0], [1], [0, 0, 1, 1], [], []>} : vector<256x4xf32>, vector<4x32xf32>, vector<256x32xf32> -> vector<256x32xf32>
    %47 = arith.mulf %46, %24 : vector<256x32xf32>
    %cst_45 = arith.constant dense<0.000000e+00> : vector<16x32xf32>
    %48 = tpu.matmul %5, %47, %cst_45 {dimension_numbers = #tpu.dot_dimension_numbers<[1], [0], [0], [1], [0, 0, 1, 1], [], []>} : vector<16x256xf32>, vector<256x32xf32>, vector<16x32xf32> -> vector<16x32xf32>
    %49 = vector.broadcast %13 : vector<1x32xf32> to vector<16x32xf32>
    %50 = arith.addf %48, %49 : vector<16x32xf32>
    %cst_46 = arith.constant dense<0.000000e+00> : vector<32xf32>
    %51 = vector.multi_reduction <add>, %50, %cst_46 [0] : vector<16x32xf32> to vector<32xf32>
    %52 = vector.shape_cast %51 : vector<32xf32> to vector<1x32xf32>
    %cst_47 = arith.constant 1.600000e+01 : f32
    %53 = vector.broadcast %cst_47 : f32 to vector<1x32xf32>
    %54 = arith.divf %52, %53 : vector<1x32xf32>
    %55 = arith.mulf %54, %16 : vector<1x32xf32>
    %56 = vector.broadcast %55 : vector<1x32xf32> to vector<16x32xf32>
    %57 = arith.subf %50, %56 : vector<16x32xf32>
    %58 = arith.mulf %57, %57 : vector<16x32xf32>
    %cst_48 = arith.constant dense<0.000000e+00> : vector<32xf32>
    %59 = vector.multi_reduction <add>, %58, %cst_48 [0] : vector<16x32xf32> to vector<32xf32>
    %60 = vector.shape_cast %59 : vector<32xf32> to vector<1x32xf32>
    %cst_49 = arith.constant 1.600000e+01 : f32
    %61 = vector.broadcast %cst_49 : f32 to vector<1x32xf32>
    %62 = arith.divf %60, %61 : vector<1x32xf32>
    %63 = vector.broadcast %14 : vector<1x32xf32> to vector<16x32xf32>
    %64 = arith.mulf %63, %57 : vector<16x32xf32>
    %cst_50 = arith.constant 9.99999974E-6 : f32
    %65 = vector.broadcast %cst_50 : f32 to vector<1x32xf32>
    %66 = arith.addf %62, %65 : vector<1x32xf32>
    %67 = math.sqrt %66 : vector<1x32xf32>
    %68 = vector.broadcast %67 : vector<1x32xf32> to vector<16x32xf32>
    %69 = arith.divf %64, %68 : vector<16x32xf32>
    %70 = vector.broadcast %15 : vector<1x32xf32> to vector<16x32xf32>
    %71 = arith.addf %69, %70 : vector<16x32xf32>
    %cst_51 = arith.constant 0.000000e+00 : f32
    %72 = vector.broadcast %cst_51 : f32 to vector<16x32xf32>
    %73 = arith.maximumf %71, %72 : vector<16x32xf32>
    %c0_52 = arith.constant 0 : index
    %c0_53 = arith.constant 0 : index
    %74 = vector.load %arg17[%c0_52, %c0_53] : memref<32x32xf32, #tpu.memory_space<vmem>>, vector<32x32xf32>
    %c0_54 = arith.constant 0 : index
    %c0_55 = arith.constant 0 : index
    %75 = vector.load %arg18[%c0_54, %c0_55] : memref<1x32xf32, #tpu.memory_space<vmem>>, vector<1x32xf32>
    %c0_56 = arith.constant 0 : index
    %c0_57 = arith.constant 0 : index
    %76 = vector.load %arg19[%c0_56, %c0_57] : memref<32x32xf32, #tpu.memory_space<vmem>>, vector<32x32xf32>
    %c0_58 = arith.constant 0 : index
    %c0_59 = arith.constant 0 : index
    %77 = vector.load %arg20[%c0_58, %c0_59] : memref<1x32xf32, #tpu.memory_space<vmem>>, vector<1x32xf32>
    %c0_60 = arith.constant 0 : index
    %c0_61 = arith.constant 0 : index
    %78 = vector.load %arg21[%c0_60, %c0_61] : memref<128x32xf32, #tpu.memory_space<vmem>>, vector<128x32xf32>
    %c0_62 = arith.constant 0 : index
    %c0_63 = arith.constant 0 : index
    %79 = vector.load %arg22[%c0_62, %c0_63] : memref<32x4xf32, #tpu.memory_space<vmem>>, vector<32x4xf32>
    %c0_64 = arith.constant 0 : index
    %c0_65 = arith.constant 0 : index
    %80 = vector.load %arg23[%c0_64, %c0_65] : memref<1x32xf32, #tpu.memory_space<vmem>>, vector<1x32xf32>
    %c0_66 = arith.constant 0 : index
    %c0_67 = arith.constant 0 : index
    %81 = vector.load %arg24[%c0_66, %c0_67] : memref<1x32xf32, #tpu.memory_space<vmem>>, vector<1x32xf32>
    %c0_68 = arith.constant 0 : index
    %c0_69 = arith.constant 0 : index
    %82 = vector.load %arg25[%c0_68, %c0_69] : memref<1x32xf32, #tpu.memory_space<vmem>>, vector<1x32xf32>
    %c0_70 = arith.constant 0 : index
    %c0_71 = arith.constant 0 : index
    %83 = vector.load %arg26[%c0_70, %c0_71] : memref<1x32xf32, #tpu.memory_space<vmem>>, vector<1x32xf32>
    %cst_72 = arith.constant dense<0.000000e+00> : vector<16x32xf32>
    %84 = tpu.matmul %73, %74, %cst_72 {dimension_numbers = #tpu.dot_dimension_numbers<[1], [0], [0], [1], [0, 0, 1, 1], [], []>} : vector<16x32xf32>, vector<32x32xf32>, vector<16x32xf32> -> vector<16x32xf32>
    %85 = vector.broadcast %75 : vector<1x32xf32> to vector<16x32xf32>
    %86 = arith.addf %84, %85 : vector<16x32xf32>
    %cst_73 = arith.constant dense<0.000000e+00> : vector<16x32xf32>
    %87 = tpu.matmul %73, %76, %cst_73 {dimension_numbers = #tpu.dot_dimension_numbers<[1], [0], [0], [1], [0, 0, 1, 1], [], []>} : vector<16x32xf32>, vector<32x32xf32>, vector<16x32xf32> -> vector<16x32xf32>
    %88 = vector.broadcast %77 : vector<1x32xf32> to vector<16x32xf32>
    %89 = arith.addf %87, %88 : vector<16x32xf32>
    %cst_74 = arith.constant dense<0.000000e+00> : vector<256x32xf32>
    %90 = tpu.matmul %1, %78, %cst_74 {dimension_numbers = #tpu.dot_dimension_numbers<[1], [0], [0], [1], [0, 0, 1, 1], [], []>} : vector<256x128xf32>, vector<128x32xf32>, vector<256x32xf32> -> vector<256x32xf32>
    %cst_75 = arith.constant dense<0.000000e+00> : vector<256x32xf32>
    %91 = tpu.matmul %3, %86, %cst_75 {dimension_numbers = #tpu.dot_dimension_numbers<[1], [0], [0], [1], [0, 0, 1, 1], [], []>} : vector<256x16xf32>, vector<16x32xf32>, vector<256x32xf32> -> vector<256x32xf32>
    %cst_76 = arith.constant dense<0.000000e+00> : vector<256x32xf32>
    %92 = tpu.matmul %4, %89, %cst_76 {dimension_numbers = #tpu.dot_dimension_numbers<[1], [0], [0], [1], [0, 0, 1, 1], [], []>} : vector<256x16xf32>, vector<16x32xf32>, vector<256x32xf32> -> vector<256x32xf32>
    %93 = arith.addf %90, %91 : vector<256x32xf32>
    %94 = arith.addf %93, %92 : vector<256x32xf32>
    %cst_77 = arith.constant 0.000000e+00 : f32
    %95 = vector.broadcast %cst_77 : f32 to vector<256x32xf32>
    %96 = arith.cmpf ogt, %94, %95 : vector<256x32xf32>
    %cst_78 = arith.constant 2.000000e-01 : f32
    %97 = vector.broadcast %cst_78 : f32 to vector<256x32xf32>
    %98 = arith.mulf %97, %94 : vector<256x32xf32>
    %99 = arith.select %96, %94, %98 : vector<256x32xi1>, vector<256x32xf32>
    %cst_79 = arith.constant dense<0.000000e+00> : vector<256x4xf32>
    %100 = tpu.matmul %99, %79, %cst_79 {dimension_numbers = #tpu.dot_dimension_numbers<[1], [0], [0], [1], [0, 0, 1, 1], [], []>} : vector<256x32xf32>, vector<32x4xf32>, vector<256x4xf32> -> vector<256x4xf32>
    %cst_80 = arith.constant dense<0xFF800000> : vector<4xf32>
    %101 = vector.multi_reduction <maximumf>, %100, %cst_80 [0] : vector<256x4xf32> to vector<4xf32>
    %102 = vector.shape_cast %101 : vector<4xf32> to vector<1x4xf32>
    %103 = vector.broadcast %102 : vector<1x4xf32> to vector<256x4xf32>
    %104 = arith.subf %100, %103 : vector<256x4xf32>
    %105 = math.exp %104 : vector<256x4xf32>
    %106 = vector.broadcast %2 : vector<256x1xf32> to vector<256x4xf32>
    %107 = arith.mulf %105, %106 : vector<256x4xf32>
    %cst_81 = arith.constant dense<0.000000e+00> : vector<16x4xf32>
    %108 = tpu.matmul %5, %107, %cst_81 {dimension_numbers = #tpu.dot_dimension_numbers<[1], [0], [0], [1], [0, 0, 1, 1], [], []>} : vector<16x256xf32>, vector<256x4xf32>, vector<16x4xf32> -> vector<16x4xf32>
    %cst_82 = arith.constant 1.000000e+00 : f32
    %109 = vector.broadcast %cst_82 : f32 to vector<16x4xf32>
    %110 = arith.divf %109, %108 : vector<16x4xf32>
    %cst_83 = arith.constant dense<0.000000e+00> : vector<256x4xf32>
    %111 = tpu.matmul %4, %110, %cst_83 {dimension_numbers = #tpu.dot_dimension_numbers<[1], [0], [0], [1], [0, 0, 1, 1], [], []>} : vector<256x16xf32>, vector<16x4xf32>, vector<256x4xf32> -> vector<256x4xf32>
    %112 = arith.mulf %107, %111 : vector<256x4xf32>
    %cst_84 = arith.constant dense<0.000000e+00> : vector<256x32xf32>
    %113 = tpu.matmul %112, %6, %cst_84 {dimension_numbers = #tpu.dot_dimension_numbers<[1], [0], [0], [1], [0, 0, 1, 1], [], []>} : vector<256x4xf32>, vector<4x32xf32>, vector<256x32xf32> -> vector<256x32xf32>
    %114 = arith.mulf %113, %91 : vector<256x32xf32>
    %cst_85 = arith.constant dense<0.000000e+00> : vector<16x32xf32>
    %115 = tpu.matmul %5, %114, %cst_85 {dimension_numbers = #tpu.dot_dimension_numbers<[1], [0], [0], [1], [0, 0, 1, 1], [], []>} : vector<16x256xf32>, vector<256x32xf32>, vector<16x32xf32> -> vector<16x32xf32>
    %116 = vector.broadcast %80 : vector<1x32xf32> to vector<16x32xf32>
    %117 = arith.addf %115, %116 : vector<16x32xf32>
    %cst_86 = arith.constant dense<0.000000e+00> : vector<32xf32>
    %118 = vector.multi_reduction <add>, %117, %cst_86 [0] : vector<16x32xf32> to vector<32xf32>
    %119 = vector.shape_cast %118 : vector<32xf32> to vector<1x32xf32>
    %cst_87 = arith.constant 1.600000e+01 : f32
    %120 = vector.broadcast %cst_87 : f32 to vector<1x32xf32>
    %121 = arith.divf %119, %120 : vector<1x32xf32>
    %122 = arith.mulf %121, %83 : vector<1x32xf32>
    %123 = vector.broadcast %122 : vector<1x32xf32> to vector<16x32xf32>
    %124 = arith.subf %117, %123 : vector<16x32xf32>
    %125 = arith.mulf %124, %124 : vector<16x32xf32>
    %cst_88 = arith.constant dense<0.000000e+00> : vector<32xf32>
    %126 = vector.multi_reduction <add>, %125, %cst_88 [0] : vector<16x32xf32> to vector<32xf32>
    %127 = vector.shape_cast %126 : vector<32xf32> to vector<1x32xf32>
    %cst_89 = arith.constant 1.600000e+01 : f32
    %128 = vector.broadcast %cst_89 : f32 to vector<1x32xf32>
    %129 = arith.divf %127, %128 : vector<1x32xf32>
    %130 = vector.broadcast %81 : vector<1x32xf32> to vector<16x32xf32>
    %131 = arith.mulf %130, %124 : vector<16x32xf32>
    %cst_90 = arith.constant 9.99999974E-6 : f32
    %132 = vector.broadcast %cst_90 : f32 to vector<1x32xf32>
    %133 = arith.addf %129, %132 : vector<1x32xf32>
    %134 = math.sqrt %133 : vector<1x32xf32>
    %135 = vector.broadcast %134 : vector<1x32xf32> to vector<16x32xf32>
    %136 = arith.divf %131, %135 : vector<16x32xf32>
    %137 = vector.broadcast %82 : vector<1x32xf32> to vector<16x32xf32>
    %138 = arith.addf %136, %137 : vector<16x32xf32>
    %cst_91 = arith.constant 0.000000e+00 : f32
    %139 = vector.broadcast %cst_91 : f32 to vector<16x32xf32>
    %140 = arith.maximumf %138, %139 : vector<16x32xf32>
    %c0_92 = arith.constant 0 : index
    %c0_93 = arith.constant 0 : index
    %141 = vector.load %arg27[%c0_92, %c0_93] : memref<32x128xf32, #tpu.memory_space<vmem>>, vector<32x128xf32>
    %c0_94 = arith.constant 0 : index
    %c0_95 = arith.constant 0 : index
    %142 = vector.load %arg28[%c0_94, %c0_95] : memref<1x128xf32, #tpu.memory_space<vmem>>, vector<1x128xf32>
    %cst_96 = arith.constant dense<0.000000e+00> : vector<16x128xf32>
    %143 = tpu.matmul %140, %141, %cst_96 {dimension_numbers = #tpu.dot_dimension_numbers<[1], [0], [0], [1], [0, 0, 1, 1], [], []>} : vector<16x32xf32>, vector<32x128xf32>, vector<16x128xf32> -> vector<16x128xf32>
    %144 = vector.broadcast %142 : vector<1x128xf32> to vector<16x128xf32>
    %145 = arith.addf %143, %144 : vector<16x128xf32>
    %cst_97 = arith.constant 0.000000e+00 : f32
    %146 = vector.broadcast %cst_97 : f32 to vector<16x128xf32>
    %147 = arith.maximumf %145, %146 : vector<16x128xf32>
    %c0_98 = arith.constant 0 : index
    %c0_99 = arith.constant 0 : index
    %148 = vector.load %arg29[%c0_98, %c0_99] : memref<128x64xf32, #tpu.memory_space<vmem>>, vector<128x64xf32>
    %c0_100 = arith.constant 0 : index
    %c0_101 = arith.constant 0 : index
    %149 = vector.load %arg30[%c0_100, %c0_101] : memref<1x64xf32, #tpu.memory_space<vmem>>, vector<1x64xf32>
    %cst_102 = arith.constant dense<0.000000e+00> : vector<16x64xf32>
    %150 = tpu.matmul %147, %148, %cst_102 {dimension_numbers = #tpu.dot_dimension_numbers<[1], [0], [0], [1], [0, 0, 1, 1], [], []>} : vector<16x128xf32>, vector<128x64xf32>, vector<16x64xf32> -> vector<16x64xf32>
    %151 = vector.broadcast %149 : vector<1x64xf32> to vector<16x64xf32>
    %152 = arith.addf %150, %151 : vector<16x64xf32>
    %cst_103 = arith.constant 0.000000e+00 : f32
    %153 = vector.broadcast %cst_103 : f32 to vector<16x64xf32>
    %154 = arith.maximumf %152, %153 : vector<16x64xf32>
    %c0_104 = arith.constant 0 : index
    %c0_105 = arith.constant 0 : index
    %155 = vector.load %arg31[%c0_104, %c0_105] : memref<64x1xf32, #tpu.memory_space<vmem>>, vector<64x1xf32>
    %c0_106 = arith.constant 0 : index
    %c0_107 = arith.constant 0 : index
    %156 = vector.load %arg32[%c0_106, %c0_107] : memref<1x1xf32, #tpu.memory_space<vmem>>, vector<1x1xf32>
    %cst_108 = arith.constant dense<0.000000e+00> : vector<16x1xf32>
    %157 = tpu.matmul %154, %155, %cst_108 {dimension_numbers = #tpu.dot_dimension_numbers<[1], [0], [0], [1], [0, 0, 1, 1], [], []>} : vector<16x64xf32>, vector<64x1xf32>, vector<16x1xf32> -> vector<16x1xf32>
    %158 = vector.broadcast %156 : vector<1x1xf32> to vector<16x1xf32>
    %159 = arith.addf %157, %158 : vector<16x1xf32>
    %c0_109 = arith.constant 0 : index
    %c0_110 = arith.constant 0 : index
    %160 = vector.load %arg33[%c0_109, %c0_110] : memref<16x1xf32, #tpu.memory_space<vmem>>, vector<16x1xf32>
    tpu.vector_store %arg33[%c0_109, %c0_110], %159 {strides = array<i32>} : memref<16x1xf32, #tpu.memory_space<vmem>>, vector<16x1xf32>,
    return
  }
}

</mosaic_0001>

<llo_original>
// kernel: tpu_custom_call.1
$region0: #{tpu_custom_call.1}
  #allocation0 [shape = 'u32[]', space=smem, size = 0x4, offset = 0x4, fixed_abs, tag = 'smem constant byte address 0x4 - core index']
  #allocation1 [shape = 'u32[144,128]{1,0:T(1,128)}', space=vmem, size = 0x12000, scoped, tag = 'internal scratch']
  #allocation2 [shape = 'f32[1,1]{1,0:T(1,128)S(1)}', space=vmem, size = 0x200, scoped, tag = 'scoped memory for tpu_custom_call.1']
  %s0 = inlined_call_operand.smem [shape: u32[34], index: -1, kind: input, shape index: {}]
  %s1 = sld [smem:[%s0]]
  %s2 = scalar_lea.smem %s0, 1
  %s3 = sld [smem:[%s2]]
  %s4 = scalar_lea.smem %s0, 2
  %s5 = sld [smem:[%s4]]
  %s6 = scalar_lea.smem %s0, 3
  %s7 = sld [smem:[%s6]]
  %s8 = scalar_lea.smem %s0, 4
  %s9 = sld [smem:[%s8]]
  %s10 = scalar_lea.smem %s0, 5
  %s11 = sld [smem:[%s10]]
  %s12 = scalar_lea.smem %s0, 6
  %s13 = sld [smem:[%s12]]
  %s14 = scalar_lea.smem %s0, 7
  %s15 = sld [smem:[%s14]]
  %s16 = scalar_lea.smem %s0, 8
  %s17 = sld [smem:[%s16]]
  %s18 = scalar_lea.smem %s0, 9
  %s19 = sld [smem:[%s18]]
  %s20 = scalar_lea.smem %s0, 10
  %s21 = sld [smem:[%s20]]
  %s22 = scalar_lea.smem %s0, 11
  %s23 = sld [smem:[%s22]]
  %s24 = scalar_lea.smem %s0, 12
  %s25 = sld [smem:[%s24]]
  %s26 = scalar_lea.smem %s0, 13
  %s27 = sld [smem:[%s26]]
  %s28 = scalar_lea.smem %s0, 14
  %s29 = sld [smem:[%s28]]
  %s30 = scalar_lea.smem %s0, 15
  %s31 = sld [smem:[%s30]]
  %s32 = scalar_lea.smem %s0, 16
  %s33 = sld [smem:[%s32]]
  %s34 = scalar_lea.smem %s0, 17
  %s35 = sld [smem:[%s34]]
  %s36 = scalar_lea.smem %s0, 18
  %s37 = sld [smem:[%s36]]
  %s38 = scalar_lea.smem %s0, 19
  %s39 = sld [smem:[%s38]]
  %s40 = scalar_lea.smem %s0, 20
  %s41 = sld [smem:[%s40]]
  %s42 = scalar_lea.smem %s0, 21
  %s43 = sld [smem:[%s42]]
  %s44 = scalar_lea.smem %s0, 22
  %s45 = sld [smem:[%s44]]
  %s46 = scalar_lea.smem %s0, 23
  %s47 = sld [smem:[%s46]]
  %s48 = scalar_lea.smem %s0, 24
  %s49 = sld [smem:[%s48]]
  %s50 = scalar_lea.smem %s0, 25
  %s51 = sld [smem:[%s50]]
  %s52 = scalar_lea.smem %s0, 26
  %s53 = sld [smem:[%s52]]
  %s54 = scalar_lea.smem %s0, 27
  %s55 = sld [smem:[%s54]]
  %s56 = scalar_lea.smem %s0, 28
  %s57 = sld [smem:[%s56]]
  %s58 = scalar_lea.smem %s0, 29
  %s59 = sld [smem:[%s58]]
  %s60 = scalar_lea.smem %s0, 30
  %s61 = sld [smem:[%s60]]
  %s62 = scalar_lea.smem %s0, 31
  %s63 = sld [smem:[%s62]]
  %s64 = scalar_lea.smem %s0, 32
  %s65 = sld [smem:[%s64]]
  %s66 = scalar_lea.smem %s0, 33
  %s67 = sld [smem:[%s66]]
  %s68 = sld [smem:[#allocation0]]
  $region142: #{tpu_custom_call.1} parent=0
    _
  %s70 = ssub.s32 1, %s68
  %s71 = scalar_select 0, %s70, %s68
  %v72 = vstv %s65
  %73 = vst [vmem:[#allocation2] sm:$0x1] %v72
  // Predicated region
  $region2: #{tpu_custom_call.1} parent=0 // pred_check
    _
  $region3: #{tpu_custom_call.1} parent=0 // pred_check_branch
    %75 = sbr.rel (0) target = $region5
  $region4: #{tpu_custom_call.1} parent=0 // pred_region
    _
  $region5: #{tpu_custom_call.1} parent=0 // pred_fallthru
    _
  // Predicated region
  $region6: #{tpu_custom_call.1} parent=0 // pred_check
    _
  $region7: #{tpu_custom_call.1} parent=0 // pred_check_branch
    %77 = sbr.rel (0) target = $region9
  $region8: #{tpu_custom_call.1} parent=0 // pred_region
    _
  $region9: #{tpu_custom_call.1} parent=0 // pred_fallthru
    _
  // Predicated region
  $region10: #{tpu_custom_call.1} parent=0 // pred_check
    _
  $region11: #{tpu_custom_call.1} parent=0 // pred_check_branch
    %79 = sbr.rel (0) target = $region13
  $region12: #{tpu_custom_call.1} parent=0 // pred_region
    _
  $region13: #{tpu_custom_call.1} parent=0 // pred_fallthru
    _
  // Predicated region
  $region14: #{tpu_custom_call.1} parent=0 // pred_check
    _
  $region15: #{tpu_custom_call.1} parent=0 // pred_check_branch
    %81 = sbr.rel (0) target = $region17
  $region16: #{tpu_custom_call.1} parent=0 // pred_region
    _
  $region17: #{tpu_custom_call.1} parent=0 // pred_fallthru
    _
  // Predicated region
  $region18: #{tpu_custom_call.1} parent=0 // pred_check
    _
  $region19: #{tpu_custom_call.1} parent=0 // pred_check_branch
    %83 = sbr.rel (0) target = $region21
  $region20: #{tpu_custom_call.1} parent=0 // pred_region
    _
  $region21: #{tpu_custom_call.1} parent=0 // pred_fallthru
    _
  // Predicated region
  $region22: #{tpu_custom_call.1} parent=0 // pred_check
    _
  $region23: #{tpu_custom_call.1} parent=0 // pred_check_branch
    %85 = sbr.rel (0) target = $region25
  $region24: #{tpu_custom_call.1} parent=0 // pred_region
    _
  $region25: #{tpu_custom_call.1} parent=0 // pred_fallthru
    _
  // Predicated region
  $region26: #{tpu_custom_call.1} parent=0 // pred_check
    _
  $region27: #{tpu_custom_call.1} parent=0 // pred_check_branch
    %87 = sbr.rel (0) target = $region29
  $region28: #{tpu_custom_call.1} parent=0 // pred_region
    _
  $region29: #{tpu_custom_call.1} parent=0 // pred_fallthru
    _
  // Predicated region
  $region30: #{tpu_custom_call.1} parent=0 // pred_check
    _
  $region31: #{tpu_custom_call.1} parent=0 // pred_check_branch
    %89 = sbr.rel (0) target = $region33
  $region32: #{tpu_custom_call.1} parent=0 // pred_region
    _
  $region33: #{tpu_custom_call.1} parent=0 // pred_fallthru
    _
  // Predicated region
  $region34: #{tpu_custom_call.1} parent=0 // pred_check
    _
  $region35: #{tpu_custom_call.1} parent=0 // pred_check_branch
    %91 = sbr.rel (0) target = $region37
  $region36: #{tpu_custom_call.1} parent=0 // pred_region
    _
  $region37: #{tpu_custom_call.1} parent=0 // pred_fallthru
    _
  // Predicated region
  $region38: #{tpu_custom_call.1} parent=0 // pred_check
    _
  $region39: #{tpu_custom_call.1} parent=0 // pred_check_branch
    %93 = sbr.rel (0) target = $region41
  $region40: #{tpu_custom_call.1} parent=0 // pred_region
    _
  $region41: #{tpu_custom_call.1} parent=0 // pred_fallthru
    _
  // Predicated region
  $region42: #{tpu_custom_call.1} parent=0 // pred_check
    _
  $region43: #{tpu_custom_call.1} parent=0 // pred_check_branch
    %95 = sbr.rel (0) target = $region45
  $region44: #{tpu_custom_call.1} parent=0 // pred_region
    _
  $region45: #{tpu_custom_call.1} parent=0 // pred_fallthru
    _
  // Predicated region
  $region46: #{tpu_custom_call.1} parent=0 // pred_check
    _
  $region47: #{tpu_custom_call.1} parent=0 // pred_check_branch
    %97 = sbr.rel (0) target = $region49
  $region48: #{tpu_custom_call.1} parent=0 // pred_region
    _
  $region49: #{tpu_custom_call.1} parent=0 // pred_fallthru
    _
  // Predicated region
  $region50: #{tpu_custom_call.1} parent=0 // pred_check
    _
  $region51: #{tpu_custom_call.1} parent=0 // pred_check_branch
    %99 = sbr.rel (0) target = $region53
  $region52: #{tpu_custom_call.1} parent=0 // pred_region
    _
  $region53: #{tpu_custom_call.1} parent=0 // pred_fallthru
    _
  // Predicated region
  $region54: #{tpu_custom_call.1} parent=0 // pred_check
    _
  $region55: #{tpu_custom_call.1} parent=0 // pred_check_branch
    %101 = sbr.rel (0) target = $region57
  $region56: #{tpu_custom_call.1} parent=0 // pred_region
    _
  $region57: #{tpu_custom_call.1} parent=0 // pred_fallthru
    _
  // Predicated region
  $region58: #{tpu_custom_call.1} parent=0 // pred_check
    _
  $region59: #{tpu_custom_call.1} parent=0 // pred_check_branch
    %103 = sbr.rel (0) target = $region61
  $region60: #{tpu_custom_call.1} parent=0 // pred_region
    _
  $region61: #{tpu_custom_call.1} parent=0 // pred_fallthru
    _
  // Predicated region
  $region62: #{tpu_custom_call.1} parent=0 // pred_check
    _
  $region63: #{tpu_custom_call.1} parent=0 // pred_check_branch
    %105 = sbr.rel (0) target = $region65
  $region64: #{tpu_custom_call.1} parent=0 // pred_region
    _
  $region65: #{tpu_custom_call.1} parent=0 // pred_fallthru
    _
  // Predicated region
  $region66: #{tpu_custom_call.1} parent=0 // pred_check
    _
  $region67: #{tpu_custom_call.1} parent=0 // pred_check_branch
    %107 = sbr.rel (0) target = $region69
  $region68: #{tpu_custom_call.1} parent=0 // pred_region
    _
  $region69: #{tpu_custom_call.1} parent=0 // pred_fallthru
    _
  // Predicated region
  $region70: #{tpu_custom_call.1} parent=0 // pred_check
    _
  $region71: #{tpu_custom_call.1} parent=0 // pred_check_branch
    %109 = sbr.rel (0) target = $region73
  $region72: #{tpu_custom_call.1} parent=0 // pred_region
    _
  $region73: #{tpu_custom_call.1} parent=0 // pred_fallthru
    _
  // Predicated region
  $region74: #{tpu_custom_call.1} parent=0 // pred_check
    _
  $region75: #{tpu_custom_call.1} parent=0 // pred_check_branch
    %111 = sbr.rel (0) target = $region77
  $region76: #{tpu_custom_call.1} parent=0 // pred_region
    _
  $region77: #{tpu_custom_call.1} parent=0 // pred_fallthru
    _
  // Predicated region
  $region78: #{tpu_custom_call.1} parent=0 // pred_check
    _
  $region79: #{tpu_custom_call.1} parent=0 // pred_check_branch
    %113 = sbr.rel (0) target = $region81
  $region80: #{tpu_custom_call.1} parent=0 // pred_region
    _
  $region81: #{tpu_custom_call.1} parent=0 // pred_fallthru
    _
  // Predicated region
  $region82: #{tpu_custom_call.1} parent=0 // pred_check
    _
  $region83: #{tpu_custom_call.1} parent=0 // pred_check_branch
    %115 = sbr.rel (0) target = $region85
  $region84: #{tpu_custom_call.1} parent=0 // pred_region
    _
  $region85: #{tpu_custom_call.1} parent=0 // pred_fallthru
    _
  // Predicated region
  $region86: #{tpu_custom_call.1} parent=0 // pred_check
    _
  $region87: #{tpu_custom_call.1} parent=0 // pred_check_branch
    %117 = sbr.rel (0) target = $region89
  $region88: #{tpu_custom_call.1} parent=0 // pred_region
    _
  $region89: #{tpu_custom_call.1} parent=0 // pred_fallthru
    _
  // Predicated region
  $region90: #{tpu_custom_call.1} parent=0 // pred_check
    _
  $region91: #{tpu_custom_call.1} parent=0 // pred_check_branch
    %119 = sbr.rel (0) target = $region93
  $region92: #{tpu_custom_call.1} parent=0 // pred_region
    _
  $region93: #{tpu_custom_call.1} parent=0 // pred_fallthru
    _
  // Predicated region
  $region94: #{tpu_custom_call.1} parent=0 // pred_check
    _
  $region95: #{tpu_custom_call.1} parent=0 // pred_check_branch
    %121 = sbr.rel (0) target = $region97
  $region96: #{tpu_custom_call.1} parent=0 // pred_region
    _
  $region97: #{tpu_custom_call.1} parent=0 // pred_fallthru
    _
  // Predicated region
  $region98: #{tpu_custom_call.1} parent=0 // pred_check
    _
  $region99: #{tpu_custom_call.1} parent=0 // pred_check_branch
    %123 = sbr.rel (0) target = $region101
  $region100: #{tpu_custom_call.1} parent=0 // pred_region
    _
  $region101: #{tpu_custom_call.1} parent=0 // pred_fallthru
    _
  // Predicated region
  $region102: #{tpu_custom_call.1} parent=0 // pred_check
    _
  $region103: #{tpu_custom_call.1} parent=0 // pred_check_branch
    %125 = sbr.rel (0) target = $region105
  $region104: #{tpu_custom_call.1} parent=0 // pred_region
    _
  $region105: #{tpu_custom_call.1} parent=0 // pred_fallthru
    _
  // Predicated region
  $region106: #{tpu_custom_call.1} parent=0 // pred_check
    _
  $region107: #{tpu_custom_call.1} parent=0 // pred_check_branch
    %127 = sbr.rel (0) target = $region109
  $region108: #{tpu_custom_call.1} parent=0 // pred_region
    _
  $region109: #{tpu_custom_call.1} parent=0 // pred_fallthru
    _
  // Predicated region
  $region110: #{tpu_custom_call.1} parent=0 // pred_check
    _
  $region111: #{tpu_custom_call.1} parent=0 // pred_check_branch
    %129 = sbr.rel (0) target = $region113
  $region112: #{tpu_custom_call.1} parent=0 // pred_region
    _
  $region113: #{tpu_custom_call.1} parent=0 // pred_fallthru
    _
  // Predicated region
  $region114: #{tpu_custom_call.1} parent=0 // pred_check
    _
  $region115: #{tpu_custom_call.1} parent=0 // pred_check_branch
    %131 = sbr.rel (0) target = $region117
  $region116: #{tpu_custom_call.1} parent=0 // pred_region
    _
  $region117: #{tpu_custom_call.1} parent=0 // pred_fallthru
    _
  // Predicated region
  $region118: #{tpu_custom_call.1} parent=0 // pred_check
    _
  $region119: #{tpu_custom_call.1} parent=0 // pred_check_branch
    %133 = sbr.rel (0) target = $region121
  $region120: #{tpu_custom_call.1} parent=0 // pred_region
    _
  $region121: #{tpu_custom_call.1} parent=0 // pred_fallthru
    _
  // Predicated region
  $region122: #{tpu_custom_call.1} parent=0 // pred_check
    _
  $region123: #{tpu_custom_call.1} parent=0 // pred_check_branch
    %135 = sbr.rel (0) target = $region125
  $region124: #{tpu_custom_call.1} parent=0 // pred_region
    _
  $region125: #{tpu_custom_call.1} parent=0 // pred_fallthru
    _
  // Predicated region
  $region126: #{tpu_custom_call.1} parent=0 // pred_check
    _
  $region127: #{tpu_custom_call.1} parent=0 // pred_check_branch
    %137 = sbr.rel (0) target = $region129
  $region128: #{tpu_custom_call.1} parent=0 // pred_region
    _
  $region129: #{tpu_custom_call.1} parent=0 // pred_fallthru
    _
  // Predicated region
  $region130: #{tpu_custom_call.1} parent=0 // pred_check
    _
  $region131: #{tpu_custom_call.1} parent=0 // pred_check_branch
    %139 = sbr.rel (0) target = $region133
  $region132: #{tpu_custom_call.1} parent=0 // pred_region
    _
  $region133: #{tpu_custom_call.1} parent=0 // pred_fallthru
    _
  %v140 = vld [vmem:[%s1] sm:$0xff]
  %v141 = vld [vmem:[%s1 + $0x8] sm:$0xff]
  %v142 = vld [vmem:[%s3] sm:$0xff]
  %v143 = vld [vmem:[%s3 + $0x8] sm:$0xff]
  %v144 = vld [vmem:[%s3 + $0x10] sm:$0xff]
  %v145 = vld [vmem:[%s3 + $0x18] sm:$0xff]
  %v146 = vld [vmem:[%s3 + $0x20] sm:$0xff]
  %v147 = vld [vmem:[%s3 + $0x28] sm:$0xff]
  %v148 = vld [vmem:[%s3 + $0x30] sm:$0xff]
  %v149 = vld [vmem:[%s3 + $0x38] sm:$0xff]
  %v150 = vld [vmem:[%s3 + $0x40] sm:$0xff]
  %v151 = vld [vmem:[%s3 + $0x48] sm:$0xff]
  %v152 = vld [vmem:[%s3 + $0x50] sm:$0xff]
  %v153 = vld [vmem:[%s3 + $0x58] sm:$0xff]
  %v154 = vld [vmem:[%s3 + $0x60] sm:$0xff]
  %v155 = vld [vmem:[%s3 + $0x68] sm:$0xff]
  %v156 = vld [vmem:[%s3 + $0x70] sm:$0xff]
  %v157 = vld [vmem:[%s3 + $0x78] sm:$0xff]
  %v158 = vld [vmem:[%s3 + $0x80] sm:$0xff]
  %v159 = vld [vmem:[%s3 + $0x88] sm:$0xff]
  %v160 = vld [vmem:[%s3 + $0x90] sm:$0xff]
  %v161 = vld [vmem:[%s3 + $0x98] sm:$0xff]
  %v162 = vld [vmem:[%s3 + $0xa0] sm:$0xff]
  %v163 = vld [vmem:[%s3 + $0xa8] sm:$0xff]
  %v164 = vld [vmem:[%s3 + $0xb0] sm:$0xff]
  %v165 = vld [vmem:[%s3 + $0xb8] sm:$0xff]
  %v166 = vld [vmem:[%s3 + $0xc0] sm:$0xff]
  %v167 = vld [vmem:[%s3 + $0xc8] sm:$0xff]
  %v168 = vld [vmem:[%s3 + $0xd0] sm:$0xff]
  %v169 = vld [vmem:[%s3 + $0xd8] sm:$0xff]
  %v170 = vld [vmem:[%s3 + $0xe0] sm:$0xff]
  %v171 = vld [vmem:[%s3 + $0xe8] sm:$0xff]
  %v172 = vld [vmem:[%s3 + $0xf0] sm:$0xff]
  %v173 = vld [vmem:[%s3 + $0xf8] sm:$0xff]
  %v174 = vld [vmem:[%s5] sm:$0xff]
  %v175 = vld [vmem:[%s5 + $0x8] sm:$0xff]
  %v176 = vld [vmem:[%s5 + $0x10] sm:$0xff]
  %v177 = vld [vmem:[%s5 + $0x18] sm:$0xff]
  %v178 = vld [vmem:[%s5 + $0x20] sm:$0xff]
  %v179 = vld [vmem:[%s5 + $0x28] sm:$0xff]
  %v180 = vld [vmem:[%s5 + $0x30] sm:$0xff]
  %v181 = vld [vmem:[%s5 + $0x38] sm:$0xff]
  %v182 = vld [vmem:[%s5 + $0x40] sm:$0xff]
  %v183 = vld [vmem:[%s5 + $0x48] sm:$0xff]
  %v184 = vld [vmem:[%s5 + $0x50] sm:$0xff]
  %v185 = vld [vmem:[%s5 + $0x58] sm:$0xff]
  %v186 = vld [vmem:[%s5 + $0x60] sm:$0xff]
  %v187 = vld [vmem:[%s5 + $0x68] sm:$0xff]
  %v188 = vld [vmem:[%s5 + $0x70] sm:$0xff]
  %v189 = vld [vmem:[%s5 + $0x78] sm:$0xff]
  %v190 = vld [vmem:[%s5 + $0x80] sm:$0xff]
  %v191 = vld [vmem:[%s5 + $0x88] sm:$0xff]
  %v192 = vld [vmem:[%s5 + $0x90] sm:$0xff]
  %v193 = vld [vmem:[%s5 + $0x98] sm:$0xff]
  %v194 = vld [vmem:[%s5 + $0xa0] sm:$0xff]
  %v195 = vld [vmem:[%s5 + $0xa8] sm:$0xff]
  %v196 = vld [vmem:[%s5 + $0xb0] sm:$0xff]
  %v197 = vld [vmem:[%s5 + $0xb8] sm:$0xff]
  %v198 = vld [vmem:[%s5 + $0xc0] sm:$0xff]
  %v199 = vld [vmem:[%s5 + $0xc8] sm:$0xff]
  %v200 = vld [vmem:[%s5 + $0xd0] sm:$0xff]
  %v201 = vld [vmem:[%s5 + $0xd8] sm:$0xff]
  %v202 = vld [vmem:[%s5 + $0xe0] sm:$0xff]
  %v203 = vld [vmem:[%s5 + $0xe8] sm:$0xff]
  %v204 = vld [vmem:[%s5 + $0xf0] sm:$0xff]
  %v205 = vld [vmem:[%s5 + $0xf8] sm:$0xff]
  %v206 = vld [vmem:[%s7] sm:$0xff]
  %v207 = vld [vmem:[%s7 + $0x8] sm:$0xff]
  %v208 = vld [vmem:[%s7 + $0x10] sm:$0xff]
  %v209 = vld [vmem:[%s7 + $0x18] sm:$0xff]
  %v210 = vld [vmem:[%s7 + $0x20] sm:$0xff]
  %v211 = vld [vmem:[%s7 + $0x28] sm:$0xff]
  %v212 = vld [vmem:[%s7 + $0x30] sm:$0xff]
  %v213 = vld [vmem:[%s7 + $0x38] sm:$0xff]
  %v214 = vld [vmem:[%s7 + $0x40] sm:$0xff]
  %v215 = vld [vmem:[%s7 + $0x48] sm:$0xff]
  %v216 = vld [vmem:[%s7 + $0x50] sm:$0xff]
  %v217 = vld [vmem:[%s7 + $0x58] sm:$0xff]
  %v218 = vld [vmem:[%s7 + $0x60] sm:$0xff]
  %v219 = vld [vmem:[%s7 + $0x68] sm:$0xff]
  %v220 = vld [vmem:[%s7 + $0x70] sm:$0xff]
  %v221 = vld [vmem:[%s7 + $0x78] sm:$0xff]
  %v222 = vld [vmem:[%s7 + $0x80] sm:$0xff]
  %v223 = vld [vmem:[%s7 + $0x88] sm:$0xff]
  %v224 = vld [vmem:[%s7 + $0x90] sm:$0xff]
  %v225 = vld [vmem:[%s7 + $0x98] sm:$0xff]
  %v226 = vld [vmem:[%s7 + $0xa0] sm:$0xff]
  %v227 = vld [vmem:[%s7 + $0xa8] sm:$0xff]
  %v228 = vld [vmem:[%s7 + $0xb0] sm:$0xff]
  %v229 = vld [vmem:[%s7 + $0xb8] sm:$0xff]
  %v230 = vld [vmem:[%s7 + $0xc0] sm:$0xff]
  %v231 = vld [vmem:[%s7 + $0xc8] sm:$0xff]
  %v232 = vld [vmem:[%s7 + $0xd0] sm:$0xff]
  %v233 = vld [vmem:[%s7 + $0xd8] sm:$0xff]
  %v234 = vld [vmem:[%s7 + $0xe0] sm:$0xff]
  %v235 = vld [vmem:[%s7 + $0xe8] sm:$0xff]
  %v236 = vld [vmem:[%s7 + $0xf0] sm:$0xff]
  %v237 = vld [vmem:[%s7 + $0xf8] sm:$0xff]
  %v238 = vld [vmem:[%s9] sm:$0xff]
  %v239 = vld [vmem:[%s9 + $0x8] sm:$0xff]
  %v240 = vld [vmem:[%s9 + $0x10] sm:$0xff]
  %v241 = vld [vmem:[%s9 + $0x18] sm:$0xff]
  %v242 = vld [vmem:[%s9 + $0x20] sm:$0xff]
  %v243 = vld [vmem:[%s9 + $0x28] sm:$0xff]
  %v244 = vld [vmem:[%s9 + $0x30] sm:$0xff]
  %v245 = vld [vmem:[%s9 + $0x38] sm:$0xff]
  %v246 = vld [vmem:[%s9 + $0x40] sm:$0xff]
  %v247 = vld [vmem:[%s9 + $0x48] sm:$0xff]
  %v248 = vld [vmem:[%s9 + $0x50] sm:$0xff]
  %v249 = vld [vmem:[%s9 + $0x58] sm:$0xff]
  %v250 = vld [vmem:[%s9 + $0x60] sm:$0xff]
  %v251 = vld [vmem:[%s9 + $0x68] sm:$0xff]
  %v252 = vld [vmem:[%s9 + $0x70] sm:$0xff]
  %v253 = vld [vmem:[%s9 + $0x78] sm:$0xff]
  %v254 = vld [vmem:[%s9 + $0x80] sm:$0xff]
  %v255 = vld [vmem:[%s9 + $0x88] sm:$0xff]
  %v256 = vld [vmem:[%s9 + $0x90] sm:$0xff]
  %v257 = vld [vmem:[%s9 + $0x98] sm:$0xff]
  %v258 = vld [vmem:[%s9 + $0xa0] sm:$0xff]
  %v259 = vld [vmem:[%s9 + $0xa8] sm:$0xff]
  %v260 = vld [vmem:[%s9 + $0xb0] sm:$0xff]
  %v261 = vld [vmem:[%s9 + $0xb8] sm:$0xff]
  %v262 = vld [vmem:[%s9 + $0xc0] sm:$0xff]
  %v263 = vld [vmem:[%s9 + $0xc8] sm:$0xff]
  %v264 = vld [vmem:[%s9 + $0xd0] sm:$0xff]
  %v265 = vld [vmem:[%s9 + $0xd8] sm:$0xff]
  %v266 = vld [vmem:[%s9 + $0xe0] sm:$0xff]
  %v267 = vld [vmem:[%s9 + $0xe8] sm:$0xff]
  %v268 = vld [vmem:[%s9 + $0xf0] sm:$0xff]
  %v269 = vld [vmem:[%s9 + $0xf8] sm:$0xff]
  %v270 = vld [vmem:[%s11] sm:$0xff]
  %v271 = vld [vmem:[%s11 + $0x8] sm:$0xff]
  %v272 = vld [vmem:[%s11 + $0x10] sm:$0xff]
  %v273 = vld [vmem:[%s11 + $0x18] sm:$0xff]
  %v274 = vld [vmem:[%s13] sm:$0xf]
  %v275 = vld [vmem:[%s15] sm:$0xff]
  %v276 = vld [vmem:[%s15 + $0x8] sm:$0xf]
  %v277 = vld [vmem:[%s17] sm:$0x1]
  %v278 = vld [vmem:[%s19] sm:$0xff]
  %v279 = vld [vmem:[%s19 + $0x8] sm:$0xf]
  %v280 = vld [vmem:[%s21] sm:$0x1]
  %v281 = vld [vmem:[%s23] sm:$0xff]
  %v282 = vld [vmem:[%s23 + $0x8] sm:$0xff]
  %v283 = vld [vmem:[%s23 + $0x10] sm:$0xff]
  %v284 = vld [vmem:[%s23 + $0x18] sm:$0xff]
  %v285 = vld [vmem:[%s23 + $0x20] sm:$0xff]
  %v286 = vld [vmem:[%s23 + $0x28] sm:$0xff]
  %v287 = vld [vmem:[%s23 + $0x30] sm:$0xff]
  %v288 = vld [vmem:[%s23 + $0x38] sm:$0xff]
  %v289 = vld [vmem:[%s23 + $0x40] sm:$0xff]
  %v290 = vld [vmem:[%s23 + $0x48] sm:$0xff]
  %v291 = vld [vmem:[%s23 + $0x50] sm:$0xff]
  %v292 = vld [vmem:[%s23 + $0x58] sm:$0xff]
  %v293 = vld [vmem:[%s23 + $0x60] sm:$0xff]
  %v294 = vld [vmem:[%s23 + $0x68] sm:$0xff]
  %v295 = vld [vmem:[%s23 + $0x70] sm:$0xff]
  %v296 = vld [vmem:[%s23 + $0x78] sm:$0xff]
  %v297 = vld [vmem:[%s25] sm:$0xff]
  %v298 = vld [vmem:[%s25 + $0x8] sm:$0xff]
  %v299 = vld [vmem:[%s25 + $0x10] sm:$0xff]
  %v300 = vld [vmem:[%s25 + $0x18] sm:$0xff]
  %v301 = vld [vmem:[%s27] sm:$0x1]
  %v302 = vld [vmem:[%s29] sm:$0x1]
  %v303 = vld [vmem:[%s31] sm:$0x1]
  %v304 = vld [vmem:[%s33] sm:$0x1]
  %v306 = vlaneseq
  %v307 = vshrl.u32 %v306, 7
  %v308 = vsub.s32 0, %v307
  %v309 = vrot.slane %v277, %v308
  %vm311 = vcmask 97280
  %v313 = vsel %vm311, %v140, 0
  %v316 = vsel %vm311, %v141, 0
  %vm318 = vcmask 1043456
  %v320 = vsel %vm318, %v276, 0
  %322 = vmatprep.subr.mxu0 0.0
  %323 = vmatpush1.msra.mxu0 0.0
  %324 = vmatprep.subr.mxu0 0.0
  %325 = vmatpush1.msra.mxu0 0.0
  %326 = vmatprep.subr.mxu0 0.0
  %327 = vmatpush1.msra.mxu0 0.0
  %328 = vmatprep.subr.mxu0 0.0
  %329 = vmatpush1.msra.mxu0 0.0
  %330 = vmatprep.subr.mxu0 0.0
  %331 = vmatpush1.msra.mxu0 0.0
  %332 = vmatprep.subr.mxu0 0.0
  %333 = vmatpush1.msra.mxu0 0.0
  %334 = vmatprep.subr.mxu0 0.0
  %335 = vmatpush1.msra.mxu0 0.0
  %336 = vmatprep.subr.mxu0 0.0
  %337 = vmatpush1.msra.mxu0 0.0
  %338 = vmatprep.subr.mxu0 0.0
  %339 = vmatpush1.msra.mxu0 0.0
  %340 = vmatprep.subr.mxu0 0.0
  %341 = vmatpush1.msra.mxu0 0.0
  %342 = vmatprep.subr.mxu0 0.0
  %343 = vmatpush1.msra.mxu0 0.0
  %344 = vmatprep.subr.mxu0 0.0
  %345 = vmatpush1.msra.mxu0 0.0
  %346 = vmatprep.subr.mxu0 0.0
  %347 = vmatpush1.msra.mxu0 0.0
  %348 = vmatprep.subr.mxu0 0.0
  %349 = vmatpush1.msra.mxu0 0.0
  %350 = vmatprep.subr.mxu0 0.0
  %351 = vmatpush1.msra.mxu0 %v320
  %352 = vmatprep.subr.mxu0 0.0
  %353 = vmatpush1.msra.mxu0 %v275
  %354 = vmatprep.subr.mxu0 0.0
  %355 = vmatpush2.msra.mxu0 0.0
  %356 = vmatprep.subr.mxu0 0.0
  %357 = vmatpush2.msra.mxu0 0.0
  %358 = vmatprep.subr.mxu0 0.0
  %359 = vmatpush2.msra.mxu0 0.0
  %360 = vmatprep.subr.mxu0 0.0
  %361 = vmatpush2.msra.mxu0 0.0
  %362 = vmatprep.subr.mxu0 0.0
  %363 = vmatpush2.msra.mxu0 0.0
  %364 = vmatprep.subr.mxu0 0.0
  %365 = vmatpush2.msra.mxu0 0.0
  %366 = vmatprep.subr.mxu0 0.0
  %367 = vmatpush2.msra.mxu0 0.0
  %368 = vmatprep.subr.mxu0 0.0
  %369 = vmatpush2.msra.mxu0 0.0
  %370 = vmatprep.subr.mxu0 0.0
  %371 = vmatpush2.msra.mxu0 0.0
  %372 = vmatprep.subr.mxu0 0.0
  %373 = vmatpush2.msra.mxu0 0.0
  %374 = vmatprep.subr.mxu0 0.0
  %375 = vmatpush2.msra.mxu0 0.0
  %376 = vmatprep.subr.mxu0 0.0
  %377 = vmatpush2.msra.mxu0 0.0
  %378 = vmatprep.subr.mxu0 0.0
  %379 = vmatpush2.msra.mxu0 0.0
  %380 = vmatprep.subr.mxu0 0.0
  %381 = vmatpush2.msra.mxu0 0.0
  %382 = vmatprep.subr.mxu0 0.0
  %383 = vmatpush2.msra.mxu0 0.0
  %384 = vmatprep.subr.mxu0 0.0
  %385 = vmatpush2.msra.mxu0 0.0
  %386 = vmatprep.mubr.f32.mxu0 0.0
  %387 = vmatmul.mubr.f32.gmra.mxu0 %v313
  %v388 = vpop.f32.mrf.mxu0
  %v389 = vadd.f32 %v309, %v388
  %v390 = vpop.f32.mrf.mxu0
  %391 = vmatprep.mubr.f32.mxu0 0.0
  %392 = vmatmul.mubr.f32.gmra.mxu0 %v316
  %v393 = vpop.f32.mrf.mxu0
  %v394 = vadd.f32 %v309, %v393
  %v395 = vpop.f32.mrf.mxu0
  %396 = vdwg.mxu0
  %v398 = vlaneseq
  %v399 = vshrl.u32 %v398, 7
  %v400 = vsub.s32 0, %v399
  %v401 = vrot.slane %v280, %v400
  %v404 = vsel %vm318, %v279, 0
  %406 = vmatprep.subr.mxu0 0.0
  %407 = vmatpush1.msra.mxu0 0.0
  %408 = vmatprep.subr.mxu0 0.0
  %409 = vmatpush1.msra.mxu0 0.0
  %410 = vmatprep.subr.mxu0 0.0
  %411 = vmatpush1.msra.mxu0 0.0
  %412 = vmatprep.subr.mxu0 0.0
  %413 = vmatpush1.msra.mxu0 0.0
  %414 = vmatprep.subr.mxu0 0.0
  %415 = vmatpush1.msra.mxu0 0.0
  %416 = vmatprep.subr.mxu0 0.0
  %417 = vmatpush1.msra.mxu0 0.0
  %418 = vmatprep.subr.mxu0 0.0
  %419 = vmatpush1.msra.mxu0 0.0
  %420 = vmatprep.subr.mxu0 0.0
  %421 = vmatpush1.msra.mxu0 0.0
  %422 = vmatprep.subr.mxu0 0.0
  %423 = vmatpush1.msra.mxu0 0.0
  %424 = vmatprep.subr.mxu0 0.0
  %425 = vmatpush1.msra.mxu0 0.0
  %426 = vmatprep.subr.mxu0 0.0
  %427 = vmatpush1.msra.mxu0 0.0
  %428 = vmatprep.subr.mxu0 0.0
  %429 = vmatpush1.msra.mxu0 0.0
  %430 = vmatprep.subr.mxu0 0.0
  %431 = vmatpush1.msra.mxu0 0.0
  %432 = vmatprep.subr.mxu0 0.0
  %433 = vmatpush1.msra.mxu0 0.0
  %434 = vmatprep.subr.mxu0 0.0
  %435 = vmatpush1.msra.mxu0 %v404
  %436 = vmatprep.subr.mxu0 0.0
  %437 = vmatpush1.msra.mxu0 %v278
  %438 = vmatprep.subr.mxu0 0.0
  %439 = vmatpush2.msra.mxu0 0.0
  %440 = vmatprep.subr.mxu0 0.0
  %441 = vmatpush2.msra.mxu0 0.0
  %442 = vmatprep.subr.mxu0 0.0
  %443 = vmatpush2.msra.mxu0 0.0
  %444 = vmatprep.subr.mxu0 0.0
  %445 = vmatpush2.msra.mxu0 0.0
  %446 = vmatprep.subr.mxu0 0.0
  %447 = vmatpush2.msra.mxu0 0.0
  %448 = vmatprep.subr.mxu0 0.0
  %449 = vmatpush2.msra.mxu0 0.0
  %450 = vmatprep.subr.mxu0 0.0
  %451 = vmatpush2.msra.mxu0 0.0
  %452 = vmatprep.subr.mxu0 0.0
  %453 = vmatpush2.msra.mxu0 0.0
  %454 = vmatprep.subr.mxu0 0.0
  %455 = vmatpush2.msra.mxu0 0.0
  %456 = vmatprep.subr.mxu0 0.0
  %457 = vmatpush2.msra.mxu0 0.0
  %458 = vmatprep.subr.mxu0 0.0
  %459 = vmatpush2.msra.mxu0 0.0
  %460 = vmatprep.subr.mxu0 0.0
  %461 = vmatpush2.msra.mxu0 0.0
  %462 = vmatprep.subr.mxu0 0.0
  %463 = vmatpush2.msra.mxu0 0.0
  %464 = vmatprep.subr.mxu0 0.0
  %465 = vmatpush2.msra.mxu0 0.0
  %466 = vmatprep.subr.mxu0 0.0
  %467 = vmatpush2.msra.mxu0 0.0
  %468 = vmatprep.subr.mxu0 0.0
  %469 = vmatpush2.msra.mxu0 0.0
  %470 = vmatprep.mubr.f32.mxu0 0.0
  %471 = vmatmul.mubr.f32.gmra.mxu0 %v313
  %v472 = vpop.f32.mrf.mxu0
  %v473 = vadd.f32 %v401, %v472
  %v474 = vpop.f32.mrf.mxu0
  %475 = vmatprep.mubr.f32.mxu0 0.0
  %476 = vmatmul.mubr.f32.gmra.mxu0 %v316
  %v477 = vpop.f32.mrf.mxu0
  %v478 = vadd.f32 %v401, %v477
  %v479 = vpop.f32.mrf.mxu0
  %480 = vdwg.mxu0
  %vm481 = vcmask 130048
  %v483 = vsel %vm481, %v206, 0
  %v486 = vsel %vm481, %v207, 0
  %v489 = vsel %vm481, %v208, 0
  %v492 = vsel %vm481, %v209, 0
  %v495 = vsel %vm481, %v210, 0
  %v498 = vsel %vm481, %v211, 0
  %v501 = vsel %vm481, %v212, 0
  %v504 = vsel %vm481, %v213, 0
  %v507 = vsel %vm481, %v214, 0
  %v510 = vsel %vm481, %v215, 0
  %v513 = vsel %vm481, %v216, 0
  %v516 = vsel %vm481, %v217, 0
  %v519 = vsel %vm481, %v218, 0
  %v522 = vsel %vm481, %v219, 0
  %v525 = vsel %vm481, %v220, 0
  %v528 = vsel %vm481, %v221, 0
  %v531 = vsel %vm481, %v222, 0
  %v534 = vsel %vm481, %v223, 0
  %v537 = vsel %vm481, %v224, 0
  %v540 = vsel %vm481, %v225, 0
  %v543 = vsel %vm481, %v226, 0
  %v546 = vsel %vm481, %v227, 0
  %v549 = vsel %vm481, %v228, 0
  %v552 = vsel %vm481, %v229, 0
  %v555 = vsel %vm481, %v230, 0
  %v558 = vsel %vm481, %v231, 0
  %v561 = vsel %vm481, %v232, 0
  %v564 = vsel %vm481, %v233, 0
  %v567 = vsel %vm481, %v234, 0
  %v570 = vsel %vm481, %v235, 0
  %v573 = vsel %vm481, %v236, 0
  %v576 = vsel %vm481, %v237, 0
  %578 = vmatprep.subr.mxu0 0.0
  %579 = vmatpush1.msra.mxu0 0.0
  %580 = vmatprep.subr.mxu0 0.0
  %581 = vmatpush1.msra.mxu0 0.0
  %582 = vmatprep.subr.mxu0 0.0
  %583 = vmatpush1.msra.mxu0 0.0
  %584 = vmatprep.subr.mxu0 0.0
  %585 = vmatpush1.msra.mxu0 0.0
  %586 = vmatprep.subr.mxu0 0.0
  %587 = vmatpush1.msra.mxu0 0.0
  %588 = vmatprep.subr.mxu0 0.0
  %589 = vmatpush1.msra.mxu0 0.0
  %590 = vmatprep.subr.mxu0 0.0
  %591 = vmatpush1.msra.mxu0 0.0
  %592 = vmatprep.subr.mxu0 0.0
  %593 = vmatpush1.msra.mxu0 0.0
  %594 = vmatprep.subr.mxu0 0.0
  %595 = vmatpush1.msra.mxu0 0.0
  %596 = vmatprep.subr.mxu0 0.0
  %597 = vmatpush1.msra.mxu0 0.0
  %598 = vmatprep.subr.mxu0 0.0
  %599 = vmatpush1.msra.mxu0 0.0
  %600 = vmatprep.subr.mxu0 0.0
  %601 = vmatpush1.msra.mxu0 0.0
  %602 = vmatprep.subr.mxu0 0.0
  %603 = vmatpush1.msra.mxu0 0.0
  %604 = vmatprep.subr.mxu0 0.0
  %605 = vmatpush1.msra.mxu0 0.0
  %606 = vmatprep.subr.mxu0 0.0
  %607 = vmatpush1.msra.mxu0 %v394
  %608 = vmatprep.subr.mxu0 0.0
  %609 = vmatpush1.msra.mxu0 %v389
  %610 = vmatprep.subr.mxu0 0.0
  %611 = vmatpush2.msra.mxu0 0.0
  %612 = vmatprep.subr.mxu0 0.0
  %613 = vmatpush2.msra.mxu0 0.0
  %614 = vmatprep.subr.mxu0 0.0
  %615 = vmatpush2.msra.mxu0 0.0
  %616 = vmatprep.subr.mxu0 0.0
  %617 = vmatpush2.msra.mxu0 0.0
  %618 = vmatprep.subr.mxu0 0.0
  %619 = vmatpush2.msra.mxu0 0.0
  %620 = vmatprep.subr.mxu0 0.0
  %621 = vmatpush2.msra.mxu0 0.0
  %622 = vmatprep.subr.mxu0 0.0
  %623 = vmatpush2.msra.mxu0 0.0
  %624 = vmatprep.subr.mxu0 0.0
  %625 = vmatpush2.msra.mxu0 0.0
  %626 = vmatprep.subr.mxu0 0.0
  %627 = vmatpush2.msra.mxu0 0.0
  %628 = vmatprep.subr.mxu0 0.0
  %629 = vmatpush2.msra.mxu0 0.0
  %630 = vmatprep.subr.mxu0 0.0
  %631 = vmatpush2.msra.mxu0 0.0
  %632 = vmatprep.subr.mxu0 0.0
  %633 = vmatpush2.msra.mxu0 0.0
  %634 = vmatprep.subr.mxu0 0.0
  %635 = vmatpush2.msra.mxu0 0.0
  %636 = vmatprep.subr.mxu0 0.0
  %637 = vmatpush2.msra.mxu0 0.0
  %638 = vmatprep.subr.mxu0 0.0
  %639 = vmatpush2.msra.mxu0 0.0
  %640 = vmatprep.subr.mxu0 0.0
  %641 = vmatpush2.msra.mxu0 0.0
  %642 = vmatprep.mubr.f32.mxu0 0.0
  %643 = vmatmul.mubr.f32.gmra.mxu0 %v483
  %v644 = vpop.f32.mrf.mxu0
  %v645 = vadd.f32 0.0, %v644
  %v646 = vpop.f32.mrf.mxu0
  %647 = vmatprep.mubr.f32.mxu0 0.0
  %648 = vmatmul.mubr.f32.gmra.mxu0 %v486
  %v649 = vpop.f32.mrf.mxu0
  %v650 = vadd.f32 0.0, %v649
  %v651 = vpop.f32.mrf.mxu0
  %652 = vmatprep.mubr.f32.mxu0 0.0
  %653 = vmatmul.mubr.f32.gmra.mxu0 %v489
  %v654 = vpop.f32.mrf.mxu0
  %v655 = vadd.f32 0.0, %v654
  %v656 = vpop.f32.mrf.mxu0
  %657 = vmatprep.mubr.f32.mxu0 0.0
  %658 = vmatmul.mubr.f32.gmra.mxu0 %v492
  %v659 = vpop.f32.mrf.mxu0
  %v660 = vadd.f32 0.0, %v659
  %v661 = vpop.f32.mrf.mxu0
  %662 = vmatprep.mubr.f32.mxu0 0.0
  %663 = vmatmul.mubr.f32.gmra.mxu0 %v495
  %v664 = vpop.f32.mrf.mxu0
  %v665 = vadd.f32 0.0, %v664
  %v666 = vpop.f32.mrf.mxu0
  %667 = vmatprep.mubr.f32.mxu0 0.0
  %668 = vmatmul.mubr.f32.gmra.mxu0 %v498
  %v669 = vpop.f32.mrf.mxu0
  %v670 = vadd.f32 0.0, %v669
  %v671 = vpop.f32.mrf.mxu0
  %672 = vmatprep.mubr.f32.mxu0 0.0
  %673 = vmatmul.mubr.f32.gmra.mxu0 %v501
  %v674 = vpop.f32.mrf.mxu0
  %v675 = vadd.f32 0.0, %v674
  %v676 = vpop.f32.mrf.mxu0
  %677 = vmatprep.mubr.f32.mxu0 0.0
  %678 = vmatmul.mubr.f32.gmra.mxu0 %v504
  %v679 = vpop.f32.mrf.mxu0
  %v680 = vadd.f32 0.0, %v679
  %v681 = vpop.f32.mrf.mxu0
  %682 = vmatprep.mubr.f32.mxu0 0.0
  %683 = vmatmul.mubr.f32.gmra.mxu0 %v507
  %v684 = vpop.f32.mrf.mxu0
  %v685 = vadd.f32 0.0, %v684
  %v686 = vpop.f32.mrf.mxu0
  %687 = vmatprep.mubr.f32.mxu0 0.0
  %688 = vmatmul.mubr.f32.gmra.mxu0 %v510
  %v689 = vpop.f32.mrf.mxu0
  %v690 = vadd.f32 0.0, %v689
  %v691 = vpop.f32.mrf.mxu0
  %692 = vmatprep.mubr.f32.mxu0 0.0
  %693 = vmatmul.mubr.f32.gmra.mxu0 %v513
  %v694 = vpop.f32.mrf.mxu0
  %v695 = vadd.f32 0.0, %v694
  %v696 = vpop.f32.mrf.mxu0
  %697 = vmatprep.mubr.f32.mxu0 0.0
  %698 = vmatmul.mubr.f32.gmra.mxu0 %v516
  %v699 = vpop.f32.mrf.mxu0
  %v700 = vadd.f32 0.0, %v699
  %v701 = vpop.f32.mrf.mxu0
  %702 = vmatprep.mubr.f32.mxu0 0.0
  %703 = vmatmul.mubr.f32.gmra.mxu0 %v519
  %v704 = vpop.f32.mrf.mxu0
  %v705 = vadd.f32 0.0, %v704
  %v706 = vpop.f32.mrf.mxu0
  %707 = vmatprep.mubr.f32.mxu0 0.0
  %708 = vmatmul.mubr.f32.gmra.mxu0 %v522
  %v709 = vpop.f32.mrf.mxu0
  %v710 = vadd.f32 0.0, %v709
  %v711 = vpop.f32.mrf.mxu0
  %712 = vmatprep.mubr.f32.mxu0 0.0
  %713 = vmatmul.mubr.f32.gmra.mxu0 %v525
  %v714 = vpop.f32.mrf.mxu0
  %v715 = vadd.f32 0.0, %v714
  %v716 = vpop.f32.mrf.mxu0
  %717 = vmatprep.mubr.f32.mxu0 0.0
  %718 = vmatmul.mubr.f32.gmra.mxu0 %v528
  %v719 = vpop.f32.mrf.mxu0
  %v720 = vadd.f32 0.0, %v719
  %v721 = vpop.f32.mrf.mxu0
  %722 = vmatprep.mubr.f32.mxu0 0.0
  %723 = vmatmul.mubr.f32.gmra.mxu0 %v531
  %v724 = vpop.f32.mrf.mxu0
  %v725 = vadd.f32 0.0, %v724
  %v726 = vpop.f32.mrf.mxu0
  %727 = vmatprep.mubr.f32.mxu0 0.0
  %728 = vmatmul.mubr.f32.gmra.mxu0 %v534
  %v729 = vpop.f32.mrf.mxu0
  %v730 = vadd.f32 0.0, %v729
  %v731 = vpop.f32.mrf.mxu0
  %732 = vmatprep.mubr.f32.mxu0 0.0
  %733 = vmatmul.mubr.f32.gmra.mxu0 %v537
  %v734 = vpop.f32.mrf.mxu0
  %v735 = vadd.f32 0.0, %v734
  %v736 = vpop.f32.mrf.mxu0
  %737 = vmatprep.mubr.f32.mxu0 0.0
  %738 = vmatmul.mubr.f32.gmra.mxu0 %v540
  %v739 = vpop.f32.mrf.mxu0
  %v740 = vadd.f32 0.0, %v739
  %v741 = vpop.f32.mrf.mxu0
  %742 = vmatprep.mubr.f32.mxu0 0.0
  %743 = vmatmul.mubr.f32.gmra.mxu0 %v543
  %v744 = vpop.f32.mrf.mxu0
  %v745 = vadd.f32 0.0, %v744
  %v746 = vpop.f32.mrf.mxu0
  %747 = vmatprep.mubr.f32.mxu0 0.0
  %748 = vmatmul.mubr.f32.gmra.mxu0 %v546
  %v749 = vpop.f32.mrf.mxu0
  %v750 = vadd.f32 0.0, %v749
  %v751 = vpop.f32.mrf.mxu0
  %752 = vmatprep.mubr.f32.mxu0 0.0
  %753 = vmatmul.mubr.f32.gmra.mxu0 %v549
  %v754 = vpop.f32.mrf.mxu0
  %v755 = vadd.f32 0.0, %v754
  %v756 = vpop.f32.mrf.mxu0
  %757 = vmatprep.mubr.f32.mxu0 0.0
  %758 = vmatmul.mubr.f32.gmra.mxu0 %v552
  %v759 = vpop.f32.mrf.mxu0
  %v760 = vadd.f32 0.0, %v759
  %v761 = vpop.f32.mrf.mxu0
  %762 = vmatprep.mubr.f32.mxu0 0.0
  %763 = vmatmul.mubr.f32.gmra.mxu0 %v555
  %v764 = vpop.f32.mrf.mxu0
  %v765 = vadd.f32 0.0, %v764
  %v766 = vpop.f32.mrf.mxu0
  %767 = vmatprep.mubr.f32.mxu0 0.0
  %768 = vmatmul.mubr.f32.gmra.mxu0 %v558
  %v769 = vpop.f32.mrf.mxu0
  %v770 = vadd.f32 0.0, %v769
  %v771 = vpop.f32.mrf.mxu0
  %772 = vmatprep.mubr.f32.mxu0 0.0
  %773 = vmatmul.mubr.f32.gmra.mxu0 %v561
  %v774 = vpop.f32.mrf.mxu0
  %v775 = vadd.f32 0.0, %v774
  %v776 = vpop.f32.mrf.mxu0
  %777 = vmatprep.mubr.f32.mxu0 0.0
  %778 = vmatmul.mubr.f32.gmra.mxu0 %v564
  %v779 = vpop.f32.mrf.mxu0
  %v780 = vadd.f32 0.0, %v779
  %v781 = vpop.f32.mrf.mxu0
  %782 = vmatprep.mubr.f32.mxu0 0.0
  %783 = vmatmul.mubr.f32.gmra.mxu0 %v567
  %v784 = vpop.f32.mrf.mxu0
  %v785 = vadd.f32 0.0, %v784
  %v786 = vpop.f32.mrf.mxu0
  %787 = vmatprep.mubr.f32.mxu0 0.0
  %788 = vmatmul.mubr.f32.gmra.mxu0 %v570
  %v789 = vpop.f32.mrf.mxu0
  %v790 = vadd.f32 0.0, %v789
  %v791 = vpop.f32.mrf.mxu0
  %792 = vmatprep.mubr.f32.mxu0 0.0
  %793 = vmatmul.mubr.f32.gmra.mxu0 %v573
  %v794 = vpop.f32.mrf.mxu0
  %v795 = vadd.f32 0.0, %v794
  %v796 = vpop.f32.mrf.mxu0
  %797 = vmatprep.mubr.f32.mxu0 0.0
  %798 = vmatmul.mubr.f32.gmra.mxu0 %v576
  %v799 = vpop.f32.mrf.mxu0
  %v800 = vadd.f32 0.0, %v799
  %v801 = vpop.f32.mrf.mxu0
  %802 = vdwg.mxu0
  %v804 = vsel %vm481, %v238, 0
  %v807 = vsel %vm481, %v239, 0
  %v810 = vsel %vm481, %v240, 0
  %v813 = vsel %vm481, %v241, 0
  %v816 = vsel %vm481, %v242, 0
  %v819 = vsel %vm481, %v243, 0
  %v822 = vsel %vm481, %v244, 0
  %v825 = vsel %vm481, %v245, 0
  %v828 = vsel %vm481, %v246, 0
  %v831 = vsel %vm481, %v247, 0
  %v834 = vsel %vm481, %v248, 0
  %v837 = vsel %vm481, %v249, 0
  %v840 = vsel %vm481, %v250, 0
  %v843 = vsel %vm481, %v251, 0
  %v846 = vsel %vm481, %v252, 0
  %v849 = vsel %vm481, %v253, 0
  %v852 = vsel %vm481, %v254, 0
  %v855 = vsel %vm481, %v255, 0
  %v858 = vsel %vm481, %v256, 0
  %v861 = vsel %vm481, %v257, 0
  %v864 = vsel %vm481, %v258, 0
  %v867 = vsel %vm481, %v259, 0
  %v870 = vsel %vm481, %v260, 0
  %v873 = vsel %vm481, %v261, 0
  %v876 = vsel %vm481, %v262, 0
  %v879 = vsel %vm481, %v263, 0
  %v882 = vsel %vm481, %v264, 0
  %v885 = vsel %vm481, %v265, 0
  %v888 = vsel %vm481, %v266, 0
  %v891 = vsel %vm481, %v267, 0
  %v894 = vsel %vm481, %v268, 0
  %v897 = vsel %vm481, %v269, 0
  %899 = vmatprep.subr.mxu0 0.0
  %900 = vmatpush1.msra.mxu0 0.0
  %901 = vmatprep.subr.mxu0 0.0
  %902 = vmatpush1.msra.mxu0 0.0
  %903 = vmatprep.subr.mxu0 0.0
  %904 = vmatpush1.msra.mxu0 0.0
  %905 = vmatprep.subr.mxu0 0.0
  %906 = vmatpush1.msra.mxu0 0.0
  %907 = vmatprep.subr.mxu0 0.0
  %908 = vmatpush1.msra.mxu0 0.0
  %909 = vmatprep.subr.mxu0 0.0
  %910 = vmatpush1.msra.mxu0 0.0
  %911 = vmatprep.subr.mxu0 0.0
  %912 = vmatpush1.msra.mxu0 0.0
  %913 = vmatprep.subr.mxu0 0.0
  %914 = vmatpush1.msra.mxu0 0.0
  %915 = vmatprep.subr.mxu0 0.0
  %916 = vmatpush1.msra.mxu0 0.0
  %917 = vmatprep.subr.mxu0 0.0
  %918 = vmatpush1.msra.mxu0 0.0
  %919 = vmatprep.subr.mxu0 0.0
  %920 = vmatpush1.msra.mxu0 0.0
  %921 = vmatprep.subr.mxu0 0.0
  %922 = vmatpush1.msra.mxu0 0.0
  %923 = vmatprep.subr.mxu0 0.0
  %924 = vmatpush1.msra.mxu0 0.0
  %925 = vmatprep.subr.mxu0 0.0
  %926 = vmatpush1.msra.mxu0 0.0
  %927 = vmatprep.subr.mxu0 0.0
  %928 = vmatpush1.msra.mxu0 %v478
  %929 = vmatprep.subr.mxu0 0.0
  %930 = vmatpush1.msra.mxu0 %v473
  %931 = vmatprep.subr.mxu0 0.0
  %932 = vmatpush2.msra.mxu0 0.0
  %933 = vmatprep.subr.mxu0 0.0
  %934 = vmatpush2.msra.mxu0 0.0
  %935 = vmatprep.subr.mxu0 0.0
  %936 = vmatpush2.msra.mxu0 0.0
  %937 = vmatprep.subr.mxu0 0.0
  %938 = vmatpush2.msra.mxu0 0.0
  %939 = vmatprep.subr.mxu0 0.0
  %940 = vmatpush2.msra.mxu0 0.0
  %941 = vmatprep.subr.mxu0 0.0
  %942 = vmatpush2.msra.mxu0 0.0
  %943 = vmatprep.subr.mxu0 0.0
  %944 = vmatpush2.msra.mxu0 0.0
  %945 = vmatprep.subr.mxu0 0.0
  %946 = vmatpush2.msra.mxu0 0.0
  %947 = vmatprep.subr.mxu0 0.0
  %948 = vmatpush2.msra.mxu0 0.0
  %949 = vmatprep.subr.mxu0 0.0
  %950 = vmatpush2.msra.mxu0 0.0
  %951 = vmatprep.subr.mxu0 0.0
  %952 = vmatpush2.msra.mxu0 0.0
  %953 = vmatprep.subr.mxu0 0.0
  %954 = vmatpush2.msra.mxu0 0.0
  %955 = vmatprep.subr.mxu0 0.0
  %956 = vmatpush2.msra.mxu0 0.0
  %957 = vmatprep.subr.mxu0 0.0
  %958 = vmatpush2.msra.mxu0 0.0
  %959 = vmatprep.subr.mxu0 0.0
  %960 = vmatpush2.msra.mxu0 0.0
  %961 = vmatprep.subr.mxu0 0.0
  %962 = vmatpush2.msra.mxu0 0.0
  %963 = vmatprep.mubr.f32.mxu0 0.0
  %964 = vmatmul.mubr.f32.gmra.mxu0 %v804
  %v965 = vpop.f32.mrf.mxu0
  %v966 = vadd.f32 0.0, %v965
  %v967 = vpop.f32.mrf.mxu0
  %968 = vmatprep.mubr.f32.mxu0 0.0
  %969 = vmatmul.mubr.f32.gmra.mxu0 %v807
  %v970 = vpop.f32.mrf.mxu0
  %v971 = vadd.f32 0.0, %v970
  %v972 = vpop.f32.mrf.mxu0
  %973 = vmatprep.mubr.f32.mxu0 0.0
  %974 = vmatmul.mubr.f32.gmra.mxu0 %v810
  %v975 = vpop.f32.mrf.mxu0
  %v976 = vadd.f32 0.0, %v975
  %v977 = vpop.f32.mrf.mxu0
  %978 = vmatprep.mubr.f32.mxu0 0.0
  %979 = vmatmul.mubr.f32.gmra.mxu0 %v813
  %v980 = vpop.f32.mrf.mxu0
  %v981 = vadd.f32 0.0, %v980
  %v982 = vpop.f32.mrf.mxu0
  %983 = vmatprep.mubr.f32.mxu0 0.0
  %984 = vmatmul.mubr.f32.gmra.mxu0 %v816
  %v985 = vpop.f32.mrf.mxu0
  %v986 = vadd.f32 0.0, %v985
  %v987 = vpop.f32.mrf.mxu0
  %988 = vmatprep.mubr.f32.mxu0 0.0
  %989 = vmatmul.mubr.f32.gmra.mxu0 %v819
  %v990 = vpop.f32.mrf.mxu0
  %v991 = vadd.f32 0.0, %v990
  %v992 = vpop.f32.mrf.mxu0
  %993 = vmatprep.mubr.f32.mxu0 0.0
  %994 = vmatmul.mubr.f32.gmra.mxu0 %v822
  %v995 = vpop.f32.mrf.mxu0
  %v996 = vadd.f32 0.0, %v995
  %v997 = vpop.f32.mrf.mxu0
  %998 = vmatprep.mubr.f32.mxu0 0.0
  %999 = vmatmul.mubr.f32.gmra.mxu0 %v825
  %v1000 = vpop.f32.mrf.mxu0
  %v1001 = vadd.f32 0.0, %v1000
  %v1002 = vpop.f32.mrf.mxu0
  %1003 = vmatprep.mubr.f32.mxu0 0.0
  %1004 = vmatmul.mubr.f32.gmra.mxu0 %v828
  %v1005 = vpop.f32.mrf.mxu0
  %v1006 = vadd.f32 0.0, %v1005
  %v1007 = vpop.f32.mrf.mxu0
  %1008 = vmatprep.mubr.f32.mxu0 0.0
  %1009 = vmatmul.mubr.f32.gmra.mxu0 %v831
  %v1010 = vpop.f32.mrf.mxu0
  %v1011 = vadd.f32 0.0, %v1010
  %v1012 = vpop.f32.mrf.mxu0
  %1013 = vmatprep.mubr.f32.mxu0 0.0
  %1014 = vmatmul.mubr.f32.gmra.mxu0 %v834
  %v1015 = vpop.f32.mrf.mxu0
  %v1016 = vadd.f32 0.0, %v1015
  %v1017 = vpop.f32.mrf.mxu0
  %1018 = vmatprep.mubr.f32.mxu0 0.0
  %1019 = vmatmul.mubr.f32.gmra.mxu0 %v837
  %v1020 = vpop.f32.mrf.mxu0
  %v1021 = vadd.f32 0.0, %v1020
  %v1022 = vpop.f32.mrf.mxu0
  %1023 = vmatprep.mubr.f32.mxu0 0.0
  %1024 = vmatmul.mubr.f32.gmra.mxu0 %v840
  %v1025 = vpop.f32.mrf.mxu0
  %v1026 = vadd.f32 0.0, %v1025
  %v1027 = vpop.f32.mrf.mxu0
  %1028 = vmatprep.mubr.f32.mxu0 0.0
  %1029 = vmatmul.mubr.f32.gmra.mxu0 %v843
  %v1030 = vpop.f32.mrf.mxu0
  %v1031 = vadd.f32 0.0, %v1030
  %v1032 = vpop.f32.mrf.mxu0
  %1033 = vmatprep.mubr.f32.mxu0 0.0
  %1034 = vmatmul.mubr.f32.gmra.mxu0 %v846
  %v1035 = vpop.f32.mrf.mxu0
  %v1036 = vadd.f32 0.0, %v1035
  %v1037 = vpop.f32.mrf.mxu0
  %1038 = vmatprep.mubr.f32.mxu0 0.0
  %1039 = vmatmul.mubr.f32.gmra.mxu0 %v849
  %v1040 = vpop.f32.mrf.mxu0
  %v1041 = vadd.f32 0.0, %v1040
  %v1042 = vpop.f32.mrf.mxu0
  %1043 = vmatprep.mubr.f32.mxu0 0.0
  %1044 = vmatmul.mubr.f32.gmra.mxu0 %v852
  %v1045 = vpop.f32.mrf.mxu0
  %v1046 = vadd.f32 0.0, %v1045
  %v1047 = vpop.f32.mrf.mxu0
  %1048 = vmatprep.mubr.f32.mxu0 0.0
  %1049 = vmatmul.mubr.f32.gmra.mxu0 %v855
  %v1050 = vpop.f32.mrf.mxu0
  %v1051 = vadd.f32 0.0, %v1050
  %v1052 = vpop.f32.mrf.mxu0
  %1053 = vmatprep.mubr.f32.mxu0 0.0
  %1054 = vmatmul.mubr.f32.gmra.mxu0 %v858
  %v1055 = vpop.f32.mrf.mxu0
  %v1056 = vadd.f32 0.0, %v1055
  %v1057 = vpop.f32.mrf.mxu0
  %1058 = vmatprep.mubr.f32.mxu0 0.0
  %1059 = vmatmul.mubr.f32.gmra.mxu0 %v861
  %v1060 = vpop.f32.mrf.mxu0
  %v1061 = vadd.f32 0.0, %v1060
  %v1062 = vpop.f32.mrf.mxu0
  %1063 = vmatprep.mubr.f32.mxu0 0.0
  %1064 = vmatmul.mubr.f32.gmra.mxu0 %v864
  %v1065 = vpop.f32.mrf.mxu0
  %v1066 = vadd.f32 0.0, %v1065
  %v1067 = vpop.f32.mrf.mxu0
  %1068 = vmatprep.mubr.f32.mxu0 0.0
  %1069 = vmatmul.mubr.f32.gmra.mxu0 %v867
  %v1070 = vpop.f32.mrf.mxu0
  %v1071 = vadd.f32 0.0, %v1070
  %v1072 = vpop.f32.mrf.mxu0
  %1073 = vmatprep.mubr.f32.mxu0 0.0
  %1074 = vmatmul.mubr.f32.gmra.mxu0 %v870
  %v1075 = vpop.f32.mrf.mxu0
  %v1076 = vadd.f32 0.0, %v1075
  %v1077 = vpop.f32.mrf.mxu0
  %1078 = vmatprep.mubr.f32.mxu0 0.0
  %1079 = vmatmul.mubr.f32.gmra.mxu0 %v873
  %v1080 = vpop.f32.mrf.mxu0
  %v1081 = vadd.f32 0.0, %v1080
  %v1082 = vpop.f32.mrf.mxu0
  %1083 = vmatprep.mubr.f32.mxu0 0.0
  %1084 = vmatmul.mubr.f32.gmra.mxu0 %v876
  %v1085 = vpop.f32.mrf.mxu0
  %v1086 = vadd.f32 0.0, %v1085
  %v1087 = vpop.f32.mrf.mxu0
  %1088 = vmatprep.mubr.f32.mxu0 0.0
  %1089 = vmatmul.mubr.f32.gmra.mxu0 %v879
  %v1090 = vpop.f32.mrf.mxu0
  %v1091 = vadd.f32 0.0, %v1090
  %v1092 = vpop.f32.mrf.mxu0
  %1093 = vmatprep.mubr.f32.mxu0 0.0
  %1094 = vmatmul.mubr.f32.gmra.mxu0 %v882
  %v1095 = vpop.f32.mrf.mxu0
  %v1096 = vadd.f32 0.0, %v1095
  %v1097 = vpop.f32.mrf.mxu0
  %1098 = vmatprep.mubr.f32.mxu0 0.0
  %1099 = vmatmul.mubr.f32.gmra.mxu0 %v885
  %v1100 = vpop.f32.mrf.mxu0
  %v1101 = vadd.f32 0.0, %v1100
  %v1102 = vpop.f32.mrf.mxu0
  %1103 = vmatprep.mubr.f32.mxu0 0.0
  %1104 = vmatmul.mubr.f32.gmra.mxu0 %v888
  %v1105 = vpop.f32.mrf.mxu0
  %v1106 = vadd.f32 0.0, %v1105
  %v1107 = vpop.f32.mrf.mxu0
  %1108 = vmatprep.mubr.f32.mxu0 0.0
  %1109 = vmatmul.mubr.f32.gmra.mxu0 %v891
  %v1110 = vpop.f32.mrf.mxu0
  %v1111 = vadd.f32 0.0, %v1110
  %v1112 = vpop.f32.mrf.mxu0
  %1113 = vmatprep.mubr.f32.mxu0 0.0
  %1114 = vmatmul.mubr.f32.gmra.mxu0 %v894
  %v1115 = vpop.f32.mrf.mxu0
  %v1116 = vadd.f32 0.0, %v1115
  %v1117 = vpop.f32.mrf.mxu0
  %1118 = vmatprep.mubr.f32.mxu0 0.0
  %1119 = vmatmul.mubr.f32.gmra.mxu0 %v897
  %v1120 = vpop.f32.mrf.mxu0
  %v1121 = vadd.f32 0.0, %v1120
  %v1122 = vpop.f32.mrf.mxu0
  %1123 = vdwg.mxu0
  %1124 = vmatprep.subr.mxu0 0.0
  %1125 = vmatpush1.msra.mxu0 %v296
  %1126 = vmatprep.subr.mxu0 0.0
  %1127 = vmatpush1.msra.mxu0 %v295
  %1128 = vmatprep.subr.mxu0 0.0
  %1129 = vmatpush1.msra.mxu0 %v294
  %1130 = vmatprep.subr.mxu0 0.0
  %1131 = vmatpush1.msra.mxu0 %v293
  %1132 = vmatprep.subr.mxu0 0.0
  %1133 = vmatpush1.msra.mxu0 %v292
  %1134 = vmatprep.subr.mxu0 0.0
  %1135 = vmatpush1.msra.mxu0 %v291
  %1136 = vmatprep.subr.mxu0 0.0
  %1137 = vmatpush1.msra.mxu0 %v290
  %1138 = vmatprep.subr.mxu0 0.0
  %1139 = vmatpush1.msra.mxu0 %v289
  %1140 = vmatprep.subr.mxu0 0.0
  %1141 = vmatpush1.msra.mxu0 %v288
  %1142 = vmatprep.subr.mxu0 0.0
  %1143 = vmatpush1.msra.mxu0 %v287
  %1144 = vmatprep.subr.mxu0 0.0
  %1145 = vmatpush1.msra.mxu0 %v286
  %1146 = vmatprep.subr.mxu0 0.0
  %1147 = vmatpush1.msra.mxu0 %v285
  %1148 = vmatprep.subr.mxu0 0.0
  %1149 = vmatpush1.msra.mxu0 %v284
  %1150 = vmatprep.subr.mxu0 0.0
  %1151 = vmatpush1.msra.mxu0 %v283
  %1152 = vmatprep.subr.mxu0 0.0
  %1153 = vmatpush1.msra.mxu0 %v282
  %1154 = vmatprep.subr.mxu0 0.0
  %1155 = vmatpush1.msra.mxu0 %v281
  %1156 = vmatprep.subr.mxu0 0.0
  %1157 = vmatpush2.msra.mxu0 0.0
  %1158 = vmatprep.subr.mxu0 0.0
  %1159 = vmatpush2.msra.mxu0 0.0
  %1160 = vmatprep.subr.mxu0 0.0
  %1161 = vmatpush2.msra.mxu0 0.0
  %1162 = vmatprep.subr.mxu0 0.0
  %1163 = vmatpush2.msra.mxu0 0.0
  %1164 = vmatprep.subr.mxu0 0.0
  %1165 = vmatpush2.msra.mxu0 0.0
  %1166 = vmatprep.subr.mxu0 0.0
  %1167 = vmatpush2.msra.mxu0 0.0
  %1168 = vmatprep.subr.mxu0 0.0
  %1169 = vmatpush2.msra.mxu0 0.0
  %1170 = vmatprep.subr.mxu0 0.0
  %1171 = vmatpush2.msra.mxu0 0.0
  %1172 = vmatprep.subr.mxu0 0.0
  %1173 = vmatpush2.msra.mxu0 0.0
  %1174 = vmatprep.subr.mxu0 0.0
  %1175 = vmatpush2.msra.mxu0 0.0
  %1176 = vmatprep.subr.mxu0 0.0
  %1177 = vmatpush2.msra.mxu0 0.0
  %1178 = vmatprep.subr.mxu0 0.0
  %1179 = vmatpush2.msra.mxu0 0.0
  %1180 = vmatprep.subr.mxu0 0.0
  %1181 = vmatpush2.msra.mxu0 0.0
  %1182 = vmatprep.subr.mxu0 0.0
  %1183 = vmatpush2.msra.mxu0 0.0
  %1184 = vmatprep.subr.mxu0 0.0
  %1185 = vmatpush2.msra.mxu0 0.0
  %1186 = vmatprep.subr.mxu0 0.0
  %1187 = vmatpush2.msra.mxu0 0.0
  %1188 = vmatprep.mubr.f32.mxu0 0.0
  %1189 = vmatmul.mubr.f32.gmra.mxu0 %v142
  %v1190 = vpop.f32.mrf.mxu0
  %v1191 = vadd.f32 %v645, %v1190
  %v1192 = vpop.f32.mrf.mxu0
  %1193 = vmatprep.mubr.f32.mxu0 0.0
  %1194 = vmatmul.mubr.f32.gmra.mxu0 %v143
  %v1195 = vpop.f32.mrf.mxu0
  %v1196 = vadd.f32 %v650, %v1195
  %v1197 = vpop.f32.mrf.mxu0
  %1198 = vmatprep.mubr.f32.mxu0 0.0
  %1199 = vmatmul.mubr.f32.gmra.mxu0 %v144
  %v1200 = vpop.f32.mrf.mxu0
  %v1201 = vadd.f32 %v655, %v1200
  %v1202 = vpop.f32.mrf.mxu0
  %1203 = vmatprep.mubr.f32.mxu0 0.0
  %1204 = vmatmul.mubr.f32.gmra.mxu0 %v145
  %v1205 = vpop.f32.mrf.mxu0
  %v1206 = vadd.f32 %v660, %v1205
  %v1207 = vpop.f32.mrf.mxu0
  %1208 = vmatprep.mubr.f32.mxu0 0.0
  %1209 = vmatmul.mubr.f32.gmra.mxu0 %v146
  %v1210 = vpop.f32.mrf.mxu0
  %v1211 = vadd.f32 %v665, %v1210
  %v1212 = vpop.f32.mrf.mxu0
  %1213 = vmatprep.mubr.f32.mxu0 0.0
  %1214 = vmatmul.mubr.f32.gmra.mxu0 %v147
  %v1215 = vpop.f32.mrf.mxu0
  %v1216 = vadd.f32 %v670, %v1215
  %v1217 = vpop.f32.mrf.mxu0
  %1218 = vmatprep.mubr.f32.mxu0 0.0
  %1219 = vmatmul.mubr.f32.gmra.mxu0 %v148
  %v1220 = vpop.f32.mrf.mxu0
  %v1221 = vadd.f32 %v675, %v1220
  %v1222 = vpop.f32.mrf.mxu0
  %1223 = vmatprep.mubr.f32.mxu0 0.0
  %1224 = vmatmul.mubr.f32.gmra.mxu0 %v149
  %v1225 = vpop.f32.mrf.mxu0
  %v1226 = vadd.f32 %v680, %v1225
  %v1227 = vpop.f32.mrf.mxu0
  %1228 = vmatprep.mubr.f32.mxu0 0.0
  %1229 = vmatmul.mubr.f32.gmra.mxu0 %v150
  %v1230 = vpop.f32.mrf.mxu0
  %v1231 = vadd.f32 %v685, %v1230
  %v1232 = vpop.f32.mrf.mxu0
  %1233 = vmatprep.mubr.f32.mxu0 0.0
  %1234 = vmatmul.mubr.f32.gmra.mxu0 %v151
  %v1235 = vpop.f32.mrf.mxu0
  %v1236 = vadd.f32 %v690, %v1235
  %v1237 = vpop.f32.mrf.mxu0
  %1238 = vmatprep.mubr.f32.mxu0 0.0
  %1239 = vmatmul.mubr.f32.gmra.mxu0 %v152
  %v1240 = vpop.f32.mrf.mxu0
  %v1241 = vadd.f32 %v695, %v1240
  %v1242 = vpop.f32.mrf.mxu0
  %1243 = vmatprep.mubr.f32.mxu0 0.0
  %1244 = vmatmul.mubr.f32.gmra.mxu0 %v153
  %v1245 = vpop.f32.mrf.mxu0
  %v1246 = vadd.f32 %v700, %v1245
  %v1247 = vpop.f32.mrf.mxu0
  %1248 = vmatprep.mubr.f32.mxu0 0.0
  %1249 = vmatmul.mubr.f32.gmra.mxu0 %v154
  %v1250 = vpop.f32.mrf.mxu0
  %v1251 = vadd.f32 %v705, %v1250
  %v1252 = vpop.f32.mrf.mxu0
  %1253 = vmatprep.mubr.f32.mxu0 0.0
  %1254 = vmatmul.mubr.f32.gmra.mxu0 %v155
  %v1255 = vpop.f32.mrf.mxu0
  %v1256 = vadd.f32 %v710, %v1255
  %v1257 = vpop.f32.mrf.mxu0
  %1258 = vmatprep.mubr.f32.mxu0 0.0
  %1259 = vmatmul.mubr.f32.gmra.mxu0 %v156
  %v1260 = vpop.f32.mrf.mxu0
  %v1261 = vadd.f32 %v715, %v1260
  %v1262 = vpop.f32.mrf.mxu0
  %1263 = vmatprep.mubr.f32.mxu0 0.0
  %1264 = vmatmul.mubr.f32.gmra.mxu0 %v157
  %v1265 = vpop.f32.mrf.mxu0
  %v1266 = vadd.f32 %v720, %v1265
  %v1267 = vpop.f32.mrf.mxu0
  %1268 = vmatprep.mubr.f32.mxu0 0.0
  %1269 = vmatmul.mubr.f32.gmra.mxu0 %v158
  %v1270 = vpop.f32.mrf.mxu0
  %v1271 = vadd.f32 %v725, %v1270
  %v1272 = vpop.f32.mrf.mxu0
  %1273 = vmatprep.mubr.f32.mxu0 0.0
  %1274 = vmatmul.mubr.f32.gmra.mxu0 %v159
  %v1275 = vpop.f32.mrf.mxu0
  %v1276 = vadd.f32 %v730, %v1275
  %v1277 = vpop.f32.mrf.mxu0
  %1278 = vmatprep.mubr.f32.mxu0 0.0
  %1279 = vmatmul.mubr.f32.gmra.mxu0 %v160
  %v1280 = vpop.f32.mrf.mxu0
  %v1281 = vadd.f32 %v735, %v1280
  %v1282 = vpop.f32.mrf.mxu0
  %1283 = vmatprep.mubr.f32.mxu0 0.0
  %1284 = vmatmul.mubr.f32.gmra.mxu0 %v161
  %v1285 = vpop.f32.mrf.mxu0
  %v1286 = vadd.f32 %v740, %v1285
  %v1287 = vpop.f32.mrf.mxu0
  %1288 = vmatprep.mubr.f32.mxu0 0.0
  %1289 = vmatmul.mubr.f32.gmra.mxu0 %v162
  %v1290 = vpop.f32.mrf.mxu0
  %v1291 = vadd.f32 %v745, %v1290
  %v1292 = vpop.f32.mrf.mxu0
  %1293 = vmatprep.mubr.f32.mxu0 0.0
  %1294 = vmatmul.mubr.f32.gmra.mxu0 %v163
  %v1295 = vpop.f32.mrf.mxu0
  %v1296 = vadd.f32 %v750, %v1295
  %v1297 = vpop.f32.mrf.mxu0
  %1298 = vmatprep.mubr.f32.mxu0 0.0
  %1299 = vmatmul.mubr.f32.gmra.mxu0 %v164
  %v1300 = vpop.f32.mrf.mxu0
  %v1301 = vadd.f32 %v755, %v1300
  %v1302 = vpop.f32.mrf.mxu0
  %1303 = vmatprep.mubr.f32.mxu0 0.0
  %1304 = vmatmul.mubr.f32.gmra.mxu0 %v165
  %v1305 = vpop.f32.mrf.mxu0
  %v1306 = vadd.f32 %v760, %v1305
  %v1307 = vpop.f32.mrf.mxu0
  %1308 = vmatprep.mubr.f32.mxu0 0.0
  %1309 = vmatmul.mubr.f32.gmra.mxu0 %v166
  %v1310 = vpop.f32.mrf.mxu0
  %v1311 = vadd.f32 %v765, %v1310
  %v1312 = vpop.f32.mrf.mxu0
  %1313 = vmatprep.mubr.f32.mxu0 0.0
  %1314 = vmatmul.mubr.f32.gmra.mxu0 %v167
  %v1315 = vpop.f32.mrf.mxu0
  %v1316 = vadd.f32 %v770, %v1315
  %v1317 = vpop.f32.mrf.mxu0
  %1318 = vmatprep.mubr.f32.mxu0 0.0
  %1319 = vmatmul.mubr.f32.gmra.mxu0 %v168
  %v1320 = vpop.f32.mrf.mxu0
  %v1321 = vadd.f32 %v775, %v1320
  %v1322 = vpop.f32.mrf.mxu0
  %1323 = vmatprep.mubr.f32.mxu0 0.0
  %1324 = vmatmul.mubr.f32.gmra.mxu0 %v169
  %v1325 = vpop.f32.mrf.mxu0
  %v1326 = vadd.f32 %v780, %v1325
  %v1327 = vpop.f32.mrf.mxu0
  %1328 = vmatprep.mubr.f32.mxu0 0.0
  %1329 = vmatmul.mubr.f32.gmra.mxu0 %v170
  %v1330 = vpop.f32.mrf.mxu0
  %v1331 = vadd.f32 %v785, %v1330
  %v1332 = vpop.f32.mrf.mxu0
  %1333 = vmatprep.mubr.f32.mxu0 0.0
  %1334 = vmatmul.mubr.f32.gmra.mxu0 %v171
  %v1335 = vpop.f32.mrf.mxu0
  %v1336 = vadd.f32 %v790, %v1335
  %v1337 = vpop.f32.mrf.mxu0
  %1338 = vmatprep.mubr.f32.mxu0 0.0
  %1339 = vmatmul.mubr.f32.gmra.mxu0 %v172
  %v1340 = vpop.f32.mrf.mxu0
  %v1341 = vadd.f32 %v795, %v1340
  %v1342 = vpop.f32.mrf.mxu0
  %1343 = vmatprep.mubr.f32.mxu0 0.0
  %1344 = vmatmul.mubr.f32.gmra.mxu0 %v173
  %v1345 = vpop.f32.mrf.mxu0
  %v1346 = vadd.f32 %v800, %v1345
  %v1347 = vpop.f32.mrf.mxu0
  %1348 = vdwg.mxu0
  %v1349 = vadd.f32 %v1191, %v966
  %v1350 = vadd.f32 %v1196, %v971
  %v1351 = vadd.f32 %v1201, %v976
  %v1352 = vadd.f32 %v1206, %v981
  %v1353 = vadd.f32 %v1211, %v986
  %v1354 = vadd.f32 %v1216, %v991
  %v1355 = vadd.f32 %v1221, %v996
  %v1356 = vadd.f32 %v1226, %v1001
  %v1357 = vadd.f32 %v1231, %v1006
  %v1358 = vadd.f32 %v1236, %v1011
  %v1359 = vadd.f32 %v1241, %v1016
  %v1360 = vadd.f32 %v1246, %v1021
  %v1361 = vadd.f32 %v1251, %v1026
  %v1362 = vadd.f32 %v1256, %v1031
  %v1363 = vadd.f32 %v1261, %v1036
  %v1364 = vadd.f32 %v1266, %v1041
  %v1365 = vadd.f32 %v1271, %v1046
  %v1366 = vadd.f32 %v1276, %v1051
  %v1367 = vadd.f32 %v1281, %v1056
  %v1368 = vadd.f32 %v1286, %v1061
  %v1369 = vadd.f32 %v1291, %v1066
  %v1370 = vadd.f32 %v1296, %v1071
  %v1371 = vadd.f32 %v1301, %v1076
  %v1372 = vadd.f32 %v1306, %v1081
  %v1373 = vadd.f32 %v1311, %v1086
  %v1374 = vadd.f32 %v1316, %v1091
  %v1375 = vadd.f32 %v1321, %v1096
  %v1376 = vadd.f32 %v1326, %v1101
  %v1377 = vadd.f32 %v1331, %v1106
  %v1378 = vadd.f32 %v1336, %v1111
  %v1379 = vadd.f32 %v1341, %v1116
  %v1380 = vadd.f32 %v1346, %v1121
  %vm1381 = vcmp.gt.f32.partialorder %v1349, 0.0
  %vm1382 = vcmp.gt.f32.partialorder %v1350, 0.0
  %vm1383 = vcmp.gt.f32.partialorder %v1351, 0.0
  %vm1384 = vcmp.gt.f32.partialorder %v1352, 0.0
  %vm1385 = vcmp.gt.f32.partialorder %v1353, 0.0
  %vm1386 = vcmp.gt.f32.partialorder %v1354, 0.0
  %vm1387 = vcmp.gt.f32.partialorder %v1355, 0.0
  %vm1388 = vcmp.gt.f32.partialorder %v1356, 0.0
  %vm1389 = vcmp.gt.f32.partialorder %v1357, 0.0
  %vm1390 = vcmp.gt.f32.partialorder %v1358, 0.0
  %vm1391 = vcmp.gt.f32.partialorder %v1359, 0.0
  %vm1392 = vcmp.gt.f32.partialorder %v1360, 0.0
  %vm1393 = vcmp.gt.f32.partialorder %v1361, 0.0
  %vm1394 = vcmp.gt.f32.partialorder %v1362, 0.0
  %vm1395 = vcmp.gt.f32.partialorder %v1363, 0.0
  %vm1396 = vcmp.gt.f32.partialorder %v1364, 0.0
  %vm1397 = vcmp.gt.f32.partialorder %v1365, 0.0
  %vm1398 = vcmp.gt.f32.partialorder %v1366, 0.0
  %vm1399 = vcmp.gt.f32.partialorder %v1367, 0.0
  %vm1400 = vcmp.gt.f32.partialorder %v1368, 0.0
  %vm1401 = vcmp.gt.f32.partialorder %v1369, 0.0
  %vm1402 = vcmp.gt.f32.partialorder %v1370, 0.0
  %vm1403 = vcmp.gt.f32.partialorder %v1371, 0.0
  %vm1404 = vcmp.gt.f32.partialorder %v1372, 0.0
  %vm1405 = vcmp.gt.f32.partialorder %v1373, 0.0
  %vm1406 = vcmp.gt.f32.partialorder %v1374, 0.0
  %vm1407 = vcmp.gt.f32.partialorder %v1375, 0.0
  %vm1408 = vcmp.gt.f32.partialorder %v1376, 0.0
  %vm1409 = vcmp.gt.f32.partialorder %v1377, 0.0
  %vm1410 = vcmp.gt.f32.partialorder %v1378, 0.0
  %vm1411 = vcmp.gt.f32.partialorder %v1379, 0.0
  %vm1412 = vcmp.gt.f32.partialorder %v1380, 0.0
  %v1413 = vmul.f32 %v1349, 0.2
  %v1414 = vmul.f32 %v1350, 0.2
  %v1415 = vmul.f32 %v1351, 0.2
  %v1416 = vmul.f32 %v1352, 0.2
  %v1417 = vmul.f32 %v1353, 0.2
  %v1418 = vmul.f32 %v1354, 0.2
  %v1419 = vmul.f32 %v1355, 0.2
  %v1420 = vmul.f32 %v1356, 0.2
  %v1421 = vmul.f32 %v1357, 0.2
  %v1422 = vmul.f32 %v1358, 0.2
  %v1423 = vmul.f32 %v1359, 0.2
  %v1424 = vmul.f32 %v1360, 0.2
  %v1425 = vmul.f32 %v1361, 0.2
  %v1426 = vmul.f32 %v1362, 0.2
  %v1427 = vmul.f32 %v1363, 0.2
  %v1428 = vmul.f32 %v1364, 0.2
  %v1429 = vmul.f32 %v1365, 0.2
  %v1430 = vmul.f32 %v1366, 0.2
  %v1431 = vmul.f32 %v1367, 0.2
  %v1432 = vmul.f32 %v1368, 0.2
  %v1433 = vmul.f32 %v1369, 0.2
  %v1434 = vmul.f32 %v1370, 0.2
  %v1435 = vmul.f32 %v1371, 0.2
  %v1436 = vmul.f32 %v1372, 0.2
  %v1437 = vmul.f32 %v1373, 0.2
  %v1438 = vmul.f32 %v1374, 0.2
  %v1439 = vmul.f32 %v1375, 0.2
  %v1440 = vmul.f32 %v1376, 0.2
  %v1441 = vmul.f32 %v1377, 0.2
  %v1442 = vmul.f32 %v1378, 0.2
  %v1443 = vmul.f32 %v1379, 0.2
  %v1444 = vmul.f32 %v1380, 0.2
  %v1445 = vsel %vm1381, %v1349, %v1413
  %v1446 = vsel %vm1382, %v1350, %v1414
  %v1447 = vsel %vm1383, %v1351, %v1415
  %v1448 = vsel %vm1384, %v1352, %v1416
  %v1449 = vsel %vm1385, %v1353, %v1417
  %v1450 = vsel %vm1386, %v1354, %v1418
  %v1451 = vsel %vm1387, %v1355, %v1419
  %v1452 = vsel %vm1388, %v1356, %v1420
  %v1453 = vsel %vm1389, %v1357, %v1421
  %v1454 = vsel %vm1390, %v1358, %v1422
  %v1455 = vsel %vm1391, %v1359, %v1423
  %v1456 = vsel %vm1392, %v1360, %v1424
  %v1457 = vsel %vm1393, %v1361, %v1425
  %v1458 = vsel %vm1394, %v1362, %v1426
  %v1459 = vsel %vm1395, %v1363, %v1427
  %v1460 = vsel %vm1396, %v1364, %v1428
  %v1461 = vsel %vm1397, %v1365, %v1429
  %v1462 = vsel %vm1398, %v1366, %v1430
  %v1463 = vsel %vm1399, %v1367, %v1431
  %v1464 = vsel %vm1400, %v1368, %v1432
  %v1465 = vsel %vm1401, %v1369, %v1433
  %v1466 = vsel %vm1402, %v1370, %v1434
  %v1467 = vsel %vm1403, %v1371, %v1435
  %v1468 = vsel %vm1404, %v1372, %v1436
  %v1469 = vsel %vm1405, %v1373, %v1437
  %v1470 = vsel %vm1406, %v1374, %v1438
  %v1471 = vsel %vm1407, %v1375, %v1439
  %v1472 = vsel %vm1408, %v1376, %v1440
  %v1473 = vsel %vm1409, %v1377, %v1441
  %v1474 = vsel %vm1410, %v1378, %v1442
  %v1475 = vsel %vm1411, %v1379, %v1443
  %v1476 = vsel %vm1412, %v1380, %v1444
  %vm1477 = vcmask 261120
  %v1479 = vsel %vm1477, %v1445, 0
  %v1482 = vsel %vm1477, %v1446, 0
  %v1485 = vsel %vm1477, %v1447, 0
  %v1488 = vsel %vm1477, %v1448, 0
  %v1491 = vsel %vm1477, %v1449, 0
  %v1494 = vsel %vm1477, %v1450, 0
  %v1497 = vsel %vm1477, %v1451, 0
  %v1500 = vsel %vm1477, %v1452, 0
  %v1503 = vsel %vm1477, %v1453, 0
  %v1506 = vsel %vm1477, %v1454, 0
  %v1509 = vsel %vm1477, %v1455, 0
  %v1512 = vsel %vm1477, %v1456, 0
  %v1515 = vsel %vm1477, %v1457, 0
  %v1518 = vsel %vm1477, %v1458, 0
  %v1521 = vsel %vm1477, %v1459, 0
  %v1524 = vsel %vm1477, %v1460, 0
  %v1527 = vsel %vm1477, %v1461, 0
  %v1530 = vsel %vm1477, %v1462, 0
  %v1533 = vsel %vm1477, %v1463, 0
  %v1536 = vsel %vm1477, %v1464, 0
  %v1539 = vsel %vm1477, %v1465, 0
  %v1542 = vsel %vm1477, %v1466, 0
  %v1545 = vsel %vm1477, %v1467, 0
  %v1548 = vsel %vm1477, %v1468, 0
  %v1551 = vsel %vm1477, %v1469, 0
  %v1554 = vsel %vm1477, %v1470, 0
  %v1557 = vsel %vm1477, %v1471, 0
  %v1560 = vsel %vm1477, %v1472, 0
  %v1563 = vsel %vm1477, %v1473, 0
  %v1566 = vsel %vm1477, %v1474, 0
  %v1569 = vsel %vm1477, %v1475, 0
  %v1572 = vsel %vm1477, %v1476, 0
  %1574 = vmatprep.subr.mxu0 0.0
  %1575 = vmatpush1.msra.mxu0 0.0
  %1576 = vmatprep.subr.mxu0 0.0
  %1577 = vmatpush1.msra.mxu0 0.0
  %1578 = vmatprep.subr.mxu0 0.0
  %1579 = vmatpush1.msra.mxu0 0.0
  %1580 = vmatprep.subr.mxu0 0.0
  %1581 = vmatpush1.msra.mxu0 0.0
  %1582 = vmatprep.subr.mxu0 0.0
  %1583 = vmatpush1.msra.mxu0 0.0
  %1584 = vmatprep.subr.mxu0 0.0
  %1585 = vmatpush1.msra.mxu0 0.0
  %1586 = vmatprep.subr.mxu0 0.0
  %1587 = vmatpush1.msra.mxu0 0.0
  %1588 = vmatprep.subr.mxu0 0.0
  %1589 = vmatpush1.msra.mxu0 0.0
  %1590 = vmatprep.subr.mxu0 0.0
  %1591 = vmatpush1.msra.mxu0 0.0
  %1592 = vmatprep.subr.mxu0 0.0
  %1593 = vmatpush1.msra.mxu0 0.0
  %1594 = vmatprep.subr.mxu0 0.0
  %1595 = vmatpush1.msra.mxu0 0.0
  %1596 = vmatprep.subr.mxu0 0.0
  %1597 = vmatpush1.msra.mxu0 0.0
  %1598 = vmatprep.subr.mxu0 0.0
  %1599 = vmatpush1.msra.mxu0 %v300
  %1600 = vmatprep.subr.mxu0 0.0
  %1601 = vmatpush1.msra.mxu0 %v299
  %1602 = vmatprep.subr.mxu0 0.0
  %1603 = vmatpush1.msra.mxu0 %v298
  %1604 = vmatprep.subr.mxu0 0.0
  %1605 = vmatpush1.msra.mxu0 %v297
  %1606 = vmatprep.subr.mxu0 0.0
  %1607 = vmatpush2.msra.mxu0 0.0
  %1608 = vmatprep.subr.mxu0 0.0
  %1609 = vmatpush2.msra.mxu0 0.0
  %1610 = vmatprep.subr.mxu0 0.0
  %1611 = vmatpush2.msra.mxu0 0.0
  %1612 = vmatprep.subr.mxu0 0.0
  %1613 = vmatpush2.msra.mxu0 0.0
  %1614 = vmatprep.subr.mxu0 0.0
  %1615 = vmatpush2.msra.mxu0 0.0
  %1616 = vmatprep.subr.mxu0 0.0
  %1617 = vmatpush2.msra.mxu0 0.0
  %1618 = vmatprep.subr.mxu0 0.0
  %1619 = vmatpush2.msra.mxu0 0.0
  %1620 = vmatprep.subr.mxu0 0.0
  %1621 = vmatpush2.msra.mxu0 0.0
  %1622 = vmatprep.subr.mxu0 0.0
  %1623 = vmatpush2.msra.mxu0 0.0
  %1624 = vmatprep.subr.mxu0 0.0
  %1625 = vmatpush2.msra.mxu0 0.0
  %1626 = vmatprep.subr.mxu0 0.0
  %1627 = vmatpush2.msra.mxu0 0.0
  %1628 = vmatprep.subr.mxu0 0.0
  %1629 = vmatpush2.msra.mxu0 0.0
  %1630 = vmatprep.subr.mxu0 0.0
  %1631 = vmatpush2.msra.mxu0 0.0
  %1632 = vmatprep.subr.mxu0 0.0
  %1633 = vmatpush2.msra.mxu0 0.0
  %1634 = vmatprep.subr.mxu0 0.0
  %1635 = vmatpush2.msra.mxu0 0.0
  %1636 = vmatprep.subr.mxu0 0.0
  %1637 = vmatpush2.msra.mxu0 0.0
  %1638 = vmatprep.mubr.f32.mxu0 0.0
  %1639 = vmatmul.mubr.f32.gmra.mxu0 %v1479
  %v1640 = vpop.f32.mrf.mxu0
  %v1641 = vadd.f32 0.0, %v1640
  %v1642 = vpop.f32.mrf.mxu0
  %1643 = vmatprep.mubr.f32.mxu0 0.0
  %1644 = vmatmul.mubr.f32.gmra.mxu0 %v1482
  %v1645 = vpop.f32.mrf.mxu0
  %v1646 = vadd.f32 0.0, %v1645
  %v1647 = vpop.f32.mrf.mxu0
  %1648 = vmatprep.mubr.f32.mxu0 0.0
  %1649 = vmatmul.mubr.f32.gmra.mxu0 %v1485
  %v1650 = vpop.f32.mrf.mxu0
  %v1651 = vadd.f32 0.0, %v1650
  %v1652 = vpop.f32.mrf.mxu0
  %1653 = vmatprep.mubr.f32.mxu0 0.0
  %1654 = vmatmul.mubr.f32.gmra.mxu0 %v1488
  %v1655 = vpop.f32.mrf.mxu0
  %v1656 = vadd.f32 0.0, %v1655
  %v1657 = vpop.f32.mrf.mxu0
  %1658 = vmatprep.mubr.f32.mxu0 0.0
  %1659 = vmatmul.mubr.f32.gmra.mxu0 %v1491
  %v1660 = vpop.f32.mrf.mxu0
  %v1661 = vadd.f32 0.0, %v1660
  %v1662 = vpop.f32.mrf.mxu0
  %1663 = vmatprep.mubr.f32.mxu0 0.0
  %1664 = vmatmul.mubr.f32.gmra.mxu0 %v1494
  %v1665 = vpop.f32.mrf.mxu0
  %v1666 = vadd.f32 0.0, %v1665
  %v1667 = vpop.f32.mrf.mxu0
  %1668 = vmatprep.mubr.f32.mxu0 0.0
  %1669 = vmatmul.mubr.f32.gmra.mxu0 %v1497
  %v1670 = vpop.f32.mrf.mxu0
  %v1671 = vadd.f32 0.0, %v1670
  %v1672 = vpop.f32.mrf.mxu0
  %1673 = vmatprep.mubr.f32.mxu0 0.0
  %1674 = vmatmul.mubr.f32.gmra.mxu0 %v1500
  %v1675 = vpop.f32.mrf.mxu0
  %v1676 = vadd.f32 0.0, %v1675
  %v1677 = vpop.f32.mrf.mxu0
  %1678 = vmatprep.mubr.f32.mxu0 0.0
  %1679 = vmatmul.mubr.f32.gmra.mxu0 %v1503
  %v1680 = vpop.f32.mrf.mxu0
  %v1681 = vadd.f32 0.0, %v1680
  %v1682 = vpop.f32.mrf.mxu0
  %1683 = vmatprep.mubr.f32.mxu0 0.0
  %1684 = vmatmul.mubr.f32.gmra.mxu0 %v1506
  %v1685 = vpop.f32.mrf.mxu0
  %v1686 = vadd.f32 0.0, %v1685
  %v1687 = vpop.f32.mrf.mxu0
  %1688 = vmatprep.mubr.f32.mxu0 0.0
  %1689 = vmatmul.mubr.f32.gmra.mxu0 %v1509
  %v1690 = vpop.f32.mrf.mxu0
  %v1691 = vadd.f32 0.0, %v1690
  %v1692 = vpop.f32.mrf.mxu0
  %1693 = vmatprep.mubr.f32.mxu0 0.0
  %1694 = vmatmul.mubr.f32.gmra.mxu0 %v1512
  %v1695 = vpop.f32.mrf.mxu0
  %v1696 = vadd.f32 0.0, %v1695
  %v1697 = vpop.f32.mrf.mxu0
  %1698 = vmatprep.mubr.f32.mxu0 0.0
  %1699 = vmatmul.mubr.f32.gmra.mxu0 %v1515
  %v1700 = vpop.f32.mrf.mxu0
  %v1701 = vadd.f32 0.0, %v1700
  %v1702 = vpop.f32.mrf.mxu0
  %1703 = vmatprep.mubr.f32.mxu0 0.0
  %1704 = vmatmul.mubr.f32.gmra.mxu0 %v1518
  %v1705 = vpop.f32.mrf.mxu0
  %v1706 = vadd.f32 0.0, %v1705
  %v1707 = vpop.f32.mrf.mxu0
  %1708 = vmatprep.mubr.f32.mxu0 0.0
  %1709 = vmatmul.mubr.f32.gmra.mxu0 %v1521
  %v1710 = vpop.f32.mrf.mxu0
  %v1711 = vadd.f32 0.0, %v1710
  %v1712 = vpop.f32.mrf.mxu0
  %1713 = vmatprep.mubr.f32.mxu0 0.0
  %1714 = vmatmul.mubr.f32.gmra.mxu0 %v1524
  %v1715 = vpop.f32.mrf.mxu0
  %v1716 = vadd.f32 0.0, %v1715
  %v1717 = vpop.f32.mrf.mxu0
  %1718 = vmatprep.mubr.f32.mxu0 0.0
  %1719 = vmatmul.mubr.f32.gmra.mxu0 %v1527
  %v1720 = vpop.f32.mrf.mxu0
  %v1721 = vadd.f32 0.0, %v1720
  %v1722 = vpop.f32.mrf.mxu0
  %1723 = vmatprep.mubr.f32.mxu0 0.0
  %1724 = vmatmul.mubr.f32.gmra.mxu0 %v1530
  %v1725 = vpop.f32.mrf.mxu0
  %v1726 = vadd.f32 0.0, %v1725
  %v1727 = vpop.f32.mrf.mxu0
  %1728 = vmatprep.mubr.f32.mxu0 0.0
  %1729 = vmatmul.mubr.f32.gmra.mxu0 %v1533
  %v1730 = vpop.f32.mrf.mxu0
  %v1731 = vadd.f32 0.0, %v1730
  %v1732 = vpop.f32.mrf.mxu0
  %1733 = vmatprep.mubr.f32.mxu0 0.0
  %1734 = vmatmul.mubr.f32.gmra.mxu0 %v1536
  %v1735 = vpop.f32.mrf.mxu0
  %v1736 = vadd.f32 0.0, %v1735
  %v1737 = vpop.f32.mrf.mxu0
  %1738 = vmatprep.mubr.f32.mxu0 0.0
  %1739 = vmatmul.mubr.f32.gmra.mxu0 %v1539
  %v1740 = vpop.f32.mrf.mxu0
  %v1741 = vadd.f32 0.0, %v1740
  %v1742 = vpop.f32.mrf.mxu0
  %1743 = vmatprep.mubr.f32.mxu0 0.0
  %1744 = vmatmul.mubr.f32.gmra.mxu0 %v1542
  %v1745 = vpop.f32.mrf.mxu0
  %v1746 = vadd.f32 0.0, %v1745
  %v1747 = vpop.f32.mrf.mxu0
  %1748 = vmatprep.mubr.f32.mxu0 0.0
  %1749 = vmatmul.mubr.f32.gmra.mxu0 %v1545
  %v1750 = vpop.f32.mrf.mxu0
  %v1751 = vadd.f32 0.0, %v1750
  %v1752 = vpop.f32.mrf.mxu0
  %1753 = vmatprep.mubr.f32.mxu0 0.0
  %1754 = vmatmul.mubr.f32.gmra.mxu0 %v1548
  %v1755 = vpop.f32.mrf.mxu0
  %v1756 = vadd.f32 0.0, %v1755
  %v1757 = vpop.f32.mrf.mxu0
  %1758 = vmatprep.mubr.f32.mxu0 0.0
  %1759 = vmatmul.mubr.f32.gmra.mxu0 %v1551
  %v1760 = vpop.f32.mrf.mxu0
  %v1761 = vadd.f32 0.0, %v1760
  %v1762 = vpop.f32.mrf.mxu0
  %1763 = vmatprep.mubr.f32.mxu0 0.0
  %1764 = vmatmul.mubr.f32.gmra.mxu0 %v1554
  %v1765 = vpop.f32.mrf.mxu0
  %v1766 = vadd.f32 0.0, %v1765
  %v1767 = vpop.f32.mrf.mxu0
  %1768 = vmatprep.mubr.f32.mxu0 0.0
  %1769 = vmatmul.mubr.f32.gmra.mxu0 %v1557
  %v1770 = vpop.f32.mrf.mxu0
  %v1771 = vadd.f32 0.0, %v1770
  %v1772 = vpop.f32.mrf.mxu0
  %1773 = vmatprep.mubr.f32.mxu0 0.0
  %1774 = vmatmul.mubr.f32.gmra.mxu0 %v1560
  %v1775 = vpop.f32.mrf.mxu0
  %v1776 = vadd.f32 0.0, %v1775
  %v1777 = vpop.f32.mrf.mxu0
  %1778 = vmatprep.mubr.f32.mxu0 0.0
  %1779 = vmatmul.mubr.f32.gmra.mxu0 %v1563
  %v1780 = vpop.f32.mrf.mxu0
  %v1781 = vadd.f32 0.0, %v1780
  %v1782 = vpop.f32.mrf.mxu0
  %1783 = vmatprep.mubr.f32.mxu0 0.0
  %1784 = vmatmul.mubr.f32.gmra.mxu0 %v1566
  %v1785 = vpop.f32.mrf.mxu0
  %v1786 = vadd.f32 0.0, %v1785
  %v1787 = vpop.f32.mrf.mxu0
  %1788 = vmatprep.mubr.f32.mxu0 0.0
  %1789 = vmatmul.mubr.f32.gmra.mxu0 %v1569
  %v1790 = vpop.f32.mrf.mxu0
  %v1791 = vadd.f32 0.0, %v1790
  %v1792 = vpop.f32.mrf.mxu0
  %1793 = vmatprep.mubr.f32.mxu0 0.0
  %1794 = vmatmul.mubr.f32.gmra.mxu0 %v1572
  %v1795 = vpop.f32.mrf.mxu0
  %v1796 = vadd.f32 0.0, %v1795
  %v1797 = vpop.f32.mrf.mxu0
  %1798 = vdwg.mxu0
  %vm1799 = vcmask 31744
  %v1800 = vsel %vm1799, %v1641, -inf
  %v1801 = vsel %vm1799, %v1646, -inf
  %v1802 = vsel %vm1799, %v1651, -inf
  %v1803 = vsel %vm1799, %v1656, -inf
  %v1804 = vsel %vm1799, %v1661, -inf
  %v1805 = vmax.f32 %v1800, %v1804
  %v1806 = vsel %vm1799, %v1666, -inf
  %v1807 = vmax.f32 %v1801, %v1806
  %v1808 = vsel %vm1799, %v1671, -inf
  %v1809 = vmax.f32 %v1802, %v1808
  %v1810 = vsel %vm1799, %v1676, -inf
  %v1811 = vmax.f32 %v1803, %v1810
  %v1812 = vsel %vm1799, %v1681, -inf
  %v1813 = vmax.f32 %v1805, %v1812
  %v1814 = vsel %vm1799, %v1686, -inf
  %v1815 = vmax.f32 %v1807, %v1814
  %v1816 = vsel %vm1799, %v1691, -inf
  %v1817 = vmax.f32 %v1809, %v1816
  %v1818 = vsel %vm1799, %v1696, -inf
  %v1819 = vmax.f32 %v1811, %v1818
  %v1820 = vsel %vm1799, %v1701, -inf
  %v1821 = vmax.f32 %v1813, %v1820
  %v1822 = vsel %vm1799, %v1706, -inf
  %v1823 = vmax.f32 %v1815, %v1822
  %v1824 = vsel %vm1799, %v1711, -inf
  %v1825 = vmax.f32 %v1817, %v1824
  %v1826 = vsel %vm1799, %v1716, -inf
  %v1827 = vmax.f32 %v1819, %v1826
  %v1828 = vsel %vm1799, %v1721, -inf
  %v1829 = vmax.f32 %v1821, %v1828
  %v1830 = vsel %vm1799, %v1726, -inf
  %v1831 = vmax.f32 %v1823, %v1830
  %v1832 = vsel %vm1799, %v1731, -inf
  %v1833 = vmax.f32 %v1825, %v1832
  %v1834 = vsel %vm1799, %v1736, -inf
  %v1835 = vmax.f32 %v1827, %v1834
  %v1836 = vsel %vm1799, %v1741, -inf
  %v1837 = vmax.f32 %v1829, %v1836
  %v1838 = vsel %vm1799, %v1746, -inf
  %v1839 = vmax.f32 %v1831, %v1838
  %v1840 = vsel %vm1799, %v1751, -inf
  %v1841 = vmax.f32 %v1833, %v1840
  %v1842 = vsel %vm1799, %v1756, -inf
  %v1843 = vmax.f32 %v1835, %v1842
  %v1844 = vsel %vm1799, %v1761, -inf
  %v1845 = vmax.f32 %v1837, %v1844
  %v1846 = vsel %vm1799, %v1766, -inf
  %v1847 = vmax.f32 %v1839, %v1846
  %v1848 = vsel %vm1799, %v1771, -inf
  %v1849 = vmax.f32 %v1841, %v1848
  %v1850 = vsel %vm1799, %v1776, -inf
  %v1851 = vmax.f32 %v1843, %v1850
  %v1852 = vsel %vm1799, %v1781, -inf
  %v1853 = vmax.f32 %v1845, %v1852
  %v1854 = vsel %vm1799, %v1786, -inf
  %v1855 = vmax.f32 %v1847, %v1854
  %v1856 = vsel %vm1799, %v1791, -inf
  %v1857 = vmax.f32 %v1849, %v1856
  %v1858 = vsel %vm1799, %v1796, -inf
  %v1859 = vmax.f32 %v1851, %v1858
  %v1860 = vmax.f32 %v1853, %v1855
  %v1861 = vmax.f32 %v1857, %v1859
  %v1862 = vmax.f32 %v1860, %v1861
  %v1863 = vrot.slane %v1862, 4
  %v1864 = vmax.f32 %v1862, %v1863
  %v1865 = vrot.slane %v1864, 2
  %v1866 = vmax.f32 %v1864, %v1865
  %v1867 = vrot.slane %v1866, 1
  %v1868 = vmax.f32 %v1866, %v1867
  %v1869 = vsub.f32 %v1641, %v1868
  %v1870 = vsub.f32 %v1646, %v1868
  %v1871 = vsub.f32 %v1651, %v1868
  %v1872 = vsub.f32 %v1656, %v1868
  %v1873 = vsub.f32 %v1661, %v1868
  %v1874 = vsub.f32 %v1666, %v1868
  %v1875 = vsub.f32 %v1671, %v1868
  %v1876 = vsub.f32 %v1676, %v1868
  %v1877 = vsub.f32 %v1681, %v1868
  %v1878 = vsub.f32 %v1686, %v1868
  %v1879 = vsub.f32 %v1691, %v1868
  %v1880 = vsub.f32 %v1696, %v1868
  %v1881 = vsub.f32 %v1701, %v1868
  %v1882 = vsub.f32 %v1706, %v1868
  %v1883 = vsub.f32 %v1711, %v1868
  %v1884 = vsub.f32 %v1716, %v1868
  %v1885 = vsub.f32 %v1721, %v1868
  %v1886 = vsub.f32 %v1726, %v1868
  %v1887 = vsub.f32 %v1731, %v1868
  %v1888 = vsub.f32 %v1736, %v1868
  %v1889 = vsub.f32 %v1741, %v1868
  %v1890 = vsub.f32 %v1746, %v1868
  %v1891 = vsub.f32 %v1751, %v1868
  %v1892 = vsub.f32 %v1756, %v1868
  %v1893 = vsub.f32 %v1761, %v1868
  %v1894 = vsub.f32 %v1766, %v1868
  %v1895 = vsub.f32 %v1771, %v1868
  %v1896 = vsub.f32 %v1776, %v1868
  %v1897 = vsub.f32 %v1781, %v1868
  %v1898 = vsub.f32 %v1786, %v1868
  %v1899 = vsub.f32 %v1791, %v1868
  %v1900 = vsub.f32 %v1796, %v1868
  %v1901 = vmul.f32 %v1869, 1.442695
  %v1902 = vpow.pop %v1901
  %v1903 = vmul.f32 %v1870, 1.442695
  %v1904 = vpow.pop %v1903
  %v1905 = vmul.f32 %v1871, 1.442695
  %v1906 = vpow.pop %v1905
  %v1907 = vmul.f32 %v1872, 1.442695
  %v1908 = vpow.pop %v1907
  %v1909 = vmul.f32 %v1873, 1.442695
  %v1910 = vpow.pop %v1909
  %v1911 = vmul.f32 %v1874, 1.442695
  %v1912 = vpow.pop %v1911
  %v1913 = vmul.f32 %v1875, 1.442695
  %v1914 = vpow.pop %v1913
  %v1915 = vmul.f32 %v1876, 1.442695
  %v1916 = vpow.pop %v1915
  %v1917 = vmul.f32 %v1877, 1.442695
  %v1918 = vpow.pop %v1917
  %v1919 = vmul.f32 %v1878, 1.442695
  %v1920 = vpow.pop %v1919
  %v1921 = vmul.f32 %v1879, 1.442695
  %v1922 = vpow.pop %v1921
  %v1923 = vmul.f32 %v1880, 1.442695
  %v1924 = vpow.pop %v1923
  %v1925 = vmul.f32 %v1881, 1.442695
  %v1926 = vpow.pop %v1925
  %v1927 = vmul.f32 %v1882, 1.442695
  %v1928 = vpow.pop %v1927
  %v1929 = vmul.f32 %v1883, 1.442695
  %v1930 = vpow.pop %v1929
  %v1931 = vmul.f32 %v1884, 1.442695
  %v1932 = vpow.pop %v1931
  %v1933 = vmul.f32 %v1885, 1.442695
  %v1934 = vpow.pop %v1933
  %v1935 = vmul.f32 %v1886, 1.442695
  %v1936 = vpow.pop %v1935
  %v1937 = vmul.f32 %v1887, 1.442695
  %v1938 = vpow.pop %v1937
  %v1939 = vmul.f32 %v1888, 1.442695
  %v1940 = vpow.pop %v1939
  %v1941 = vmul.f32 %v1889, 1.442695
  %v1942 = vpow.pop %v1941
  %v1943 = vmul.f32 %v1890, 1.442695
  %v1944 = vpow.pop %v1943
  %v1945 = vmul.f32 %v1891, 1.442695
  %v1946 = vpow.pop %v1945
  %v1947 = vmul.f32 %v1892, 1.442695
  %v1948 = vpow.pop %v1947
  %v1949 = vmul.f32 %v1893, 1.442695
  %v1950 = vpow.pop %v1949
  %v1951 = vmul.f32 %v1894, 1.442695
  %v1952 = vpow.pop %v1951
  %v1953 = vmul.f32 %v1895, 1.442695
  %v1954 = vpow.pop %v1953
  %v1955 = vmul.f32 %v1896, 1.442695
  %v1956 = vpow.pop %v1955
  %v1957 = vmul.f32 %v1897, 1.442695
  %v1958 = vpow.pop %v1957
  %v1959 = vmul.f32 %v1898, 1.442695
  %v1960 = vpow.pop %v1959
  %v1961 = vmul.f32 %v1899, 1.442695
  %v1962 = vpow.pop %v1961
  %v1963 = vmul.f32 %v1900, 1.442695
  %v1964 = vpow.pop %v1963
  %1966 = vset.pattern.permute.xlu0 0
  %1967 = vperm.xlu0 %1966, %v174
  %v1968 = vpop.permute.xlu0 %1967
  %1971 = vset.pattern.permute.xlu0 0
  %1972 = vperm.xlu0 %1971, %v175
  %v1973 = vpop.permute.xlu0 %1972
  %1976 = vset.pattern.permute.xlu0 0
  %1977 = vperm.xlu0 %1976, %v176
  %v1978 = vpop.permute.xlu0 %1977
  %1981 = vset.pattern.permute.xlu0 0
  %1982 = vperm.xlu0 %1981, %v177
  %v1983 = vpop.permute.xlu0 %1982
  %1986 = vset.pattern.permute.xlu0 0
  %1987 = vperm.xlu0 %1986, %v178
  %v1988 = vpop.permute.xlu0 %1987
  %1991 = vset.pattern.permute.xlu0 0
  %1992 = vperm.xlu0 %1991, %v179
  %v1993 = vpop.permute.xlu0 %1992
  %1996 = vset.pattern.permute.xlu0 0
  %1997 = vperm.xlu0 %1996, %v180
  %v1998 = vpop.permute.xlu0 %1997
  %2001 = vset.pattern.permute.xlu0 0
  %2002 = vperm.xlu0 %2001, %v181
  %v2003 = vpop.permute.xlu0 %2002
  %2006 = vset.pattern.permute.xlu0 0
  %2007 = vperm.xlu0 %2006, %v182
  %v2008 = vpop.permute.xlu0 %2007
  %2011 = vset.pattern.permute.xlu0 0
  %2012 = vperm.xlu0 %2011, %v183
  %v2013 = vpop.permute.xlu0 %2012
  %2016 = vset.pattern.permute.xlu0 0
  %2017 = vperm.xlu0 %2016, %v184
  %v2018 = vpop.permute.xlu0 %2017
  %2021 = vset.pattern.permute.xlu0 0
  %2022 = vperm.xlu0 %2021, %v185
  %v2023 = vpop.permute.xlu0 %2022
  %2026 = vset.pattern.permute.xlu0 0
  %2027 = vperm.xlu0 %2026, %v186
  %v2028 = vpop.permute.xlu0 %2027
  %2031 = vset.pattern.permute.xlu0 0
  %2032 = vperm.xlu0 %2031, %v187
  %v2033 = vpop.permute.xlu0 %2032
  %2036 = vset.pattern.permute.xlu0 0
  %2037 = vperm.xlu0 %2036, %v188
  %v2038 = vpop.permute.xlu0 %2037
  %2041 = vset.pattern.permute.xlu0 0
  %2042 = vperm.xlu0 %2041, %v189
  %v2043 = vpop.permute.xlu0 %2042
  %2046 = vset.pattern.permute.xlu0 0
  %2047 = vperm.xlu0 %2046, %v190
  %v2048 = vpop.permute.xlu0 %2047
  %2051 = vset.pattern.permute.xlu0 0
  %2052 = vperm.xlu0 %2051, %v191
  %v2053 = vpop.permute.xlu0 %2052
  %2056 = vset.pattern.permute.xlu0 0
  %2057 = vperm.xlu0 %2056, %v192
  %v2058 = vpop.permute.xlu0 %2057
  %2061 = vset.pattern.permute.xlu0 0
  %2062 = vperm.xlu0 %2061, %v193
  %v2063 = vpop.permute.xlu0 %2062
  %2066 = vset.pattern.permute.xlu0 0
  %2067 = vperm.xlu0 %2066, %v194
  %v2068 = vpop.permute.xlu0 %2067
  %2071 = vset.pattern.permute.xlu0 0
  %2072 = vperm.xlu0 %2071, %v195
  %v2073 = vpop.permute.xlu0 %2072
  %2076 = vset.pattern.permute.xlu0 0
  %2077 = vperm.xlu0 %2076, %v196
  %v2078 = vpop.permute.xlu0 %2077
  %2081 = vset.pattern.permute.xlu0 0
  %2082 = vperm.xlu0 %2081, %v197
  %v2083 = vpop.permute.xlu0 %2082
  %2086 = vset.pattern.permute.xlu0 0
  %2087 = vperm.xlu0 %2086, %v198
  %v2088 = vpop.permute.xlu0 %2087
  %2091 = vset.pattern.permute.xlu0 0
  %2092 = vperm.xlu0 %2091, %v199
  %v2093 = vpop.permute.xlu0 %2092
  %2096 = vset.pattern.permute.xlu0 0
  %2097 = vperm.xlu0 %2096, %v200
  %v2098 = vpop.permute.xlu0 %2097
  %2101 = vset.pattern.permute.xlu0 0
  %2102 = vperm.xlu0 %2101, %v201
  %v2103 = vpop.permute.xlu0 %2102
  %2106 = vset.pattern.permute.xlu0 0
  %2107 = vperm.xlu0 %2106, %v202
  %v2108 = vpop.permute.xlu0 %2107
  %2111 = vset.pattern.permute.xlu0 0
  %2112 = vperm.xlu0 %2111, %v203
  %v2113 = vpop.permute.xlu0 %2112
  %2116 = vset.pattern.permute.xlu0 0
  %2117 = vperm.xlu0 %2116, %v204
  %v2118 = vpop.permute.xlu0 %2117
  %2121 = vset.pattern.permute.xlu0 0
  %2122 = vperm.xlu0 %2121, %v205
  %v2123 = vpop.permute.xlu0 %2122
  %v2125 = vmul.f32 %v1902, %v1968
  %v2126 = vmul.f32 %v1904, %v1973
  %v2127 = vmul.f32 %v1906, %v1978
  %v2128 = vmul.f32 %v1908, %v1983
  %v2129 = vmul.f32 %v1910, %v1988
  %v2130 = vmul.f32 %v1912, %v1993
  %v2131 = vmul.f32 %v1914, %v1998
  %v2132 = vmul.f32 %v1916, %v2003
  %v2133 = vmul.f32 %v1918, %v2008
  %v2134 = vmul.f32 %v1920, %v2013
  %v2135 = vmul.f32 %v1922, %v2018
  %v2136 = vmul.f32 %v1924, %v2023
  %v2137 = vmul.f32 %v1926, %v2028
  %v2138 = vmul.f32 %v1928, %v2033
  %v2139 = vmul.f32 %v1930, %v2038
  %v2140 = vmul.f32 %v1932, %v2043
  %v2141 = vmul.f32 %v1934, %v2048
  %v2142 = vmul.f32 %v1936, %v2053
  %v2143 = vmul.f32 %v1938, %v2058
  %v2144 = vmul.f32 %v1940, %v2063
  %v2145 = vmul.f32 %v1942, %v2068
  %v2146 = vmul.f32 %v1944, %v2073
  %v2147 = vmul.f32 %v1946, %v2078
  %v2148 = vmul.f32 %v1948, %v2083
  %v2149 = vmul.f32 %v1950, %v2088
  %v2150 = vmul.f32 %v1952, %v2093
  %v2151 = vmul.f32 %v1954, %v2098
  %v2152 = vmul.f32 %v1956, %v2103
  %v2153 = vmul.f32 %v1958, %v2108
  %v2154 = vmul.f32 %v1960, %v2113
  %v2155 = vmul.f32 %v1962, %v2118
  %v2156 = vmul.f32 %v1964, %v2123
  %2157 = vmatprep.subr.mxu0 0.0
  %2158 = vmatpush1.msra.mxu0 %v2140
  %2159 = vmatprep.subr.mxu0 0.0
  %2160 = vmatpush1.msra.mxu0 %v2139
  %2161 = vmatprep.subr.mxu0 0.0
  %2162 = vmatpush1.msra.mxu0 %v2138
  %2163 = vmatprep.subr.mxu0 0.0
  %2164 = vmatpush1.msra.mxu0 %v2137
  %2165 = vmatprep.subr.mxu0 0.0
  %2166 = vmatpush1.msra.mxu0 %v2136
  %2167 = vmatprep.subr.mxu0 0.0
  %2168 = vmatpush1.msra.mxu0 %v2135
  %2169 = vmatprep.subr.mxu0 0.0
  %2170 = vmatpush1.msra.mxu0 %v2134
  %2171 = vmatprep.subr.mxu0 0.0
  %2172 = vmatpush1.msra.mxu0 %v2133
  %2173 = vmatprep.subr.mxu0 0.0
  %2174 = vmatpush1.msra.mxu0 %v2132
  %2175 = vmatprep.subr.mxu0 0.0
  %2176 = vmatpush1.msra.mxu0 %v2131
  %2177 = vmatprep.subr.mxu0 0.0
  %2178 = vmatpush1.msra.mxu0 %v2130
  %2179 = vmatprep.subr.mxu0 0.0
  %2180 = vmatpush1.msra.mxu0 %v2129
  %2181 = vmatprep.subr.mxu0 0.0
  %2182 = vmatpush1.msra.mxu0 %v2128
  %2183 = vmatprep.subr.mxu0 0.0
  %2184 = vmatpush1.msra.mxu0 %v2127
  %2185 = vmatprep.subr.mxu0 0.0
  %2186 = vmatpush1.msra.mxu0 %v2126
  %2187 = vmatprep.subr.mxu0 0.0
  %2188 = vmatpush1.msra.mxu0 %v2125
  %2189 = vmatprep.subr.mxu0 0.0
  %2190 = vmatpush2.msra.mxu0 %v2156
  %2191 = vmatprep.subr.mxu0 0.0
  %2192 = vmatpush2.msra.mxu0 %v2155
  %2193 = vmatprep.subr.mxu0 0.0
  %2194 = vmatpush2.msra.mxu0 %v2154
  %2195 = vmatprep.subr.mxu0 0.0
  %2196 = vmatpush2.msra.mxu0 %v2153
  %2197 = vmatprep.subr.mxu0 0.0
  %2198 = vmatpush2.msra.mxu0 %v2152
  %2199 = vmatprep.subr.mxu0 0.0
  %2200 = vmatpush2.msra.mxu0 %v2151
  %2201 = vmatprep.subr.mxu0 0.0
  %2202 = vmatpush2.msra.mxu0 %v2150
  %2203 = vmatprep.subr.mxu0 0.0
  %2204 = vmatpush2.msra.mxu0 %v2149
  %2205 = vmatprep.subr.mxu0 0.0
  %2206 = vmatpush2.msra.mxu0 %v2148
  %2207 = vmatprep.subr.mxu0 0.0
  %2208 = vmatpush2.msra.mxu0 %v2147
  %2209 = vmatprep.subr.mxu0 0.0
  %2210 = vmatpush2.msra.mxu0 %v2146
  %2211 = vmatprep.subr.mxu0 0.0
  %2212 = vmatpush2.msra.mxu0 %v2145
  %2213 = vmatprep.subr.mxu0 0.0
  %2214 = vmatpush2.msra.mxu0 %v2144
  %2215 = vmatprep.subr.mxu0 0.0
  %2216 = vmatpush2.msra.mxu0 %v2143
  %2217 = vmatprep.subr.mxu0 0.0
  %2218 = vmatpush2.msra.mxu0 %v2142
  %2219 = vmatprep.subr.mxu0 0.0
  %2220 = vmatpush2.msra.mxu0 %v2141
  %2221 = vmatprep.mubr.f32.mxu0 %v271
  %2222 = vmatmul.mubr.f32.gmra.mxu0 %v270
  %v2223 = vpop.f32.mrf.mxu0
  %v2224 = vadd.f32 0.0, %v2223
  %v2225 = vpop.f32.mrf.mxu0
  %2226 = vmatprep.mubr.f32.mxu0 %v273
  %2227 = vmatmul.mubr.f32.gmra.mxu0 %v272
  %v2228 = vpop.f32.mrf.mxu0
  %v2229 = vadd.f32 0.0, %v2228
  %v2230 = vpop.f32.mrf.mxu0
  %2231 = vdwg.mxu0
  %v2232 = vrcp.pop %v2224
  %v2233 = vmul.f32 1.0, %v2232
  %v2234 = vrcp.pop %v2229
  %v2235 = vmul.f32 1.0, %v2234
  %2236 = vmatprep.subr.mxu0 0.0
  %2237 = vmatpush1.msra.mxu0 0.0
  %2238 = vmatprep.subr.mxu0 0.0
  %2239 = vmatpush1.msra.mxu0 0.0
  %2240 = vmatprep.subr.mxu0 0.0
  %2241 = vmatpush1.msra.mxu0 0.0
  %2242 = vmatprep.subr.mxu0 0.0
  %2243 = vmatpush1.msra.mxu0 0.0
  %2244 = vmatprep.subr.mxu0 0.0
  %2245 = vmatpush1.msra.mxu0 0.0
  %2246 = vmatprep.subr.mxu0 0.0
  %2247 = vmatpush1.msra.mxu0 0.0
  %2248 = vmatprep.subr.mxu0 0.0
  %2249 = vmatpush1.msra.mxu0 0.0
  %2250 = vmatprep.subr.mxu0 0.0
  %2251 = vmatpush1.msra.mxu0 0.0
  %2252 = vmatprep.subr.mxu0 0.0
  %2253 = vmatpush1.msra.mxu0 0.0
  %2254 = vmatprep.subr.mxu0 0.0
  %2255 = vmatpush1.msra.mxu0 0.0
  %2256 = vmatprep.subr.mxu0 0.0
  %2257 = vmatpush1.msra.mxu0 0.0
  %2258 = vmatprep.subr.mxu0 0.0
  %2259 = vmatpush1.msra.mxu0 0.0
  %2260 = vmatprep.subr.mxu0 0.0
  %2261 = vmatpush1.msra.mxu0 0.0
  %2262 = vmatprep.subr.mxu0 0.0
  %2263 = vmatpush1.msra.mxu0 0.0
  %2264 = vmatprep.subr.mxu0 0.0
  %2265 = vmatpush1.msra.mxu0 %v2235
  %2266 = vmatprep.subr.mxu0 0.0
  %2267 = vmatpush1.msra.mxu0 %v2233
  %2268 = vmatprep.subr.mxu0 0.0
  %2269 = vmatpush2.msra.mxu0 0.0
  %2270 = vmatprep.subr.mxu0 0.0
  %2271 = vmatpush2.msra.mxu0 0.0
  %2272 = vmatprep.subr.mxu0 0.0
  %2273 = vmatpush2.msra.mxu0 0.0
  %2274 = vmatprep.subr.mxu0 0.0
  %2275 = vmatpush2.msra.mxu0 0.0
  %2276 = vmatprep.subr.mxu0 0.0
  %2277 = vmatpush2.msra.mxu0 0.0
  %2278 = vmatprep.subr.mxu0 0.0
  %2279 = vmatpush2.msra.mxu0 0.0
  %2280 = vmatprep.subr.mxu0 0.0
  %2281 = vmatpush2.msra.mxu0 0.0
  %2282 = vmatprep.subr.mxu0 0.0
  %2283 = vmatpush2.msra.mxu0 0.0
  %2284 = vmatprep.subr.mxu0 0.0
  %2285 = vmatpush2.msra.mxu0 0.0
  %2286 = vmatprep.subr.mxu0 0.0
  %2287 = vmatpush2.msra.mxu0 0.0
  %2288 = vmatprep.subr.mxu0 0.0
  %2289 = vmatpush2.msra.mxu0 0.0
  %2290 = vmatprep.subr.mxu0 0.0
  %2291 = vmatpush2.msra.mxu0 0.0
  %2292 = vmatprep.subr.mxu0 0.0
  %2293 = vmatpush2.msra.mxu0 0.0
  %2294 = vmatprep.subr.mxu0 0.0
  %2295 = vmatpush2.msra.mxu0 0.0
  %2296 = vmatprep.subr.mxu0 0.0
  %2297 = vmatpush2.msra.mxu0 0.0
  %2298 = vmatprep.subr.mxu0 0.0
  %2299 = vmatpush2.msra.mxu0 0.0
  %2300 = vmatprep.mubr.f32.mxu0 0.0
  %2301 = vmatmul.mubr.f32.gmra.mxu0 %v804
  %v2302 = vpop.f32.mrf.mxu0
  %v2303 = vadd.f32 0.0, %v2302
  %v2304 = vpop.f32.mrf.mxu0
  %2305 = vmatprep.mubr.f32.mxu0 0.0
  %2306 = vmatmul.mubr.f32.gmra.mxu0 %v807
  %v2307 = vpop.f32.mrf.mxu0
  %v2308 = vadd.f32 0.0, %v2307
  %v2309 = vpop.f32.mrf.mxu0
  %2310 = vmatprep.mubr.f32.mxu0 0.0
  %2311 = vmatmul.mubr.f32.gmra.mxu0 %v810
  %v2312 = vpop.f32.mrf.mxu0
  %v2313 = vadd.f32 0.0, %v2312
  %v2314 = vpop.f32.mrf.mxu0
  %2315 = vmatprep.mubr.f32.mxu0 0.0
  %2316 = vmatmul.mubr.f32.gmra.mxu0 %v813
  %v2317 = vpop.f32.mrf.mxu0
  %v2318 = vadd.f32 0.0, %v2317
  %v2319 = vpop.f32.mrf.mxu0
  %2320 = vmatprep.mubr.f32.mxu0 0.0
  %2321 = vmatmul.mubr.f32.gmra.mxu0 %v816
  %v2322 = vpop.f32.mrf.mxu0
  %v2323 = vadd.f32 0.0, %v2322
  %v2324 = vpop.f32.mrf.mxu0
  %2325 = vmatprep.mubr.f32.mxu0 0.0
  %2326 = vmatmul.mubr.f32.gmra.mxu0 %v819
  %v2327 = vpop.f32.mrf.mxu0
  %v2328 = vadd.f32 0.0, %v2327
  %v2329 = vpop.f32.mrf.mxu0
  %2330 = vmatprep.mubr.f32.mxu0 0.0
  %2331 = vmatmul.mubr.f32.gmra.mxu0 %v822
  %v2332 = vpop.f32.mrf.mxu0
  %v2333 = vadd.f32 0.0, %v2332
  %v2334 = vpop.f32.mrf.mxu0
  %2335 = vmatprep.mubr.f32.mxu0 0.0
  %2336 = vmatmul.mubr.f32.gmra.mxu0 %v825
  %v2337 = vpop.f32.mrf.mxu0
  %v2338 = vadd.f32 0.0, %v2337
  %v2339 = vpop.f32.mrf.mxu0
  %2340 = vmatprep.mubr.f32.mxu0 0.0
  %2341 = vmatmul.mubr.f32.gmra.mxu0 %v828
  %v2342 = vpop.f32.mrf.mxu0
  %v2343 = vadd.f32 0.0, %v2342
  %v2344 = vpop.f32.mrf.mxu0
  %2345 = vmatprep.mubr.f32.mxu0 0.0
  %2346 = vmatmul.mubr.f32.gmra.mxu0 %v831
  %v2347 = vpop.f32.mrf.mxu0
  %v2348 = vadd.f32 0.0, %v2347
  %v2349 = vpop.f32.mrf.mxu0
  %2350 = vmatprep.mubr.f32.mxu0 0.0
  %2351 = vmatmul.mubr.f32.gmra.mxu0 %v834
  %v2352 = vpop.f32.mrf.mxu0
  %v2353 = vadd.f32 0.0, %v2352
  %v2354 = vpop.f32.mrf.mxu0
  %2355 = vmatprep.mubr.f32.mxu0 0.0
  %2356 = vmatmul.mubr.f32.gmra.mxu0 %v837
  %v2357 = vpop.f32.mrf.mxu0
  %v2358 = vadd.f32 0.0, %v2357
  %v2359 = vpop.f32.mrf.mxu0
  %2360 = vmatprep.mubr.f32.mxu0 0.0
  %2361 = vmatmul.mubr.f32.gmra.mxu0 %v840
  %v2362 = vpop.f32.mrf.mxu0
  %v2363 = vadd.f32 0.0, %v2362
  %v2364 = vpop.f32.mrf.mxu0
  %2365 = vmatprep.mubr.f32.mxu0 0.0
  %2366 = vmatmul.mubr.f32.gmra.mxu0 %v843
  %v2367 = vpop.f32.mrf.mxu0
  %v2368 = vadd.f32 0.0, %v2367
  %v2369 = vpop.f32.mrf.mxu0
  %2370 = vmatprep.mubr.f32.mxu0 0.0
  %2371 = vmatmul.mubr.f32.gmra.mxu0 %v846
  %v2372 = vpop.f32.mrf.mxu0
  %v2373 = vadd.f32 0.0, %v2372
  %v2374 = vpop.f32.mrf.mxu0
  %2375 = vmatprep.mubr.f32.mxu0 0.0
  %2376 = vmatmul.mubr.f32.gmra.mxu0 %v849
  %v2377 = vpop.f32.mrf.mxu0
  %v2378 = vadd.f32 0.0, %v2377
  %v2379 = vpop.f32.mrf.mxu0
  %2380 = vmatprep.mubr.f32.mxu0 0.0
  %2381 = vmatmul.mubr.f32.gmra.mxu0 %v852
  %v2382 = vpop.f32.mrf.mxu0
  %v2383 = vadd.f32 0.0, %v2382
  %v2384 = vpop.f32.mrf.mxu0
  %2385 = vmatprep.mubr.f32.mxu0 0.0
  %2386 = vmatmul.mubr.f32.gmra.mxu0 %v855
  %v2387 = vpop.f32.mrf.mxu0
  %v2388 = vadd.f32 0.0, %v2387
  %v2389 = vpop.f32.mrf.mxu0
  %2390 = vmatprep.mubr.f32.mxu0 0.0
  %2391 = vmatmul.mubr.f32.gmra.mxu0 %v858
  %v2392 = vpop.f32.mrf.mxu0
  %v2393 = vadd.f32 0.0, %v2392
  %v2394 = vpop.f32.mrf.mxu0
  %2395 = vmatprep.mubr.f32.mxu0 0.0
  %2396 = vmatmul.mubr.f32.gmra.mxu0 %v861
  %v2397 = vpop.f32.mrf.mxu0
  %v2398 = vadd.f32 0.0, %v2397
  %v2399 = vpop.f32.mrf.mxu0
  %2400 = vmatprep.mubr.f32.mxu0 0.0
  %2401 = vmatmul.mubr.f32.gmra.mxu0 %v864
  %v2402 = vpop.f32.mrf.mxu0
  %v2403 = vadd.f32 0.0, %v2402
  %v2404 = vpop.f32.mrf.mxu0
  %2405 = vmatprep.mubr.f32.mxu0 0.0
  %2406 = vmatmul.mubr.f32.gmra.mxu0 %v867
  %v2407 = vpop.f32.mrf.mxu0
  %v2408 = vadd.f32 0.0, %v2407
  %v2409 = vpop.f32.mrf.mxu0
  %2410 = vmatprep.mubr.f32.mxu0 0.0
  %2411 = vmatmul.mubr.f32.gmra.mxu0 %v870
  %v2412 = vpop.f32.mrf.mxu0
  %v2413 = vadd.f32 0.0, %v2412
  %v2414 = vpop.f32.mrf.mxu0
  %2415 = vmatprep.mubr.f32.mxu0 0.0
  %2416 = vmatmul.mubr.f32.gmra.mxu0 %v873
  %v2417 = vpop.f32.mrf.mxu0
  %v2418 = vadd.f32 0.0, %v2417
  %v2419 = vpop.f32.mrf.mxu0
  %2420 = vmatprep.mubr.f32.mxu0 0.0
  %2421 = vmatmul.mubr.f32.gmra.mxu0 %v876
  %v2422 = vpop.f32.mrf.mxu0
  %v2423 = vadd.f32 0.0, %v2422
  %v2424 = vpop.f32.mrf.mxu0
  %2425 = vmatprep.mubr.f32.mxu0 0.0
  %2426 = vmatmul.mubr.f32.gmra.mxu0 %v879
  %v2427 = vpop.f32.mrf.mxu0
  %v2428 = vadd.f32 0.0, %v2427
  %v2429 = vpop.f32.mrf.mxu0
  %2430 = vmatprep.mubr.f32.mxu0 0.0
  %2431 = vmatmul.mubr.f32.gmra.mxu0 %v882
  %v2432 = vpop.f32.mrf.mxu0
  %v2433 = vadd.f32 0.0, %v2432
  %v2434 = vpop.f32.mrf.mxu0
  %2435 = vmatprep.mubr.f32.mxu0 0.0
  %2436 = vmatmul.mubr.f32.gmra.mxu0 %v885
  %v2437 = vpop.f32.mrf.mxu0
  %v2438 = vadd.f32 0.0, %v2437
  %v2439 = vpop.f32.mrf.mxu0
  %2440 = vmatprep.mubr.f32.mxu0 0.0
  %2441 = vmatmul.mubr.f32.gmra.mxu0 %v888
  %v2442 = vpop.f32.mrf.mxu0
  %v2443 = vadd.f32 0.0, %v2442
  %v2444 = vpop.f32.mrf.mxu0
  %2445 = vmatprep.mubr.f32.mxu0 0.0
  %2446 = vmatmul.mubr.f32.gmra.mxu0 %v891
  %v2447 = vpop.f32.mrf.mxu0
  %v2448 = vadd.f32 0.0, %v2447
  %v2449 = vpop.f32.mrf.mxu0
  %2450 = vmatprep.mubr.f32.mxu0 0.0
  %2451 = vmatmul.mubr.f32.gmra.mxu0 %v894
  %v2452 = vpop.f32.mrf.mxu0
  %v2453 = vadd.f32 0.0, %v2452
  %v2454 = vpop.f32.mrf.mxu0
  %2455 = vmatprep.mubr.f32.mxu0 0.0
  %2456 = vmatmul.mubr.f32.gmra.mxu0 %v897
  %v2457 = vpop.f32.mrf.mxu0
  %v2458 = vadd.f32 0.0, %v2457
  %v2459 = vpop.f32.mrf.mxu0
  %2460 = vdwg.mxu0
  %v2461 = vmul.f32 %v2125, %v2303
  %v2462 = vmul.f32 %v2126, %v2308
  %v2463 = vmul.f32 %v2127, %v2313
  %v2464 = vmul.f32 %v2128, %v2318
  %v2465 = vmul.f32 %v2129, %v2323
  %v2466 = vmul.f32 %v2130, %v2328
  %v2467 = vmul.f32 %v2131, %v2333
  %v2468 = vmul.f32 %v2132, %v2338
  %v2469 = vmul.f32 %v2133, %v2343
  %v2470 = vmul.f32 %v2134, %v2348
  %v2471 = vmul.f32 %v2135, %v2353
  %v2472 = vmul.f32 %v2136, %v2358
  %v2473 = vmul.f32 %v2137, %v2363
  %v2474 = vmul.f32 %v2138, %v2368
  %v2475 = vmul.f32 %v2139, %v2373
  %v2476 = vmul.f32 %v2140, %v2378
  %v2477 = vmul.f32 %v2141, %v2383
  %v2478 = vmul.f32 %v2142, %v2388
  %v2479 = vmul.f32 %v2143, %v2393
  %v2480 = vmul.f32 %v2144, %v2398
  %v2481 = vmul.f32 %v2145, %v2403
  %v2482 = vmul.f32 %v2146, %v2408
  %v2483 = vmul.f32 %v2147, %v2413
  %v2484 = vmul.f32 %v2148, %v2418
  %v2485 = vmul.f32 %v2149, %v2423
  %v2486 = vmul.f32 %v2150, %v2428
  %v2487 = vmul.f32 %v2151, %v2433
  %v2488 = vmul.f32 %v2152, %v2438
  %v2489 = vmul.f32 %v2153, %v2443
  %v2490 = vmul.f32 %v2154, %v2448
  %v2491 = vmul.f32 %v2155, %v2453
  %v2492 = vmul.f32 %v2156, %v2458
  %v2494 = vsel %vm1799, %v2461, 0
  %v2497 = vsel %vm1799, %v2462, 0
  %v2500 = vsel %vm1799, %v2463, 0
  %v2503 = vsel %vm1799, %v2464, 0
  %v2506 = vsel %vm1799, %v2465, 0
  %v2509 = vsel %vm1799, %v2466, 0
  %v2512 = vsel %vm1799, %v2467, 0
  %v2515 = vsel %vm1799, %v2468, 0
  %v2518 = vsel %vm1799, %v2469, 0
  %v2521 = vsel %vm1799, %v2470, 0
  %v2524 = vsel %vm1799, %v2471, 0
  %v2527 = vsel %vm1799, %v2472, 0
  %v2530 = vsel %vm1799, %v2473, 0
  %v2533 = vsel %vm1799, %v2474, 0
  %v2536 = vsel %vm1799, %v2475, 0
  %v2539 = vsel %vm1799, %v2476, 0
  %v2542 = vsel %vm1799, %v2477, 0
  %v2545 = vsel %vm1799, %v2478, 0
  %v2548 = vsel %vm1799, %v2479, 0
  %v2551 = vsel %vm1799, %v2480, 0
  %v2554 = vsel %vm1799, %v2481, 0
  %v2557 = vsel %vm1799, %v2482, 0
  %v2560 = vsel %vm1799, %v2483, 0
  %v2563 = vsel %vm1799, %v2484, 0
  %v2566 = vsel %vm1799, %v2485, 0
  %v2569 = vsel %vm1799, %v2486, 0
  %v2572 = vsel %vm1799, %v2487, 0
  %v2575 = vsel %vm1799, %v2488, 0
  %v2578 = vsel %vm1799, %v2489, 0
  %v2581 = vsel %vm1799, %v2490, 0
  %v2584 = vsel %vm1799, %v2491, 0
  %v2587 = vsel %vm1799, %v2492, 0
  %v2590 = vsel %vm318, %v274, 0
  %2592 = vmatprep.subr.mxu0 0.0
  %2593 = vmatpush1.msra.mxu0 0.0
  %2594 = vmatprep.subr.mxu0 0.0
  %2595 = vmatpush1.msra.mxu0 0.0
  %2596 = vmatprep.subr.mxu0 0.0
  %2597 = vmatpush1.msra.mxu0 0.0
  %2598 = vmatprep.subr.mxu0 0.0
  %2599 = vmatpush1.msra.mxu0 0.0
  %2600 = vmatprep.subr.mxu0 0.0
  %2601 = vmatpush1.msra.mxu0 0.0
  %2602 = vmatprep.subr.mxu0 0.0
  %2603 = vmatpush1.msra.mxu0 0.0
  %2604 = vmatprep.subr.mxu0 0.0
  %2605 = vmatpush1.msra.mxu0 0.0
  %2606 = vmatprep.subr.mxu0 0.0
  %2607 = vmatpush1.msra.mxu0 0.0
  %2608 = vmatprep.subr.mxu0 0.0
  %2609 = vmatpush1.msra.mxu0 0.0
  %2610 = vmatprep.subr.mxu0 0.0
  %2611 = vmatpush1.msra.mxu0 0.0
  %2612 = vmatprep.subr.mxu0 0.0
  %2613 = vmatpush1.msra.mxu0 0.0
  %2614 = vmatprep.subr.mxu0 0.0
  %2615 = vmatpush1.msra.mxu0 0.0
  %2616 = vmatprep.subr.mxu0 0.0
  %2617 = vmatpush1.msra.mxu0 0.0
  %2618 = vmatprep.subr.mxu0 0.0
  %2619 = vmatpush1.msra.mxu0 0.0
  %2620 = vmatprep.subr.mxu0 0.0
  %2621 = vmatpush1.msra.mxu0 0.0
  %2622 = vmatprep.subr.mxu0 0.0
  %2623 = vmatpush1.msra.mxu0 %v2590
  %2624 = vmatprep.subr.mxu0 0.0
  %2625 = vmatpush2.msra.mxu0 0.0
  %2626 = vmatprep.subr.mxu0 0.0
  %2627 = vmatpush2.msra.mxu0 0.0
  %2628 = vmatprep.subr.mxu0 0.0
  %2629 = vmatpush2.msra.mxu0 0.0
  %2630 = vmatprep.subr.mxu0 0.0
  %2631 = vmatpush2.msra.mxu0 0.0
  %2632 = vmatprep.subr.mxu0 0.0
  %2633 = vmatpush2.msra.mxu0 0.0
  %2634 = vmatprep.subr.mxu0 0.0
  %2635 = vmatpush2.msra.mxu0 0.0
  %2636 = vmatprep.subr.mxu0 0.0
  %2637 = vmatpush2.msra.mxu0 0.0
  %2638 = vmatprep.subr.mxu0 0.0
  %2639 = vmatpush2.msra.mxu0 0.0
  %2640 = vmatprep.subr.mxu0 0.0
  %2641 = vmatpush2.msra.mxu0 0.0
  %2642 = vmatprep.subr.mxu0 0.0
  %2643 = vmatpush2.msra.mxu0 0.0
  %2644 = vmatprep.subr.mxu0 0.0
  %2645 = vmatpush2.msra.mxu0 0.0
  %2646 = vmatprep.subr.mxu0 0.0
  %2647 = vmatpush2.msra.mxu0 0.0
  %2648 = vmatprep.subr.mxu0 0.0
  %2649 = vmatpush2.msra.mxu0 0.0
  %2650 = vmatprep.subr.mxu0 0.0
  %2651 = vmatpush2.msra.mxu0 0.0
  %2652 = vmatprep.subr.mxu0 0.0
  %2653 = vmatpush2.msra.mxu0 0.0
  %2654 = vmatprep.subr.mxu0 0.0
  %2655 = vmatpush2.msra.mxu0 0.0
  %2656 = vmatprep.mubr.f32.mxu0 0.0
  %2657 = vmatmul.mubr.f32.gmra.mxu0 %v2494
  %v2658 = vpop.f32.mrf.mxu0
  %v2659 = vadd.f32 0.0, %v2658
  %v2660 = vpop.f32.mrf.mxu0
  %2661 = vmatprep.mubr.f32.mxu0 0.0
  %2662 = vmatmul.mubr.f32.gmra.mxu0 %v2497
  %v2663 = vpop.f32.mrf.mxu0
  %v2664 = vadd.f32 0.0, %v2663
  %v2665 = vpop.f32.mrf.mxu0
  %2666 = vmatprep.mubr.f32.mxu0 0.0
  %2667 = vmatmul.mubr.f32.gmra.mxu0 %v2500
  %v2668 = vpop.f32.mrf.mxu0
  %v2669 = vadd.f32 0.0, %v2668
  %v2670 = vpop.f32.mrf.mxu0
  %2671 = vmatprep.mubr.f32.mxu0 0.0
  %2672 = vmatmul.mubr.f32.gmra.mxu0 %v2503
  %v2673 = vpop.f32.mrf.mxu0
  %v2674 = vadd.f32 0.0, %v2673
  %v2675 = vpop.f32.mrf.mxu0
  %2676 = vmatprep.mubr.f32.mxu0 0.0
  %2677 = vmatmul.mubr.f32.gmra.mxu0 %v2506
  %v2678 = vpop.f32.mrf.mxu0
  %v2679 = vadd.f32 0.0, %v2678
  %v2680 = vpop.f32.mrf.mxu0
  %2681 = vmatprep.mubr.f32.mxu0 0.0
  %2682 = vmatmul.mubr.f32.gmra.mxu0 %v2509
  %v2683 = vpop.f32.mrf.mxu0
  %v2684 = vadd.f32 0.0, %v2683
  %v2685 = vpop.f32.mrf.mxu0
  %2686 = vmatprep.mubr.f32.mxu0 0.0
  %2687 = vmatmul.mubr.f32.gmra.mxu0 %v2512
  %v2688 = vpop.f32.mrf.mxu0
  %v2689 = vadd.f32 0.0, %v2688
  %v2690 = vpop.f32.mrf.mxu0
  %2691 = vmatprep.mubr.f32.mxu0 0.0
  %2692 = vmatmul.mubr.f32.gmra.mxu0 %v2515
  %v2693 = vpop.f32.mrf.mxu0
  %v2694 = vadd.f32 0.0, %v2693
  %v2695 = vpop.f32.mrf.mxu0
  %2696 = vmatprep.mubr.f32.mxu0 0.0
  %2697 = vmatmul.mubr.f32.gmra.mxu0 %v2518
  %v2698 = vpop.f32.mrf.mxu0
  %v2699 = vadd.f32 0.0, %v2698
  %v2700 = vpop.f32.mrf.mxu0
  %2701 = vmatprep.mubr.f32.mxu0 0.0
  %2702 = vmatmul.mubr.f32.gmra.mxu0 %v2521
  %v2703 = vpop.f32.mrf.mxu0
  %v2704 = vadd.f32 0.0, %v2703
  %v2705 = vpop.f32.mrf.mxu0
  %2706 = vmatprep.mubr.f32.mxu0 0.0
  %2707 = vmatmul.mubr.f32.gmra.mxu0 %v2524
  %v2708 = vpop.f32.mrf.mxu0
  %v2709 = vadd.f32 0.0, %v2708
  %v2710 = vpop.f32.mrf.mxu0
  %2711 = vmatprep.mubr.f32.mxu0 0.0
  %2712 = vmatmul.mubr.f32.gmra.mxu0 %v2527
  %v2713 = vpop.f32.mrf.mxu0
  %v2714 = vadd.f32 0.0, %v2713
  %v2715 = vpop.f32.mrf.mxu0
  %2716 = vmatprep.mubr.f32.mxu0 0.0
  %2717 = vmatmul.mubr.f32.gmra.mxu0 %v2530
  %v2718 = vpop.f32.mrf.mxu0
  %v2719 = vadd.f32 0.0, %v2718
  %v2720 = vpop.f32.mrf.mxu0
  %2721 = vmatprep.mubr.f32.mxu0 0.0
  %2722 = vmatmul.mubr.f32.gmra.mxu0 %v2533
  %v2723 = vpop.f32.mrf.mxu0
  %v2724 = vadd.f32 0.0, %v2723
  %v2725 = vpop.f32.mrf.mxu0
  %2726 = vmatprep.mubr.f32.mxu0 0.0
  %2727 = vmatmul.mubr.f32.gmra.mxu0 %v2536
  %v2728 = vpop.f32.mrf.mxu0
  %v2729 = vadd.f32 0.0, %v2728
  %v2730 = vpop.f32.mrf.mxu0
  %2731 = vmatprep.mubr.f32.mxu0 0.0
  %2732 = vmatmul.mubr.f32.gmra.mxu0 %v2539
  %v2733 = vpop.f32.mrf.mxu0
  %v2734 = vadd.f32 0.0, %v2733
  %v2735 = vpop.f32.mrf.mxu0
  %2736 = vmatprep.mubr.f32.mxu0 0.0
  %2737 = vmatmul.mubr.f32.gmra.mxu0 %v2542
  %v2738 = vpop.f32.mrf.mxu0
  %v2739 = vadd.f32 0.0, %v2738
  %v2740 = vpop.f32.mrf.mxu0
  %2741 = vmatprep.mubr.f32.mxu0 0.0
  %2742 = vmatmul.mubr.f32.gmra.mxu0 %v2545
  %v2743 = vpop.f32.mrf.mxu0
  %v2744 = vadd.f32 0.0, %v2743
  %v2745 = vpop.f32.mrf.mxu0
  %2746 = vmatprep.mubr.f32.mxu0 0.0
  %2747 = vmatmul.mubr.f32.gmra.mxu0 %v2548
  %v2748 = vpop.f32.mrf.mxu0
  %v2749 = vadd.f32 0.0, %v2748
  %v2750 = vpop.f32.mrf.mxu0
  %2751 = vmatprep.mubr.f32.mxu0 0.0
  %2752 = vmatmul.mubr.f32.gmra.mxu0 %v2551
  %v2753 = vpop.f32.mrf.mxu0
  %v2754 = vadd.f32 0.0, %v2753
  %v2755 = vpop.f32.mrf.mxu0
  %2756 = vmatprep.mubr.f32.mxu0 0.0
  %2757 = vmatmul.mubr.f32.gmra.mxu0 %v2554
  %v2758 = vpop.f32.mrf.mxu0
  %v2759 = vadd.f32 0.0, %v2758
  %v2760 = vpop.f32.mrf.mxu0
  %2761 = vmatprep.mubr.f32.mxu0 0.0
  %2762 = vmatmul.mubr.f32.gmra.mxu0 %v2557
  %v2763 = vpop.f32.mrf.mxu0
  %v2764 = vadd.f32 0.0, %v2763
  %v2765 = vpop.f32.mrf.mxu0
  %2766 = vmatprep.mubr.f32.mxu0 0.0
  %2767 = vmatmul.mubr.f32.gmra.mxu0 %v2560
  %v2768 = vpop.f32.mrf.mxu0
  %v2769 = vadd.f32 0.0, %v2768
  %v2770 = vpop.f32.mrf.mxu0
  %2771 = vmatprep.mubr.f32.mxu0 0.0
  %2772 = vmatmul.mubr.f32.gmra.mxu0 %v2563
  %v2773 = vpop.f32.mrf.mxu0
  %v2774 = vadd.f32 0.0, %v2773
  %v2775 = vpop.f32.mrf.mxu0
  %2776 = vmatprep.mubr.f32.mxu0 0.0
  %2777 = vmatmul.mubr.f32.gmra.mxu0 %v2566
  %v2778 = vpop.f32.mrf.mxu0
  %v2779 = vadd.f32 0.0, %v2778
  %v2780 = vpop.f32.mrf.mxu0
  %2781 = vmatprep.mubr.f32.mxu0 0.0
  %2782 = vmatmul.mubr.f32.gmra.mxu0 %v2569
  %v2783 = vpop.f32.mrf.mxu0
  %v2784 = vadd.f32 0.0, %v2783
  %v2785 = vpop.f32.mrf.mxu0
  %2786 = vmatprep.mubr.f32.mxu0 0.0
  %2787 = vmatmul.mubr.f32.gmra.mxu0 %v2572
  %v2788 = vpop.f32.mrf.mxu0
  %v2789 = vadd.f32 0.0, %v2788
  %v2790 = vpop.f32.mrf.mxu0
  %2791 = vmatprep.mubr.f32.mxu0 0.0
  %2792 = vmatmul.mubr.f32.gmra.mxu0 %v2575
  %v2793 = vpop.f32.mrf.mxu0
  %v2794 = vadd.f32 0.0, %v2793
  %v2795 = vpop.f32.mrf.mxu0
  %2796 = vmatprep.mubr.f32.mxu0 0.0
  %2797 = vmatmul.mubr.f32.gmra.mxu0 %v2578
  %v2798 = vpop.f32.mrf.mxu0
  %v2799 = vadd.f32 0.0, %v2798
  %v2800 = vpop.f32.mrf.mxu0
  %2801 = vmatprep.mubr.f32.mxu0 0.0
  %2802 = vmatmul.mubr.f32.gmra.mxu0 %v2581
  %v2803 = vpop.f32.mrf.mxu0
  %v2804 = vadd.f32 0.0, %v2803
  %v2805 = vpop.f32.mrf.mxu0
  %2806 = vmatprep.mubr.f32.mxu0 0.0
  %2807 = vmatmul.mubr.f32.gmra.mxu0 %v2584
  %v2808 = vpop.f32.mrf.mxu0
  %v2809 = vadd.f32 0.0, %v2808
  %v2810 = vpop.f32.mrf.mxu0
  %2811 = vmatprep.mubr.f32.mxu0 0.0
  %2812 = vmatmul.mubr.f32.gmra.mxu0 %v2587
  %v2813 = vpop.f32.mrf.mxu0
  %v2814 = vadd.f32 0.0, %v2813
  %v2815 = vpop.f32.mrf.mxu0
  %2816 = vdwg.mxu0
  %v2817 = vmul.f32 %v2659, %v645
  %v2818 = vmul.f32 %v2664, %v650
  %v2819 = vmul.f32 %v2669, %v655
  %v2820 = vmul.f32 %v2674, %v660
  %v2821 = vmul.f32 %v2679, %v665
  %v2822 = vmul.f32 %v2684, %v670
  %v2823 = vmul.f32 %v2689, %v675
  %v2824 = vmul.f32 %v2694, %v680
  %v2825 = vmul.f32 %v2699, %v685
  %v2826 = vmul.f32 %v2704, %v690
  %v2827 = vmul.f32 %v2709, %v695
  %v2828 = vmul.f32 %v2714, %v700
  %v2829 = vmul.f32 %v2719, %v705
  %v2830 = vmul.f32 %v2724, %v710
  %v2831 = vmul.f32 %v2729, %v715
  %v2832 = vmul.f32 %v2734, %v720
  %v2833 = vmul.f32 %v2739, %v725
  %v2834 = vmul.f32 %v2744, %v730
  %v2835 = vmul.f32 %v2749, %v735
  %v2836 = vmul.f32 %v2754, %v740
  %v2837 = vmul.f32 %v2759, %v745
  %v2838 = vmul.f32 %v2764, %v750
  %v2839 = vmul.f32 %v2769, %v755
  %v2840 = vmul.f32 %v2774, %v760
  %v2841 = vmul.f32 %v2779, %v765
  %v2842 = vmul.f32 %v2784, %v770
  %v2843 = vmul.f32 %v2789, %v775
  %v2844 = vmul.f32 %v2794, %v780
  %v2845 = vmul.f32 %v2799, %v785
  %v2846 = vmul.f32 %v2804, %v790
  %v2847 = vmul.f32 %v2809, %v795
  %v2848 = vmul.f32 %v2814, %v800
  %v2850 = vlaneseq
  %v2851 = vshrl.u32 %v2850, 7
  %v2852 = vsub.s32 0, %v2851
  %v2853 = vrot.slane %v301, %v2852
  %2855 = vmatprep.subr.mxu0 0.0
  %2856 = vmatpush1.msra.mxu0 %v2832
  %2857 = vmatprep.subr.mxu0 0.0
  %2858 = vmatpush1.msra.mxu0 %v2831
  %2859 = vmatprep.subr.mxu0 0.0
  %2860 = vmatpush1.msra.mxu0 %v2830
  %2861 = vmatprep.subr.mxu0 0.0
  %2862 = vmatpush1.msra.mxu0 %v2829
  %2863 = vmatprep.subr.mxu0 0.0
  %2864 = vmatpush1.msra.mxu0 %v2828
  %2865 = vmatprep.subr.mxu0 0.0
  %2866 = vmatpush1.msra.mxu0 %v2827
  %2867 = vmatprep.subr.mxu0 0.0
  %2868 = vmatpush1.msra.mxu0 %v2826
  %2869 = vmatprep.subr.mxu0 0.0
  %2870 = vmatpush1.msra.mxu0 %v2825
  %2871 = vmatprep.subr.mxu0 0.0
  %2872 = vmatpush1.msra.mxu0 %v2824
  %2873 = vmatprep.subr.mxu0 0.0
  %2874 = vmatpush1.msra.mxu0 %v2823
  %2875 = vmatprep.subr.mxu0 0.0
  %2876 = vmatpush1.msra.mxu0 %v2822
  %2877 = vmatprep.subr.mxu0 0.0
  %2878 = vmatpush1.msra.mxu0 %v2821
  %2879 = vmatprep.subr.mxu0 0.0
  %2880 = vmatpush1.msra.mxu0 %v2820
  %2881 = vmatprep.subr.mxu0 0.0
  %2882 = vmatpush1.msra.mxu0 %v2819
  %2883 = vmatprep.subr.mxu0 0.0
  %2884 = vmatpush1.msra.mxu0 %v2818
  %2885 = vmatprep.subr.mxu0 0.0
  %2886 = vmatpush1.msra.mxu0 %v2817
  %2887 = vmatprep.subr.mxu0 0.0
  %2888 = vmatpush2.msra.mxu0 %v2848
  %2889 = vmatprep.subr.mxu0 0.0
  %2890 = vmatpush2.msra.mxu0 %v2847
  %2891 = vmatprep.subr.mxu0 0.0
  %2892 = vmatpush2.msra.mxu0 %v2846
  %2893 = vmatprep.subr.mxu0 0.0
  %2894 = vmatpush2.msra.mxu0 %v2845
  %2895 = vmatprep.subr.mxu0 0.0
  %2896 = vmatpush2.msra.mxu0 %v2844
  %2897 = vmatprep.subr.mxu0 0.0
  %2898 = vmatpush2.msra.mxu0 %v2843
  %2899 = vmatprep.subr.mxu0 0.0
  %2900 = vmatpush2.msra.mxu0 %v2842
  %2901 = vmatprep.subr.mxu0 0.0
  %2902 = vmatpush2.msra.mxu0 %v2841
  %2903 = vmatprep.subr.mxu0 0.0
  %2904 = vmatpush2.msra.mxu0 %v2840
  %2905 = vmatprep.subr.mxu0 0.0
  %2906 = vmatpush2.msra.mxu0 %v2839
  %2907 = vmatprep.subr.mxu0 0.0
  %2908 = vmatpush2.msra.mxu0 %v2838
  %2909 = vmatprep.subr.mxu0 0.0
  %2910 = vmatpush2.msra.mxu0 %v2837
  %2911 = vmatprep.subr.mxu0 0.0
  %2912 = vmatpush2.msra.mxu0 %v2836
  %2913 = vmatprep.subr.mxu0 0.0
  %2914 = vmatpush2.msra.mxu0 %v2835
  %2915 = vmatprep.subr.mxu0 0.0
  %2916 = vmatpush2.msra.mxu0 %v2834
  %2917 = vmatprep.subr.mxu0 0.0
  %2918 = vmatpush2.msra.mxu0 %v2833
  %2919 = vmatprep.mubr.f32.mxu0 %v271
  %2920 = vmatmul.mubr.f32.gmra.mxu0 %v270
  %v2921 = vpop.f32.mrf.mxu0
  %v2922 = vadd.f32 %v2853, %v2921
  %v2923 = vpop.f32.mrf.mxu0
  %2924 = vmatprep.mubr.f32.mxu0 %v273
  %2925 = vmatmul.mubr.f32.gmra.mxu0 %v272
  %v2926 = vpop.f32.mrf.mxu0
  %v2927 = vadd.f32 %v2853, %v2926
  %v2928 = vpop.f32.mrf.mxu0
  %2929 = vdwg.mxu0
  %v2930 = vsel %vm1477, %v2922, 0.0
  %v2931 = vsel %vm1477, %v2927, 0.0
  %v2932 = vadd.f32 %v2930, %v2931
  %v2933 = vrot.slane %v2932, 4
  %v2934 = vadd.f32 %v2932, %v2933
  %v2935 = vrot.slane %v2934, 2
  %v2936 = vadd.f32 %v2934, %v2935
  %v2937 = vrot.slane %v2936, 1
  %v2938 = vadd.f32 %v2936, %v2937
  %v2939 = vrcp.pop 16.0
  %v2940 = vmul.f32 %v2938, %v2939
  %v2941 = vmul.f32 %v2940, %v304
  %v2942 = vlaneseq
  %v2943 = vshrl.u32 %v2942, 7
  %v2944 = vsub.s32 0, %v2943
  %v2945 = vrot.slane %v2941, %v2944
  %v2946 = vsub.f32 %v2922, %v2945
  %v2947 = vsub.f32 %v2927, %v2945
  %v2948 = vmul.f32 %v2946, %v2946
  %v2949 = vmul.f32 %v2947, %v2947
  %v2950 = vsel %vm1477, %v2948, 0.0
  %v2951 = vsel %vm1477, %v2949, 0.0
  %v2952 = vadd.f32 %v2950, %v2951
  %v2953 = vrot.slane %v2952, 4
  %v2954 = vadd.f32 %v2952, %v2953
  %v2955 = vrot.slane %v2954, 2
  %v2956 = vadd.f32 %v2954, %v2955
  %v2957 = vrot.slane %v2956, 1
  %v2958 = vadd.f32 %v2956, %v2957
  %v2959 = vmul.f32 %v2958, %v2939
  %v2961 = vlaneseq
  %v2962 = vshrl.u32 %v2961, 7
  %v2963 = vsub.s32 0, %v2962
  %v2964 = vrot.slane %v302, %v2963
  %v2966 = vmul.f32 %v2964, %v2946
  %v2967 = vmul.f32 %v2964, %v2947
  %v2968 = vadd.f32 %v2959, 1e-05
  %v2969 = vrsqrt.pop %v2968
  %v2970 = vmul.f32 %v2968, %v2969
  %vm2971 = vcmp.eq.f32.partialorder %v2968, inf
  %v2972 = vsel %vm2971, %v2968, %v2970
  %vm2973 = vcmp.eq.f32.partialorder %v2968, 0.0
  %v2974 = vand.u32 %v2968, 2147483648
  %v2975 = vsel %vm2973, %v2974, %v2972
  %v2976 = vrcp.pop %v2975
  %v2977 = vmul.f32 %v2966, %v2976
  %v2978 = vmul.f32 %v2967, %v2976
  %v2980 = vlaneseq
  %v2981 = vshrl.u32 %v2980, 7
  %v2982 = vsub.s32 0, %v2981
  %v2983 = vrot.slane %v303, %v2982
  %v2985 = vadd.f32 %v2977, %v2983
  %v2986 = vadd.f32 %v2978, %v2983
  %v2987 = vmax.f32 %v2985, 0.0
  %v2988 = vmax.f32 %v2986, 0.0
  %v2989 = vld [vmem:[%s35] sm:$0xff]
  %v2990 = vld [vmem:[%s35 + $0x8] sm:$0xff]
  %v2991 = vld [vmem:[%s35 + $0x10] sm:$0xff]
  %v2992 = vld [vmem:[%s35 + $0x18] sm:$0xff]
  %v2993 = vld [vmem:[%s37] sm:$0x1]
  %v2994 = vld [vmem:[%s39] sm:$0xff]
  %v2995 = vld [vmem:[%s39 + $0x8] sm:$0xff]
  %v2996 = vld [vmem:[%s39 + $0x10] sm:$0xff]
  %v2997 = vld [vmem:[%s39 + $0x18] sm:$0xff]
  %v2998 = vld [vmem:[%s41] sm:$0x1]
  %v2999 = vld [vmem:[%s43] sm:$0xff]
  %v3000 = vld [vmem:[%s43 + $0x8] sm:$0xff]
  %v3001 = vld [vmem:[%s43 + $0x10] sm:$0xff]
  %v3002 = vld [vmem:[%s43 + $0x18] sm:$0xff]
  %v3003 = vld [vmem:[%s43 + $0x20] sm:$0xff]
  %v3004 = vld [vmem:[%s43 + $0x28] sm:$0xff]
  %v3005 = vld [vmem:[%s43 + $0x30] sm:$0xff]
  %v3006 = vld [vmem:[%s43 + $0x38] sm:$0xff]
  %v3007 = vld [vmem:[%s43 + $0x40] sm:$0xff]
  %v3008 = vld [vmem:[%s43 + $0x48] sm:$0xff]
  %v3009 = vld [vmem:[%s43 + $0x50] sm:$0xff]
  %v3010 = vld [vmem:[%s43 + $0x58] sm:$0xff]
  %v3011 = vld [vmem:[%s43 + $0x60] sm:$0xff]
  %v3012 = vld [vmem:[%s43 + $0x68] sm:$0xff]
  %v3013 = vld [vmem:[%s43 + $0x70] sm:$0xff]
  %v3014 = vld [vmem:[%s43 + $0x78] sm:$0xff]
  %v3015 = vld [vmem:[%s45] sm:$0xff]
  %v3016 = vld [vmem:[%s45 + $0x8] sm:$0xff]
  %v3017 = vld [vmem:[%s45 + $0x10] sm:$0xff]
  %v3018 = vld [vmem:[%s45 + $0x18] sm:$0xff]
  %v3019 = vld [vmem:[%s47] sm:$0x1]
  %v3020 = vld [vmem:[%s49] sm:$0x1]
  %v3021 = vld [vmem:[%s51] sm:$0x1]
  %v3022 = vld [vmem:[%s53] sm:$0x1]
  %v3024 = vlaneseq
  %v3025 = vshrl.u32 %v3024, 7
  %v3026 = vsub.s32 0, %v3025
  %v3027 = vrot.slane %v2993, %v3026
  %v3030 = vsel %vm1477, %v2987, 0
  %v3033 = vsel %vm1477, %v2988, 0
  %3035 = vmatprep.subr.mxu0 0.0
  %3036 = vmatpush1.msra.mxu0 0.0
  %3037 = vmatprep.subr.mxu0 0.0
  %3038 = vmatpush1.msra.mxu0 0.0
  %3039 = vmatprep.subr.mxu0 0.0
  %3040 = vmatpush1.msra.mxu0 0.0
  %3041 = vmatprep.subr.mxu0 0.0
  %3042 = vmatpush1.msra.mxu0 0.0
  %3043 = vmatprep.subr.mxu0 0.0
  %3044 = vmatpush1.msra.mxu0 0.0
  %3045 = vmatprep.subr.mxu0 0.0
  %3046 = vmatpush1.msra.mxu0 0.0
  %3047 = vmatprep.subr.mxu0 0.0
  %3048 = vmatpush1.msra.mxu0 0.0
  %3049 = vmatprep.subr.mxu0 0.0
  %3050 = vmatpush1.msra.mxu0 0.0
  %3051 = vmatprep.subr.mxu0 0.0
  %3052 = vmatpush1.msra.mxu0 0.0
  %3053 = vmatprep.subr.mxu0 0.0
  %3054 = vmatpush1.msra.mxu0 0.0
  %3055 = vmatprep.subr.mxu0 0.0
  %3056 = vmatpush1.msra.mxu0 0.0
  %3057 = vmatprep.subr.mxu0 0.0
  %3058 = vmatpush1.msra.mxu0 0.0
  %3059 = vmatprep.subr.mxu0 0.0
  %3060 = vmatpush1.msra.mxu0 %v2992
  %3061 = vmatprep.subr.mxu0 0.0
  %3062 = vmatpush1.msra.mxu0 %v2991
  %3063 = vmatprep.subr.mxu0 0.0
  %3064 = vmatpush1.msra.mxu0 %v2990
  %3065 = vmatprep.subr.mxu0 0.0
  %3066 = vmatpush1.msra.mxu0 %v2989
  %3067 = vmatprep.subr.mxu0 0.0
  %3068 = vmatpush2.msra.mxu0 0.0
  %3069 = vmatprep.subr.mxu0 0.0
  %3070 = vmatpush2.msra.mxu0 0.0
  %3071 = vmatprep.subr.mxu0 0.0
  %3072 = vmatpush2.msra.mxu0 0.0
  %3073 = vmatprep.subr.mxu0 0.0
  %3074 = vmatpush2.msra.mxu0 0.0
  %3075 = vmatprep.subr.mxu0 0.0
  %3076 = vmatpush2.msra.mxu0 0.0
  %3077 = vmatprep.subr.mxu0 0.0
  %3078 = vmatpush2.msra.mxu0 0.0
  %3079 = vmatprep.subr.mxu0 0.0
  %3080 = vmatpush2.msra.mxu0 0.0
  %3081 = vmatprep.subr.mxu0 0.0
  %3082 = vmatpush2.msra.mxu0 0.0
  %3083 = vmatprep.subr.mxu0 0.0
  %3084 = vmatpush2.msra.mxu0 0.0
  %3085 = vmatprep.subr.mxu0 0.0
  %3086 = vmatpush2.msra.mxu0 0.0
  %3087 = vmatprep.subr.mxu0 0.0
  %3088 = vmatpush2.msra.mxu0 0.0
  %3089 = vmatprep.subr.mxu0 0.0
  %3090 = vmatpush2.msra.mxu0 0.0
  %3091 = vmatprep.subr.mxu0 0.0
  %3092 = vmatpush2.msra.mxu0 0.0
  %3093 = vmatprep.subr.mxu0 0.0
  %3094 = vmatpush2.msra.mxu0 0.0
  %3095 = vmatprep.subr.mxu0 0.0
  %3096 = vmatpush2.msra.mxu0 0.0
  %3097 = vmatprep.subr.mxu0 0.0
  %3098 = vmatpush2.msra.mxu0 0.0
  %3099 = vmatprep.mubr.f32.mxu0 0.0
  %3100 = vmatmul.mubr.f32.gmra.mxu0 %v3030
  %v3101 = vpop.f32.mrf.mxu0
  %v3102 = vadd.f32 %v3027, %v3101
  %v3103 = vpop.f32.mrf.mxu0
  %3104 = vmatprep.mubr.f32.mxu0 0.0
  %3105 = vmatmul.mubr.f32.gmra.mxu0 %v3033
  %v3106 = vpop.f32.mrf.mxu0
  %v3107 = vadd.f32 %v3027, %v3106
  %v3108 = vpop.f32.mrf.mxu0
  %3109 = vdwg.mxu0
  %v3111 = vlaneseq
  %v3112 = vshrl.u32 %v3111, 7
  %v3113 = vsub.s32 0, %v3112
  %v3114 = vrot.slane %v2998, %v3113
  %3116 = vmatprep.subr.mxu0 0.0
  %3117 = vmatpush1.msra.mxu0 0.0
  %3118 = vmatprep.subr.mxu0 0.0
  %3119 = vmatpush1.msra.mxu0 0.0
  %3120 = vmatprep.subr.mxu0 0.0
  %3121 = vmatpush1.msra.mxu0 0.0
  %3122 = vmatprep.subr.mxu0 0.0
  %3123 = vmatpush1.msra.mxu0 0.0
  %3124 = vmatprep.subr.mxu0 0.0
  %3125 = vmatpush1.msra.mxu0 0.0
  %3126 = vmatprep.subr.mxu0 0.0
  %3127 = vmatpush1.msra.mxu0 0.0
  %3128 = vmatprep.subr.mxu0 0.0
  %3129 = vmatpush1.msra.mxu0 0.0
  %3130 = vmatprep.subr.mxu0 0.0
  %3131 = vmatpush1.msra.mxu0 0.0
  %3132 = vmatprep.subr.mxu0 0.0
  %3133 = vmatpush1.msra.mxu0 0.0
  %3134 = vmatprep.subr.mxu0 0.0
  %3135 = vmatpush1.msra.mxu0 0.0
  %3136 = vmatprep.subr.mxu0 0.0
  %3137 = vmatpush1.msra.mxu0 0.0
  %3138 = vmatprep.subr.mxu0 0.0
  %3139 = vmatpush1.msra.mxu0 0.0
  %3140 = vmatprep.subr.mxu0 0.0
  %3141 = vmatpush1.msra.mxu0 %v2997
  %3142 = vmatprep.subr.mxu0 0.0
  %3143 = vmatpush1.msra.mxu0 %v2996
  %3144 = vmatprep.subr.mxu0 0.0
  %3145 = vmatpush1.msra.mxu0 %v2995
  %3146 = vmatprep.subr.mxu0 0.0
  %3147 = vmatpush1.msra.mxu0 %v2994
  %3148 = vmatprep.subr.mxu0 0.0
  %3149 = vmatpush2.msra.mxu0 0.0
  %3150 = vmatprep.subr.mxu0 0.0
  %3151 = vmatpush2.msra.mxu0 0.0
  %3152 = vmatprep.subr.mxu0 0.0
  %3153 = vmatpush2.msra.mxu0 0.0
  %3154 = vmatprep.subr.mxu0 0.0
  %3155 = vmatpush2.msra.mxu0 0.0
  %3156 = vmatprep.subr.mxu0 0.0
  %3157 = vmatpush2.msra.mxu0 0.0
  %3158 = vmatprep.subr.mxu0 0.0
  %3159 = vmatpush2.msra.mxu0 0.0
  %3160 = vmatprep.subr.mxu0 0.0
  %3161 = vmatpush2.msra.mxu0 0.0
  %3162 = vmatprep.subr.mxu0 0.0
  %3163 = vmatpush2.msra.mxu0 0.0
  %3164 = vmatprep.subr.mxu0 0.0
  %3165 = vmatpush2.msra.mxu0 0.0
  %3166 = vmatprep.subr.mxu0 0.0
  %3167 = vmatpush2.msra.mxu0 0.0
  %3168 = vmatprep.subr.mxu0 0.0
  %3169 = vmatpush2.msra.mxu0 0.0
  %3170 = vmatprep.subr.mxu0 0.0
  %3171 = vmatpush2.msra.mxu0 0.0
  %3172 = vmatprep.subr.mxu0 0.0
  %3173 = vmatpush2.msra.mxu0 0.0
  %3174 = vmatprep.subr.mxu0 0.0
  %3175 = vmatpush2.msra.mxu0 0.0
  %3176 = vmatprep.subr.mxu0 0.0
  %3177 = vmatpush2.msra.mxu0 0.0
  %3178 = vmatprep.subr.mxu0 0.0
  %3179 = vmatpush2.msra.mxu0 0.0
  %3180 = vmatprep.mubr.f32.mxu0 0.0
  %3181 = vmatmul.mubr.f32.gmra.mxu0 %v3030
  %v3182 = vpop.f32.mrf.mxu0
  %v3183 = vadd.f32 %v3114, %v3182
  %v3184 = vpop.f32.mrf.mxu0
  %3185 = vmatprep.mubr.f32.mxu0 0.0
  %3186 = vmatmul.mubr.f32.gmra.mxu0 %v3033
  %v3187 = vpop.f32.mrf.mxu0
  %v3188 = vadd.f32 %v3114, %v3187
  %v3189 = vpop.f32.mrf.mxu0
  %3190 = vdwg.mxu0
  %3191 = vmatprep.subr.mxu0 0.0
  %3192 = vmatpush1.msra.mxu0 0.0
  %3193 = vmatprep.subr.mxu0 0.0
  %3194 = vmatpush1.msra.mxu0 0.0
  %3195 = vmatprep.subr.mxu0 0.0
  %3196 = vmatpush1.msra.mxu0 0.0
  %3197 = vmatprep.subr.mxu0 0.0
  %3198 = vmatpush1.msra.mxu0 0.0
  %3199 = vmatprep.subr.mxu0 0.0
  %3200 = vmatpush1.msra.mxu0 0.0
  %3201 = vmatprep.subr.mxu0 0.0
  %3202 = vmatpush1.msra.mxu0 0.0
  %3203 = vmatprep.subr.mxu0 0.0
  %3204 = vmatpush1.msra.mxu0 0.0
  %3205 = vmatprep.subr.mxu0 0.0
  %3206 = vmatpush1.msra.mxu0 0.0
  %3207 = vmatprep.subr.mxu0 0.0
  %3208 = vmatpush1.msra.mxu0 0.0
  %3209 = vmatprep.subr.mxu0 0.0
  %3210 = vmatpush1.msra.mxu0 0.0
  %3211 = vmatprep.subr.mxu0 0.0
  %3212 = vmatpush1.msra.mxu0 0.0
  %3213 = vmatprep.subr.mxu0 0.0
  %3214 = vmatpush1.msra.mxu0 0.0
  %3215 = vmatprep.subr.mxu0 0.0
  %3216 = vmatpush1.msra.mxu0 0.0
  %3217 = vmatprep.subr.mxu0 0.0
  %3218 = vmatpush1.msra.mxu0 0.0
  %3219 = vmatprep.subr.mxu0 0.0
  %3220 = vmatpush1.msra.mxu0 %v3107
  %3221 = vmatprep.subr.mxu0 0.0
  %3222 = vmatpush1.msra.mxu0 %v3102
  %3223 = vmatprep.subr.mxu0 0.0
  %3224 = vmatpush2.msra.mxu0 0.0
  %3225 = vmatprep.subr.mxu0 0.0
  %3226 = vmatpush2.msra.mxu0 0.0
  %3227 = vmatprep.subr.mxu0 0.0
  %3228 = vmatpush2.msra.mxu0 0.0
  %3229 = vmatprep.subr.mxu0 0.0
  %3230 = vmatpush2.msra.mxu0 0.0
  %3231 = vmatprep.subr.mxu0 0.0
  %3232 = vmatpush2.msra.mxu0 0.0
  %3233 = vmatprep.subr.mxu0 0.0
  %3234 = vmatpush2.msra.mxu0 0.0
  %3235 = vmatprep.subr.mxu0 0.0
  %3236 = vmatpush2.msra.mxu0 0.0
  %3237 = vmatprep.subr.mxu0 0.0
  %3238 = vmatpush2.msra.mxu0 0.0
  %3239 = vmatprep.subr.mxu0 0.0
  %3240 = vmatpush2.msra.mxu0 0.0
  %3241 = vmatprep.subr.mxu0 0.0
  %3242 = vmatpush2.msra.mxu0 0.0
  %3243 = vmatprep.subr.mxu0 0.0
  %3244 = vmatpush2.msra.mxu0 0.0
  %3245 = vmatprep.subr.mxu0 0.0
  %3246 = vmatpush2.msra.mxu0 0.0
  %3247 = vmatprep.subr.mxu0 0.0
  %3248 = vmatpush2.msra.mxu0 0.0
  %3249 = vmatprep.subr.mxu0 0.0
  %3250 = vmatpush2.msra.mxu0 0.0
  %3251 = vmatprep.subr.mxu0 0.0
  %3252 = vmatpush2.msra.mxu0 0.0
  %3253 = vmatprep.subr.mxu0 0.0
  %3254 = vmatpush2.msra.mxu0 0.0
  %3255 = vmatprep.mubr.f32.mxu0 0.0
  %3256 = vmatmul.mubr.f32.gmra.mxu0 %v483
  %v3257 = vpop.f32.mrf.mxu0
  %v3258 = vadd.f32 0.0, %v3257
  %v3259 = vpop.f32.mrf.mxu0
  %3260 = vmatprep.mubr.f32.mxu0 0.0
  %3261 = vmatmul.mubr.f32.gmra.mxu0 %v486
  %v3262 = vpop.f32.mrf.mxu0
  %v3263 = vadd.f32 0.0, %v3262
  %v3264 = vpop.f32.mrf.mxu0
  %3265 = vmatprep.mubr.f32.mxu0 0.0
  %3266 = vmatmul.mubr.f32.gmra.mxu0 %v489
  %v3267 = vpop.f32.mrf.mxu0
  %v3268 = vadd.f32 0.0, %v3267
  %v3269 = vpop.f32.mrf.mxu0
  %3270 = vmatprep.mubr.f32.mxu0 0.0
  %3271 = vmatmul.mubr.f32.gmra.mxu0 %v492
  %v3272 = vpop.f32.mrf.mxu0
  %v3273 = vadd.f32 0.0, %v3272
  %v3274 = vpop.f32.mrf.mxu0
  %3275 = vmatprep.mubr.f32.mxu0 0.0
  %3276 = vmatmul.mubr.f32.gmra.mxu0 %v495
  %v3277 = vpop.f32.mrf.mxu0
  %v3278 = vadd.f32 0.0, %v3277
  %v3279 = vpop.f32.mrf.mxu0
  %3280 = vmatprep.mubr.f32.mxu0 0.0
  %3281 = vmatmul.mubr.f32.gmra.mxu0 %v498
  %v3282 = vpop.f32.mrf.mxu0
  %v3283 = vadd.f32 0.0, %v3282
  %v3284 = vpop.f32.mrf.mxu0
  %3285 = vmatprep.mubr.f32.mxu0 0.0
  %3286 = vmatmul.mubr.f32.gmra.mxu0 %v501
  %v3287 = vpop.f32.mrf.mxu0
  %v3288 = vadd.f32 0.0, %v3287
  %v3289 = vpop.f32.mrf.mxu0
  %3290 = vmatprep.mubr.f32.mxu0 0.0
  %3291 = vmatmul.mubr.f32.gmra.mxu0 %v504
  %v3292 = vpop.f32.mrf.mxu0
  %v3293 = vadd.f32 0.0, %v3292
  %v3294 = vpop.f32.mrf.mxu0
  %3295 = vmatprep.mubr.f32.mxu0 0.0
  %3296 = vmatmul.mubr.f32.gmra.mxu0 %v507
  %v3297 = vpop.f32.mrf.mxu0
  %v3298 = vadd.f32 0.0, %v3297
  %v3299 = vpop.f32.mrf.mxu0
  %3300 = vmatprep.mubr.f32.mxu0 0.0
  %3301 = vmatmul.mubr.f32.gmra.mxu0 %v510
  %v3302 = vpop.f32.mrf.mxu0
  %v3303 = vadd.f32 0.0, %v3302
  %v3304 = vpop.f32.mrf.mxu0
  %3305 = vmatprep.mubr.f32.mxu0 0.0
  %3306 = vmatmul.mubr.f32.gmra.mxu0 %v513
  %v3307 = vpop.f32.mrf.mxu0
  %v3308 = vadd.f32 0.0, %v3307
  %v3309 = vpop.f32.mrf.mxu0
  %3310 = vmatprep.mubr.f32.mxu0 0.0
  %3311 = vmatmul.mubr.f32.gmra.mxu0 %v516
  %v3312 = vpop.f32.mrf.mxu0
  %v3313 = vadd.f32 0.0, %v3312
  %v3314 = vpop.f32.mrf.mxu0
  %3315 = vmatprep.mubr.f32.mxu0 0.0
  %3316 = vmatmul.mubr.f32.gmra.mxu0 %v519
  %v3317 = vpop.f32.mrf.mxu0
  %v3318 = vadd.f32 0.0, %v3317
  %v3319 = vpop.f32.mrf.mxu0
  %3320 = vmatprep.mubr.f32.mxu0 0.0
  %3321 = vmatmul.mubr.f32.gmra.mxu0 %v522
  %v3322 = vpop.f32.mrf.mxu0
  %v3323 = vadd.f32 0.0, %v3322
  %v3324 = vpop.f32.mrf.mxu0
  %3325 = vmatprep.mubr.f32.mxu0 0.0
  %3326 = vmatmul.mubr.f32.gmra.mxu0 %v525
  %v3327 = vpop.f32.mrf.mxu0
  %v3328 = vadd.f32 0.0, %v3327
  %v3329 = vpop.f32.mrf.mxu0
  %3330 = vmatprep.mubr.f32.mxu0 0.0
  %3331 = vmatmul.mubr.f32.gmra.mxu0 %v528
  %v3332 = vpop.f32.mrf.mxu0
  %v3333 = vadd.f32 0.0, %v3332
  %v3334 = vpop.f32.mrf.mxu0
  %3335 = vmatprep.mubr.f32.mxu0 0.0
  %3336 = vmatmul.mubr.f32.gmra.mxu0 %v531
  %v3337 = vpop.f32.mrf.mxu0
  %v3338 = vadd.f32 0.0, %v3337
  %v3339 = vpop.f32.mrf.mxu0
  %3340 = vmatprep.mubr.f32.mxu0 0.0
  %3341 = vmatmul.mubr.f32.gmra.mxu0 %v534
  %v3342 = vpop.f32.mrf.mxu0
  %v3343 = vadd.f32 0.0, %v3342
  %v3344 = vpop.f32.mrf.mxu0
  %3345 = vmatprep.mubr.f32.mxu0 0.0
  %3346 = vmatmul.mubr.f32.gmra.mxu0 %v537
  %v3347 = vpop.f32.mrf.mxu0
  %v3348 = vadd.f32 0.0, %v3347
  %v3349 = vpop.f32.mrf.mxu0
  %3350 = vmatprep.mubr.f32.mxu0 0.0
  %3351 = vmatmul.mubr.f32.gmra.mxu0 %v540
  %v3352 = vpop.f32.mrf.mxu0
  %v3353 = vadd.f32 0.0, %v3352
  %v3354 = vpop.f32.mrf.mxu0
  %3355 = vmatprep.mubr.f32.mxu0 0.0
  %3356 = vmatmul.mubr.f32.gmra.mxu0 %v543
  %v3357 = vpop.f32.mrf.mxu0
  %v3358 = vadd.f32 0.0, %v3357
  %v3359 = vpop.f32.mrf.mxu0
  %3360 = vmatprep.mubr.f32.mxu0 0.0
  %3361 = vmatmul.mubr.f32.gmra.mxu0 %v546
  %v3362 = vpop.f32.mrf.mxu0
  %v3363 = vadd.f32 0.0, %v3362
  %v3364 = vpop.f32.mrf.mxu0
  %3365 = vmatprep.mubr.f32.mxu0 0.0
  %3366 = vmatmul.mubr.f32.gmra.mxu0 %v549
  %v3367 = vpop.f32.mrf.mxu0
  %v3368 = vadd.f32 0.0, %v3367
  %v3369 = vpop.f32.mrf.mxu0
  %3370 = vmatprep.mubr.f32.mxu0 0.0
  %3371 = vmatmul.mubr.f32.gmra.mxu0 %v552
  %v3372 = vpop.f32.mrf.mxu0
  %v3373 = vadd.f32 0.0, %v3372
  %v3374 = vpop.f32.mrf.mxu0
  %3375 = vmatprep.mubr.f32.mxu0 0.0
  %3376 = vmatmul.mubr.f32.gmra.mxu0 %v555
  %v3377 = vpop.f32.mrf.mxu0
  %v3378 = vadd.f32 0.0, %v3377
  %v3379 = vpop.f32.mrf.mxu0
  %3380 = vmatprep.mubr.f32.mxu0 0.0
  %3381 = vmatmul.mubr.f32.gmra.mxu0 %v558
  %v3382 = vpop.f32.mrf.mxu0
  %v3383 = vadd.f32 0.0, %v3382
  %v3384 = vpop.f32.mrf.mxu0
  %3385 = vmatprep.mubr.f32.mxu0 0.0
  %3386 = vmatmul.mubr.f32.gmra.mxu0 %v561
  %v3387 = vpop.f32.mrf.mxu0
  %v3388 = vadd.f32 0.0, %v3387
  %v3389 = vpop.f32.mrf.mxu0
  %3390 = vmatprep.mubr.f32.mxu0 0.0
  %3391 = vmatmul.mubr.f32.gmra.mxu0 %v564
  %v3392 = vpop.f32.mrf.mxu0
  %v3393 = vadd.f32 0.0, %v3392
  %v3394 = vpop.f32.mrf.mxu0
  %3395 = vmatprep.mubr.f32.mxu0 0.0
  %3396 = vmatmul.mubr.f32.gmra.mxu0 %v567
  %v3397 = vpop.f32.mrf.mxu0
  %v3398 = vadd.f32 0.0, %v3397
  %v3399 = vpop.f32.mrf.mxu0
  %3400 = vmatprep.mubr.f32.mxu0 0.0
  %3401 = vmatmul.mubr.f32.gmra.mxu0 %v570
  %v3402 = vpop.f32.mrf.mxu0
  %v3403 = vadd.f32 0.0, %v3402
  %v3404 = vpop.f32.mrf.mxu0
  %3405 = vmatprep.mubr.f32.mxu0 0.0
  %3406 = vmatmul.mubr.f32.gmra.mxu0 %v573
  %v3407 = vpop.f32.mrf.mxu0
  %v3408 = vadd.f32 0.0, %v3407
  %v3409 = vpop.f32.mrf.mxu0
  %3410 = vmatprep.mubr.f32.mxu0 0.0
  %3411 = vmatmul.mubr.f32.gmra.mxu0 %v576
  %v3412 = vpop.f32.mrf.mxu0
  %v3413 = vadd.f32 0.0, %v3412
  %v3414 = vpop.f32.mrf.mxu0
  %3415 = vdwg.mxu0
  %3416 = vmatprep.subr.mxu0 0.0
  %3417 = vmatpush1.msra.mxu0 0.0
  %3418 = vmatprep.subr.mxu0 0.0
  %3419 = vmatpush1.msra.mxu0 0.0
  %3420 = vmatprep.subr.mxu0 0.0
  %3421 = vmatpush1.msra.mxu0 0.0
  %3422 = vmatprep.subr.mxu0 0.0
  %3423 = vmatpush1.msra.mxu0 0.0
  %3424 = vmatprep.subr.mxu0 0.0
  %3425 = vmatpush1.msra.mxu0 0.0
  %3426 = vmatprep.subr.mxu0 0.0
  %3427 = vmatpush1.msra.mxu0 0.0
  %3428 = vmatprep.subr.mxu0 0.0
  %3429 = vmatpush1.msra.mxu0 0.0
  %3430 = vmatprep.subr.mxu0 0.0
  %3431 = vmatpush1.msra.mxu0 0.0
  %3432 = vmatprep.subr.mxu0 0.0
  %3433 = vmatpush1.msra.mxu0 0.0
  %3434 = vmatprep.subr.mxu0 0.0
  %3435 = vmatpush1.msra.mxu0 0.0
  %3436 = vmatprep.subr.mxu0 0.0
  %3437 = vmatpush1.msra.mxu0 0.0
  %3438 = vmatprep.subr.mxu0 0.0
  %3439 = vmatpush1.msra.mxu0 0.0
  %3440 = vmatprep.subr.mxu0 0.0
  %3441 = vmatpush1.msra.mxu0 0.0
  %3442 = vmatprep.subr.mxu0 0.0
  %3443 = vmatpush1.msra.mxu0 0.0
  %3444 = vmatprep.subr.mxu0 0.0
  %3445 = vmatpush1.msra.mxu0 %v3188
  %3446 = vmatprep.subr.mxu0 0.0
  %3447 = vmatpush1.msra.mxu0 %v3183
  %3448 = vmatprep.subr.mxu0 0.0
  %3449 = vmatpush2.msra.mxu0 0.0
  %3450 = vmatprep.subr.mxu0 0.0
  %3451 = vmatpush2.msra.mxu0 0.0
  %3452 = vmatprep.subr.mxu0 0.0
  %3453 = vmatpush2.msra.mxu0 0.0
  %3454 = vmatprep.subr.mxu0 0.0
  %3455 = vmatpush2.msra.mxu0 0.0
  %3456 = vmatprep.subr.mxu0 0.0
  %3457 = vmatpush2.msra.mxu0 0.0
  %3458 = vmatprep.subr.mxu0 0.0
  %3459 = vmatpush2.msra.mxu0 0.0
  %3460 = vmatprep.subr.mxu0 0.0
  %3461 = vmatpush2.msra.mxu0 0.0
  %3462 = vmatprep.subr.mxu0 0.0
  %3463 = vmatpush2.msra.mxu0 0.0
  %3464 = vmatprep.subr.mxu0 0.0
  %3465 = vmatpush2.msra.mxu0 0.0
  %3466 = vmatprep.subr.mxu0 0.0
  %3467 = vmatpush2.msra.mxu0 0.0
  %3468 = vmatprep.subr.mxu0 0.0
  %3469 = vmatpush2.msra.mxu0 0.0
  %3470 = vmatprep.subr.mxu0 0.0
  %3471 = vmatpush2.msra.mxu0 0.0
  %3472 = vmatprep.subr.mxu0 0.0
  %3473 = vmatpush2.msra.mxu0 0.0
  %3474 = vmatprep.subr.mxu0 0.0
  %3475 = vmatpush2.msra.mxu0 0.0
  %3476 = vmatprep.subr.mxu0 0.0
  %3477 = vmatpush2.msra.mxu0 0.0
  %3478 = vmatprep.subr.mxu0 0.0
  %3479 = vmatpush2.msra.mxu0 0.0
  %3480 = vmatprep.mubr.f32.mxu0 0.0
  %3481 = vmatmul.mubr.f32.gmra.mxu0 %v804
  %v3482 = vpop.f32.mrf.mxu0
  %v3483 = vadd.f32 0.0, %v3482
  %v3484 = vpop.f32.mrf.mxu0
  %3485 = vmatprep.mubr.f32.mxu0 0.0
  %3486 = vmatmul.mubr.f32.gmra.mxu0 %v807
  %v3487 = vpop.f32.mrf.mxu0
  %v3488 = vadd.f32 0.0, %v3487
  %v3489 = vpop.f32.mrf.mxu0
  %3490 = vmatprep.mubr.f32.mxu0 0.0
  %3491 = vmatmul.mubr.f32.gmra.mxu0 %v810
  %v3492 = vpop.f32.mrf.mxu0
  %v3493 = vadd.f32 0.0, %v3492
  %v3494 = vpop.f32.mrf.mxu0
  %3495 = vmatprep.mubr.f32.mxu0 0.0
  %3496 = vmatmul.mubr.f32.gmra.mxu0 %v813
  %v3497 = vpop.f32.mrf.mxu0
  %v3498 = vadd.f32 0.0, %v3497
  %v3499 = vpop.f32.mrf.mxu0
  %3500 = vmatprep.mubr.f32.mxu0 0.0
  %3501 = vmatmul.mubr.f32.gmra.mxu0 %v816
  %v3502 = vpop.f32.mrf.mxu0
  %v3503 = vadd.f32 0.0, %v3502
  %v3504 = vpop.f32.mrf.mxu0
  %3505 = vmatprep.mubr.f32.mxu0 0.0
  %3506 = vmatmul.mubr.f32.gmra.mxu0 %v819
  %v3507 = vpop.f32.mrf.mxu0
  %v3508 = vadd.f32 0.0, %v3507
  %v3509 = vpop.f32.mrf.mxu0
  %3510 = vmatprep.mubr.f32.mxu0 0.0
  %3511 = vmatmul.mubr.f32.gmra.mxu0 %v822
  %v3512 = vpop.f32.mrf.mxu0
  %v3513 = vadd.f32 0.0, %v3512
  %v3514 = vpop.f32.mrf.mxu0
  %3515 = vmatprep.mubr.f32.mxu0 0.0
  %3516 = vmatmul.mubr.f32.gmra.mxu0 %v825
  %v3517 = vpop.f32.mrf.mxu0
  %v3518 = vadd.f32 0.0, %v3517
  %v3519 = vpop.f32.mrf.mxu0
  %3520 = vmatprep.mubr.f32.mxu0 0.0
  %3521 = vmatmul.mubr.f32.gmra.mxu0 %v828
  %v3522 = vpop.f32.mrf.mxu0
  %v3523 = vadd.f32 0.0, %v3522
  %v3524 = vpop.f32.mrf.mxu0
  %3525 = vmatprep.mubr.f32.mxu0 0.0
  %3526 = vmatmul.mubr.f32.gmra.mxu0 %v831
  %v3527 = vpop.f32.mrf.mxu0
  %v3528 = vadd.f32 0.0, %v3527
  %v3529 = vpop.f32.mrf.mxu0
  %3530 = vmatprep.mubr.f32.mxu0 0.0
  %3531 = vmatmul.mubr.f32.gmra.mxu0 %v834
  %v3532 = vpop.f32.mrf.mxu0
  %v3533 = vadd.f32 0.0, %v3532
  %v3534 = vpop.f32.mrf.mxu0
  %3535 = vmatprep.mubr.f32.mxu0 0.0
  %3536 = vmatmul.mubr.f32.gmra.mxu0 %v837
  %v3537 = vpop.f32.mrf.mxu0
  %v3538 = vadd.f32 0.0, %v3537
  %v3539 = vpop.f32.mrf.mxu0
  %3540 = vmatprep.mubr.f32.mxu0 0.0
  %3541 = vmatmul.mubr.f32.gmra.mxu0 %v840
  %v3542 = vpop.f32.mrf.mxu0
  %v3543 = vadd.f32 0.0, %v3542
  %v3544 = vpop.f32.mrf.mxu0
  %3545 = vmatprep.mubr.f32.mxu0 0.0
  %3546 = vmatmul.mubr.f32.gmra.mxu0 %v843
  %v3547 = vpop.f32.mrf.mxu0
  %v3548 = vadd.f32 0.0, %v3547
  %v3549 = vpop.f32.mrf.mxu0
  %3550 = vmatprep.mubr.f32.mxu0 0.0
  %3551 = vmatmul.mubr.f32.gmra.mxu0 %v846
  %v3552 = vpop.f32.mrf.mxu0
  %v3553 = vadd.f32 0.0, %v3552
  %v3554 = vpop.f32.mrf.mxu0
  %3555 = vmatprep.mubr.f32.mxu0 0.0
  %3556 = vmatmul.mubr.f32.gmra.mxu0 %v849
  %v3557 = vpop.f32.mrf.mxu0
  %v3558 = vadd.f32 0.0, %v3557
  %v3559 = vpop.f32.mrf.mxu0
  %3560 = vmatprep.mubr.f32.mxu0 0.0
  %3561 = vmatmul.mubr.f32.gmra.mxu0 %v852
  %v3562 = vpop.f32.mrf.mxu0
  %v3563 = vadd.f32 0.0, %v3562
  %v3564 = vpop.f32.mrf.mxu0
  %3565 = vmatprep.mubr.f32.mxu0 0.0
  %3566 = vmatmul.mubr.f32.gmra.mxu0 %v855
  %v3567 = vpop.f32.mrf.mxu0
  %v3568 = vadd.f32 0.0, %v3567
  %v3569 = vpop.f32.mrf.mxu0
  %3570 = vmatprep.mubr.f32.mxu0 0.0
  %3571 = vmatmul.mubr.f32.gmra.mxu0 %v858
  %v3572 = vpop.f32.mrf.mxu0
  %v3573 = vadd.f32 0.0, %v3572
  %v3574 = vpop.f32.mrf.mxu0
  %3575 = vmatprep.mubr.f32.mxu0 0.0
  %3576 = vmatmul.mubr.f32.gmra.mxu0 %v861
  %v3577 = vpop.f32.mrf.mxu0
  %v3578 = vadd.f32 0.0, %v3577
  %v3579 = vpop.f32.mrf.mxu0
  %3580 = vmatprep.mubr.f32.mxu0 0.0
  %3581 = vmatmul.mubr.f32.gmra.mxu0 %v864
  %v3582 = vpop.f32.mrf.mxu0
  %v3583 = vadd.f32 0.0, %v3582
  %v3584 = vpop.f32.mrf.mxu0
  %3585 = vmatprep.mubr.f32.mxu0 0.0
  %3586 = vmatmul.mubr.f32.gmra.mxu0 %v867
  %v3587 = vpop.f32.mrf.mxu0
  %v3588 = vadd.f32 0.0, %v3587
  %v3589 = vpop.f32.mrf.mxu0
  %3590 = vmatprep.mubr.f32.mxu0 0.0
  %3591 = vmatmul.mubr.f32.gmra.mxu0 %v870
  %v3592 = vpop.f32.mrf.mxu0
  %v3593 = vadd.f32 0.0, %v3592
  %v3594 = vpop.f32.mrf.mxu0
  %3595 = vmatprep.mubr.f32.mxu0 0.0
  %3596 = vmatmul.mubr.f32.gmra.mxu0 %v873
  %v3597 = vpop.f32.mrf.mxu0
  %v3598 = vadd.f32 0.0, %v3597
  %v3599 = vpop.f32.mrf.mxu0
  %3600 = vmatprep.mubr.f32.mxu0 0.0
  %3601 = vmatmul.mubr.f32.gmra.mxu0 %v876
  %v3602 = vpop.f32.mrf.mxu0
  %v3603 = vadd.f32 0.0, %v3602
  %v3604 = vpop.f32.mrf.mxu0
  %3605 = vmatprep.mubr.f32.mxu0 0.0
  %3606 = vmatmul.mubr.f32.gmra.mxu0 %v879
  %v3607 = vpop.f32.mrf.mxu0
  %v3608 = vadd.f32 0.0, %v3607
  %v3609 = vpop.f32.mrf.mxu0
  %3610 = vmatprep.mubr.f32.mxu0 0.0
  %3611 = vmatmul.mubr.f32.gmra.mxu0 %v882
  %v3612 = vpop.f32.mrf.mxu0
  %v3613 = vadd.f32 0.0, %v3612
  %v3614 = vpop.f32.mrf.mxu0
  %3615 = vmatprep.mubr.f32.mxu0 0.0
  %3616 = vmatmul.mubr.f32.gmra.mxu0 %v885
  %v3617 = vpop.f32.mrf.mxu0
  %v3618 = vadd.f32 0.0, %v3617
  %v3619 = vpop.f32.mrf.mxu0
  %3620 = vmatprep.mubr.f32.mxu0 0.0
  %3621 = vmatmul.mubr.f32.gmra.mxu0 %v888
  %v3622 = vpop.f32.mrf.mxu0
  %v3623 = vadd.f32 0.0, %v3622
  %v3624 = vpop.f32.mrf.mxu0
  %3625 = vmatprep.mubr.f32.mxu0 0.0
  %3626 = vmatmul.mubr.f32.gmra.mxu0 %v891
  %v3627 = vpop.f32.mrf.mxu0
  %v3628 = vadd.f32 0.0, %v3627
  %v3629 = vpop.f32.mrf.mxu0
  %3630 = vmatprep.mubr.f32.mxu0 0.0
  %3631 = vmatmul.mubr.f32.gmra.mxu0 %v894
  %v3632 = vpop.f32.mrf.mxu0
  %v3633 = vadd.f32 0.0, %v3632
  %v3634 = vpop.f32.mrf.mxu0
  %3635 = vmatprep.mubr.f32.mxu0 0.0
  %3636 = vmatmul.mubr.f32.gmra.mxu0 %v897
  %v3637 = vpop.f32.mrf.mxu0
  %v3638 = vadd.f32 0.0, %v3637
  %v3639 = vpop.f32.mrf.mxu0
  %3640 = vdwg.mxu0
  %3641 = vmatprep.subr.mxu0 0.0
  %3642 = vmatpush1.msra.mxu0 %v3014
  %3643 = vmatprep.subr.mxu0 0.0
  %3644 = vmatpush1.msra.mxu0 %v3013
  %3645 = vmatprep.subr.mxu0 0.0
  %3646 = vmatpush1.msra.mxu0 %v3012
  %3647 = vmatprep.subr.mxu0 0.0
  %3648 = vmatpush1.msra.mxu0 %v3011
  %3649 = vmatprep.subr.mxu0 0.0
  %3650 = vmatpush1.msra.mxu0 %v3010
  %3651 = vmatprep.subr.mxu0 0.0
  %3652 = vmatpush1.msra.mxu0 %v3009
  %3653 = vmatprep.subr.mxu0 0.0
  %3654 = vmatpush1.msra.mxu0 %v3008
  %3655 = vmatprep.subr.mxu0 0.0
  %3656 = vmatpush1.msra.mxu0 %v3007
  %3657 = vmatprep.subr.mxu0 0.0
  %3658 = vmatpush1.msra.mxu0 %v3006
  %3659 = vmatprep.subr.mxu0 0.0
  %3660 = vmatpush1.msra.mxu0 %v3005
  %3661 = vmatprep.subr.mxu0 0.0
  %3662 = vmatpush1.msra.mxu0 %v3004
  %3663 = vmatprep.subr.mxu0 0.0
  %3664 = vmatpush1.msra.mxu0 %v3003
  %3665 = vmatprep.subr.mxu0 0.0
  %3666 = vmatpush1.msra.mxu0 %v3002
  %3667 = vmatprep.subr.mxu0 0.0
  %3668 = vmatpush1.msra.mxu0 %v3001
  %3669 = vmatprep.subr.mxu0 0.0
  %3670 = vmatpush1.msra.mxu0 %v3000
  %3671 = vmatprep.subr.mxu0 0.0
  %3672 = vmatpush1.msra.mxu0 %v2999
  %3673 = vmatprep.subr.mxu0 0.0
  %3674 = vmatpush2.msra.mxu0 0.0
  %3675 = vmatprep.subr.mxu0 0.0
  %3676 = vmatpush2.msra.mxu0 0.0
  %3677 = vmatprep.subr.mxu0 0.0
  %3678 = vmatpush2.msra.mxu0 0.0
  %3679 = vmatprep.subr.mxu0 0.0
  %3680 = vmatpush2.msra.mxu0 0.0
  %3681 = vmatprep.subr.mxu0 0.0
  %3682 = vmatpush2.msra.mxu0 0.0
  %3683 = vmatprep.subr.mxu0 0.0
  %3684 = vmatpush2.msra.mxu0 0.0
  %3685 = vmatprep.subr.mxu0 0.0
  %3686 = vmatpush2.msra.mxu0 0.0
  %3687 = vmatprep.subr.mxu0 0.0
  %3688 = vmatpush2.msra.mxu0 0.0
  %3689 = vmatprep.subr.mxu0 0.0
  %3690 = vmatpush2.msra.mxu0 0.0
  %3691 = vmatprep.subr.mxu0 0.0
  %3692 = vmatpush2.msra.mxu0 0.0
  %3693 = vmatprep.subr.mxu0 0.0
  %3694 = vmatpush2.msra.mxu0 0.0
  %3695 = vmatprep.subr.mxu0 0.0
  %3696 = vmatpush2.msra.mxu0 0.0
  %3697 = vmatprep.subr.mxu0 0.0
  %3698 = vmatpush2.msra.mxu0 0.0
  %3699 = vmatprep.subr.mxu0 0.0
  %3700 = vmatpush2.msra.mxu0 0.0
  %3701 = vmatprep.subr.mxu0 0.0
  %3702 = vmatpush2.msra.mxu0 0.0
  %3703 = vmatprep.subr.mxu0 0.0
  %3704 = vmatpush2.msra.mxu0 0.0
  %3705 = vmatprep.mubr.f32.mxu0 0.0
  %3706 = vmatmul.mubr.f32.gmra.mxu0 %v142
  %v3707 = vpop.f32.mrf.mxu0
  %v3708 = vadd.f32 %v3258, %v3707
  %v3709 = vpop.f32.mrf.mxu0
  %3710 = vmatprep.mubr.f32.mxu0 0.0
  %3711 = vmatmul.mubr.f32.gmra.mxu0 %v143
  %v3712 = vpop.f32.mrf.mxu0
  %v3713 = vadd.f32 %v3263, %v3712
  %v3714 = vpop.f32.mrf.mxu0
  %3715 = vmatprep.mubr.f32.mxu0 0.0
  %3716 = vmatmul.mubr.f32.gmra.mxu0 %v144
  %v3717 = vpop.f32.mrf.mxu0
  %v3718 = vadd.f32 %v3268, %v3717
  %v3719 = vpop.f32.mrf.mxu0
  %3720 = vmatprep.mubr.f32.mxu0 0.0
  %3721 = vmatmul.mubr.f32.gmra.mxu0 %v145
  %v3722 = vpop.f32.mrf.mxu0
  %v3723 = vadd.f32 %v3273, %v3722
  %v3724 = vpop.f32.mrf.mxu0
  %3725 = vmatprep.mubr.f32.mxu0 0.0
  %3726 = vmatmul.mubr.f32.gmra.mxu0 %v146
  %v3727 = vpop.f32.mrf.mxu0
  %v3728 = vadd.f32 %v3278, %v3727
  %v3729 = vpop.f32.mrf.mxu0
  %3730 = vmatprep.mubr.f32.mxu0 0.0
  %3731 = vmatmul.mubr.f32.gmra.mxu0 %v147
  %v3732 = vpop.f32.mrf.mxu0
  %v3733 = vadd.f32 %v3283, %v3732
  %v3734 = vpop.f32.mrf.mxu0
  %3735 = vmatprep.mubr.f32.mxu0 0.0
  %3736 = vmatmul.mubr.f32.gmra.mxu0 %v148
  %v3737 = vpop.f32.mrf.mxu0
  %v3738 = vadd.f32 %v3288, %v3737
  %v3739 = vpop.f32.mrf.mxu0
  %3740 = vmatprep.mubr.f32.mxu0 0.0
  %3741 = vmatmul.mubr.f32.gmra.mxu0 %v149
  %v3742 = vpop.f32.mrf.mxu0
  %v3743 = vadd.f32 %v3293, %v3742
  %v3744 = vpop.f32.mrf.mxu0
  %3745 = vmatprep.mubr.f32.mxu0 0.0
  %3746 = vmatmul.mubr.f32.gmra.mxu0 %v150
  %v3747 = vpop.f32.mrf.mxu0
  %v3748 = vadd.f32 %v3298, %v3747
  %v3749 = vpop.f32.mrf.mxu0
  %3750 = vmatprep.mubr.f32.mxu0 0.0
  %3751 = vmatmul.mubr.f32.gmra.mxu0 %v151
  %v3752 = vpop.f32.mrf.mxu0
  %v3753 = vadd.f32 %v3303, %v3752
  %v3754 = vpop.f32.mrf.mxu0
  %3755 = vmatprep.mubr.f32.mxu0 0.0
  %3756 = vmatmul.mubr.f32.gmra.mxu0 %v152
  %v3757 = vpop.f32.mrf.mxu0
  %v3758 = vadd.f32 %v3308, %v3757
  %v3759 = vpop.f32.mrf.mxu0
  %3760 = vmatprep.mubr.f32.mxu0 0.0
  %3761 = vmatmul.mubr.f32.gmra.mxu0 %v153
  %v3762 = vpop.f32.mrf.mxu0
  %v3763 = vadd.f32 %v3313, %v3762
  %v3764 = vpop.f32.mrf.mxu0
  %3765 = vmatprep.mubr.f32.mxu0 0.0
  %3766 = vmatmul.mubr.f32.gmra.mxu0 %v154
  %v3767 = vpop.f32.mrf.mxu0
  %v3768 = vadd.f32 %v3318, %v3767
  %v3769 = vpop.f32.mrf.mxu0
  %3770 = vmatprep.mubr.f32.mxu0 0.0
  %3771 = vmatmul.mubr.f32.gmra.mxu0 %v155
  %v3772 = vpop.f32.mrf.mxu0
  %v3773 = vadd.f32 %v3323, %v3772
  %v3774 = vpop.f32.mrf.mxu0
  %3775 = vmatprep.mubr.f32.mxu0 0.0
  %3776 = vmatmul.mubr.f32.gmra.mxu0 %v156
  %v3777 = vpop.f32.mrf.mxu0
  %v3778 = vadd.f32 %v3328, %v3777
  %v3779 = vpop.f32.mrf.mxu0
  %3780 = vmatprep.mubr.f32.mxu0 0.0
  %3781 = vmatmul.mubr.f32.gmra.mxu0 %v157
  %v3782 = vpop.f32.mrf.mxu0
  %v3783 = vadd.f32 %v3333, %v3782
  %v3784 = vpop.f32.mrf.mxu0
  %3785 = vmatprep.mubr.f32.mxu0 0.0
  %3786 = vmatmul.mubr.f32.gmra.mxu0 %v158
  %v3787 = vpop.f32.mrf.mxu0
  %v3788 = vadd.f32 %v3338, %v3787
  %v3789 = vpop.f32.mrf.mxu0
  %3790 = vmatprep.mubr.f32.mxu0 0.0
  %3791 = vmatmul.mubr.f32.gmra.mxu0 %v159
  %v3792 = vpop.f32.mrf.mxu0
  %v3793 = vadd.f32 %v3343, %v3792
  %v3794 = vpop.f32.mrf.mxu0
  %3795 = vmatprep.mubr.f32.mxu0 0.0
  %3796 = vmatmul.mubr.f32.gmra.mxu0 %v160
  %v3797 = vpop.f32.mrf.mxu0
  %v3798 = vadd.f32 %v3348, %v3797
  %v3799 = vpop.f32.mrf.mxu0
  %3800 = vmatprep.mubr.f32.mxu0 0.0
  %3801 = vmatmul.mubr.f32.gmra.mxu0 %v161
  %v3802 = vpop.f32.mrf.mxu0
  %v3803 = vadd.f32 %v3353, %v3802
  %v3804 = vpop.f32.mrf.mxu0
  %3805 = vmatprep.mubr.f32.mxu0 0.0
  %3806 = vmatmul.mubr.f32.gmra.mxu0 %v162
  %v3807 = vpop.f32.mrf.mxu0
  %v3808 = vadd.f32 %v3358, %v3807
  %v3809 = vpop.f32.mrf.mxu0
  %3810 = vmatprep.mubr.f32.mxu0 0.0
  %3811 = vmatmul.mubr.f32.gmra.mxu0 %v163
  %v3812 = vpop.f32.mrf.mxu0
  %v3813 = vadd.f32 %v3363, %v3812
  %v3814 = vpop.f32.mrf.mxu0
  %3815 = vmatprep.mubr.f32.mxu0 0.0
  %3816 = vmatmul.mubr.f32.gmra.mxu0 %v164
  %v3817 = vpop.f32.mrf.mxu0
  %v3818 = vadd.f32 %v3368, %v3817
  %v3819 = vpop.f32.mrf.mxu0
  %3820 = vmatprep.mubr.f32.mxu0 0.0
  %3821 = vmatmul.mubr.f32.gmra.mxu0 %v165
  %v3822 = vpop.f32.mrf.mxu0
  %v3823 = vadd.f32 %v3373, %v3822
  %v3824 = vpop.f32.mrf.mxu0
  %3825 = vmatprep.mubr.f32.mxu0 0.0
  %3826 = vmatmul.mubr.f32.gmra.mxu0 %v166
  %v3827 = vpop.f32.mrf.mxu0
  %v3828 = vadd.f32 %v3378, %v3827
  %v3829 = vpop.f32.mrf.mxu0
  %3830 = vmatprep.mubr.f32.mxu0 0.0
  %3831 = vmatmul.mubr.f32.gmra.mxu0 %v167
  %v3832 = vpop.f32.mrf.mxu0
  %v3833 = vadd.f32 %v3383, %v3832
  %v3834 = vpop.f32.mrf.mxu0
  %3835 = vmatprep.mubr.f32.mxu0 0.0
  %3836 = vmatmul.mubr.f32.gmra.mxu0 %v168
  %v3837 = vpop.f32.mrf.mxu0
  %v3838 = vadd.f32 %v3388, %v3837
  %v3839 = vpop.f32.mrf.mxu0
  %3840 = vmatprep.mubr.f32.mxu0 0.0
  %3841 = vmatmul.mubr.f32.gmra.mxu0 %v169
  %v3842 = vpop.f32.mrf.mxu0
  %v3843 = vadd.f32 %v3393, %v3842
  %v3844 = vpop.f32.mrf.mxu0
  %3845 = vmatprep.mubr.f32.mxu0 0.0
  %3846 = vmatmul.mubr.f32.gmra.mxu0 %v170
  %v3847 = vpop.f32.mrf.mxu0
  %v3848 = vadd.f32 %v3398, %v3847
  %v3849 = vpop.f32.mrf.mxu0
  %3850 = vmatprep.mubr.f32.mxu0 0.0
  %3851 = vmatmul.mubr.f32.gmra.mxu0 %v171
  %v3852 = vpop.f32.mrf.mxu0
  %v3853 = vadd.f32 %v3403, %v3852
  %v3854 = vpop.f32.mrf.mxu0
  %3855 = vmatprep.mubr.f32.mxu0 0.0
  %3856 = vmatmul.mubr.f32.gmra.mxu0 %v172
  %v3857 = vpop.f32.mrf.mxu0
  %v3858 = vadd.f32 %v3408, %v3857
  %v3859 = vpop.f32.mrf.mxu0
  %3860 = vmatprep.mubr.f32.mxu0 0.0
  %3861 = vmatmul.mubr.f32.gmra.mxu0 %v173
  %v3862 = vpop.f32.mrf.mxu0
  %v3863 = vadd.f32 %v3413, %v3862
  %v3864 = vpop.f32.mrf.mxu0
  %3865 = vdwg.mxu0
  %v3866 = vadd.f32 %v3708, %v3483
  %v3867 = vadd.f32 %v3713, %v3488
  %v3868 = vadd.f32 %v3718, %v3493
  %v3869 = vadd.f32 %v3723, %v3498
  %v3870 = vadd.f32 %v3728, %v3503
  %v3871 = vadd.f32 %v3733, %v3508
  %v3872 = vadd.f32 %v3738, %v3513
  %v3873 = vadd.f32 %v3743, %v3518
  %v3874 = vadd.f32 %v3748, %v3523
  %v3875 = vadd.f32 %v3753, %v3528
  %v3876 = vadd.f32 %v3758, %v3533
  %v3877 = vadd.f32 %v3763, %v3538
  %v3878 = vadd.f32 %v3768, %v3543
  %v3879 = vadd.f32 %v3773, %v3548
  %v3880 = vadd.f32 %v3778, %v3553
  %v3881 = vadd.f32 %v3783, %v3558
  %v3882 = vadd.f32 %v3788, %v3563
  %v3883 = vadd.f32 %v3793, %v3568
  %v3884 = vadd.f32 %v3798, %v3573
  %v3885 = vadd.f32 %v3803, %v3578
  %v3886 = vadd.f32 %v3808, %v3583
  %v3887 = vadd.f32 %v3813, %v3588
  %v3888 = vadd.f32 %v3818, %v3593
  %v3889 = vadd.f32 %v3823, %v3598
  %v3890 = vadd.f32 %v3828, %v3603
  %v3891 = vadd.f32 %v3833, %v3608
  %v3892 = vadd.f32 %v3838, %v3613
  %v3893 = vadd.f32 %v3843, %v3618
  %v3894 = vadd.f32 %v3848, %v3623
  %v3895 = vadd.f32 %v3853, %v3628
  %v3896 = vadd.f32 %v3858, %v3633
  %v3897 = vadd.f32 %v3863, %v3638
  %vm3898 = vcmp.gt.f32.partialorder %v3866, 0.0
  %vm3899 = vcmp.gt.f32.partialorder %v3867, 0.0
  %vm3900 = vcmp.gt.f32.partialorder %v3868, 0.0
  %vm3901 = vcmp.gt.f32.partialorder %v3869, 0.0
  %vm3902 = vcmp.gt.f32.partialorder %v3870, 0.0
  %vm3903 = vcmp.gt.f32.partialorder %v3871, 0.0
  %vm3904 = vcmp.gt.f32.partialorder %v3872, 0.0
  %vm3905 = vcmp.gt.f32.partialorder %v3873, 0.0
  %vm3906 = vcmp.gt.f32.partialorder %v3874, 0.0
  %vm3907 = vcmp.gt.f32.partialorder %v3875, 0.0
  %vm3908 = vcmp.gt.f32.partialorder %v3876, 0.0
  %vm3909 = vcmp.gt.f32.partialorder %v3877, 0.0
  %vm3910 = vcmp.gt.f32.partialorder %v3878, 0.0
  %vm3911 = vcmp.gt.f32.partialorder %v3879, 0.0
  %vm3912 = vcmp.gt.f32.partialorder %v3880, 0.0
  %vm3913 = vcmp.gt.f32.partialorder %v3881, 0.0
  %vm3914 = vcmp.gt.f32.partialorder %v3882, 0.0
  %vm3915 = vcmp.gt.f32.partialorder %v3883, 0.0
  %vm3916 = vcmp.gt.f32.partialorder %v3884, 0.0
  %vm3917 = vcmp.gt.f32.partialorder %v3885, 0.0
  %vm3918 = vcmp.gt.f32.partialorder %v3886, 0.0
  %vm3919 = vcmp.gt.f32.partialorder %v3887, 0.0
  %vm3920 = vcmp.gt.f32.partialorder %v3888, 0.0
  %vm3921 = vcmp.gt.f32.partialorder %v3889, 0.0
  %vm3922 = vcmp.gt.f32.partialorder %v3890, 0.0
  %vm3923 = vcmp.gt.f32.partialorder %v3891, 0.0
  %vm3924 = vcmp.gt.f32.partialorder %v3892, 0.0
  %vm3925 = vcmp.gt.f32.partialorder %v3893, 0.0
  %vm3926 = vcmp.gt.f32.partialorder %v3894, 0.0
  %vm3927 = vcmp.gt.f32.partialorder %v3895, 0.0
  %vm3928 = vcmp.gt.f32.partialorder %v3896, 0.0
  %vm3929 = vcmp.gt.f32.partialorder %v3897, 0.0
  %v3930 = vmul.f32 %v3866, 0.2
  %v3931 = vmul.f32 %v3867, 0.2
  %v3932 = vmul.f32 %v3868, 0.2
  %v3933 = vmul.f32 %v3869, 0.2
  %v3934 = vmul.f32 %v3870, 0.2
  %v3935 = vmul.f32 %v3871, 0.2
  %v3936 = vmul.f32 %v3872, 0.2
  %v3937 = vmul.f32 %v3873, 0.2
  %v3938 = vmul.f32 %v3874, 0.2
  %v3939 = vmul.f32 %v3875, 0.2
  %v3940 = vmul.f32 %v3876, 0.2
  %v3941 = vmul.f32 %v3877, 0.2
  %v3942 = vmul.f32 %v3878, 0.2
  %v3943 = vmul.f32 %v3879, 0.2
  %v3944 = vmul.f32 %v3880, 0.2
  %v3945 = vmul.f32 %v3881, 0.2
  %v3946 = vmul.f32 %v3882, 0.2
  %v3947 = vmul.f32 %v3883, 0.2
  %v3948 = vmul.f32 %v3884, 0.2
  %v3949 = vmul.f32 %v3885, 0.2
  %v3950 = vmul.f32 %v3886, 0.2
  %v3951 = vmul.f32 %v3887, 0.2
  %v3952 = vmul.f32 %v3888, 0.2
  %v3953 = vmul.f32 %v3889, 0.2
  %v3954 = vmul.f32 %v3890, 0.2
  %v3955 = vmul.f32 %v3891, 0.2
  %v3956 = vmul.f32 %v3892, 0.2
  %v3957 = vmul.f32 %v3893, 0.2
  %v3958 = vmul.f32 %v3894, 0.2
  %v3959 = vmul.f32 %v3895, 0.2
  %v3960 = vmul.f32 %v3896, 0.2
  %v3961 = vmul.f32 %v3897, 0.2
  %v3962 = vsel %vm3898, %v3866, %v3930
  %v3963 = vsel %vm3899, %v3867, %v3931
  %v3964 = vsel %vm3900, %v3868, %v3932
  %v3965 = vsel %vm3901, %v3869, %v3933
  %v3966 = vsel %vm3902, %v3870, %v3934
  %v3967 = vsel %vm3903, %v3871, %v3935
  %v3968 = vsel %vm3904, %v3872, %v3936
  %v3969 = vsel %vm3905, %v3873, %v3937
  %v3970 = vsel %vm3906, %v3874, %v3938
  %v3971 = vsel %vm3907, %v3875, %v3939
  %v3972 = vsel %vm3908, %v3876, %v3940
  %v3973 = vsel %vm3909, %v3877, %v3941
  %v3974 = vsel %vm3910, %v3878, %v3942
  %v3975 = vsel %vm3911, %v3879, %v3943
  %v3976 = vsel %vm3912, %v3880, %v3944
  %v3977 = vsel %vm3913, %v3881, %v3945
  %v3978 = vsel %vm3914, %v3882, %v3946
  %v3979 = vsel %vm3915, %v3883, %v3947
  %v3980 = vsel %vm3916, %v3884, %v3948
  %v3981 = vsel %vm3917, %v3885, %v3949
  %v3982 = vsel %vm3918, %v3886, %v3950
  %v3983 = vsel %vm3919, %v3887, %v3951
  %v3984 = vsel %vm3920, %v3888, %v3952
  %v3985 = vsel %vm3921, %v3889, %v3953
  %v3986 = vsel %vm3922, %v3890, %v3954
  %v3987 = vsel %vm3923, %v3891, %v3955
  %v3988 = vsel %vm3924, %v3892, %v3956
  %v3989 = vsel %vm3925, %v3893, %v3957
  %v3990 = vsel %vm3926, %v3894, %v3958
  %v3991 = vsel %vm3927, %v3895, %v3959
  %v3992 = vsel %vm3928, %v3896, %v3960
  %v3993 = vsel %vm3929, %v3897, %v3961
  %v3995 = vsel %vm1477, %v3962, 0
  %v3998 = vsel %vm1477, %v3963, 0
  %v4001 = vsel %vm1477, %v3964, 0
  %v4004 = vsel %vm1477, %v3965, 0
  %v4007 = vsel %vm1477, %v3966, 0
  %v4010 = vsel %vm1477, %v3967, 0
  %v4013 = vsel %vm1477, %v3968, 0
  %v4016 = vsel %vm1477, %v3969, 0
  %v4019 = vsel %vm1477, %v3970, 0
  %v4022 = vsel %vm1477, %v3971, 0
  %v4025 = vsel %vm1477, %v3972, 0
  %v4028 = vsel %vm1477, %v3973, 0
  %v4031 = vsel %vm1477, %v3974, 0
  %v4034 = vsel %vm1477, %v3975, 0
  %v4037 = vsel %vm1477, %v3976, 0
  %v4040 = vsel %vm1477, %v3977, 0
  %v4043 = vsel %vm1477, %v3978, 0
  %v4046 = vsel %vm1477, %v3979, 0
  %v4049 = vsel %vm1477, %v3980, 0
  %v4052 = vsel %vm1477, %v3981, 0
  %v4055 = vsel %vm1477, %v3982, 0
  %v4058 = vsel %vm1477, %v3983, 0
  %v4061 = vsel %vm1477, %v3984, 0
  %v4064 = vsel %vm1477, %v3985, 0
  %v4067 = vsel %vm1477, %v3986, 0
  %v4070 = vsel %vm1477, %v3987, 0
  %v4073 = vsel %vm1477, %v3988, 0
  %v4076 = vsel %vm1477, %v3989, 0
  %v4079 = vsel %vm1477, %v3990, 0
  %v4082 = vsel %vm1477, %v3991, 0
  %v4085 = vsel %vm1477, %v3992, 0
  %v4088 = vsel %vm1477, %v3993, 0
  %4090 = vmatprep.subr.mxu0 0.0
  %4091 = vmatpush1.msra.mxu0 0.0
  %4092 = vmatprep.subr.mxu0 0.0
  %4093 = vmatpush1.msra.mxu0 0.0
  %4094 = vmatprep.subr.mxu0 0.0
  %4095 = vmatpush1.msra.mxu0 0.0
  %4096 = vmatprep.subr.mxu0 0.0
  %4097 = vmatpush1.msra.mxu0 0.0
  %4098 = vmatprep.subr.mxu0 0.0
  %4099 = vmatpush1.msra.mxu0 0.0
  %4100 = vmatprep.subr.mxu0 0.0
  %4101 = vmatpush1.msra.mxu0 0.0
  %4102 = vmatprep.subr.mxu0 0.0
  %4103 = vmatpush1.msra.mxu0 0.0
  %4104 = vmatprep.subr.mxu0 0.0
  %4105 = vmatpush1.msra.mxu0 0.0
  %4106 = vmatprep.subr.mxu0 0.0
  %4107 = vmatpush1.msra.mxu0 0.0
  %4108 = vmatprep.subr.mxu0 0.0
  %4109 = vmatpush1.msra.mxu0 0.0
  %4110 = vmatprep.subr.mxu0 0.0
  %4111 = vmatpush1.msra.mxu0 0.0
  %4112 = vmatprep.subr.mxu0 0.0
  %4113 = vmatpush1.msra.mxu0 0.0
  %4114 = vmatprep.subr.mxu0 0.0
  %4115 = vmatpush1.msra.mxu0 %v3018
  %4116 = vmatprep.subr.mxu0 0.0
  %4117 = vmatpush1.msra.mxu0 %v3017
  %4118 = vmatprep.subr.mxu0 0.0
  %4119 = vmatpush1.msra.mxu0 %v3016
  %4120 = vmatprep.subr.mxu0 0.0
  %4121 = vmatpush1.msra.mxu0 %v3015
  %4122 = vmatprep.subr.mxu0 0.0
  %4123 = vmatpush2.msra.mxu0 0.0
  %4124 = vmatprep.subr.mxu0 0.0
  %4125 = vmatpush2.msra.mxu0 0.0
  %4126 = vmatprep.subr.mxu0 0.0
  %4127 = vmatpush2.msra.mxu0 0.0
  %4128 = vmatprep.subr.mxu0 0.0
  %4129 = vmatpush2.msra.mxu0 0.0
  %4130 = vmatprep.subr.mxu0 0.0
  %4131 = vmatpush2.msra.mxu0 0.0
  %4132 = vmatprep.subr.mxu0 0.0
  %4133 = vmatpush2.msra.mxu0 0.0
  %4134 = vmatprep.subr.mxu0 0.0
  %4135 = vmatpush2.msra.mxu0 0.0
  %4136 = vmatprep.subr.mxu0 0.0
  %4137 = vmatpush2.msra.mxu0 0.0
  %4138 = vmatprep.subr.mxu0 0.0
  %4139 = vmatpush2.msra.mxu0 0.0
  %4140 = vmatprep.subr.mxu0 0.0
  %4141 = vmatpush2.msra.mxu0 0.0
  %4142 = vmatprep.subr.mxu0 0.0
  %4143 = vmatpush2.msra.mxu0 0.0
  %4144 = vmatprep.subr.mxu0 0.0
  %4145 = vmatpush2.msra.mxu0 0.0
  %4146 = vmatprep.subr.mxu0 0.0
  %4147 = vmatpush2.msra.mxu0 0.0
  %4148 = vmatprep.subr.mxu0 0.0
  %4149 = vmatpush2.msra.mxu0 0.0
  %4150 = vmatprep.subr.mxu0 0.0
  %4151 = vmatpush2.msra.mxu0 0.0
  %4152 = vmatprep.subr.mxu0 0.0
  %4153 = vmatpush2.msra.mxu0 0.0
  %4154 = vmatprep.mubr.f32.mxu0 0.0
  %4155 = vmatmul.mubr.f32.gmra.mxu0 %v3995
  %v4156 = vpop.f32.mrf.mxu0
  %v4157 = vadd.f32 0.0, %v4156
  %v4158 = vpop.f32.mrf.mxu0
  %4159 = vmatprep.mubr.f32.mxu0 0.0
  %4160 = vmatmul.mubr.f32.gmra.mxu0 %v3998
  %v4161 = vpop.f32.mrf.mxu0
  %v4162 = vadd.f32 0.0, %v4161
  %v4163 = vpop.f32.mrf.mxu0
  %4164 = vmatprep.mubr.f32.mxu0 0.0
  %4165 = vmatmul.mubr.f32.gmra.mxu0 %v4001
  %v4166 = vpop.f32.mrf.mxu0
  %v4167 = vadd.f32 0.0, %v4166
  %v4168 = vpop.f32.mrf.mxu0
  %4169 = vmatprep.mubr.f32.mxu0 0.0
  %4170 = vmatmul.mubr.f32.gmra.mxu0 %v4004
  %v4171 = vpop.f32.mrf.mxu0
  %v4172 = vadd.f32 0.0, %v4171
  %v4173 = vpop.f32.mrf.mxu0
  %4174 = vmatprep.mubr.f32.mxu0 0.0
  %4175 = vmatmul.mubr.f32.gmra.mxu0 %v4007
  %v4176 = vpop.f32.mrf.mxu0
  %v4177 = vadd.f32 0.0, %v4176
  %v4178 = vpop.f32.mrf.mxu0
  %4179 = vmatprep.mubr.f32.mxu0 0.0
  %4180 = vmatmul.mubr.f32.gmra.mxu0 %v4010
  %v4181 = vpop.f32.mrf.mxu0
  %v4182 = vadd.f32 0.0, %v4181
  %v4183 = vpop.f32.mrf.mxu0
  %4184 = vmatprep.mubr.f32.mxu0 0.0
  %4185 = vmatmul.mubr.f32.gmra.mxu0 %v4013
  %v4186 = vpop.f32.mrf.mxu0
  %v4187 = vadd.f32 0.0, %v4186
  %v4188 = vpop.f32.mrf.mxu0
  %4189 = vmatprep.mubr.f32.mxu0 0.0
  %4190 = vmatmul.mubr.f32.gmra.mxu0 %v4016
  %v4191 = vpop.f32.mrf.mxu0
  %v4192 = vadd.f32 0.0, %v4191
  %v4193 = vpop.f32.mrf.mxu0
  %4194 = vmatprep.mubr.f32.mxu0 0.0
  %4195 = vmatmul.mubr.f32.gmra.mxu0 %v4019
  %v4196 = vpop.f32.mrf.mxu0
  %v4197 = vadd.f32 0.0, %v4196
  %v4198 = vpop.f32.mrf.mxu0
  %4199 = vmatprep.mubr.f32.mxu0 0.0
  %4200 = vmatmul.mubr.f32.gmra.mxu0 %v4022
  %v4201 = vpop.f32.mrf.mxu0
  %v4202 = vadd.f32 0.0, %v4201
  %v4203 = vpop.f32.mrf.mxu0
  %4204 = vmatprep.mubr.f32.mxu0 0.0
  %4205 = vmatmul.mubr.f32.gmra.mxu0 %v4025
  %v4206 = vpop.f32.mrf.mxu0
  %v4207 = vadd.f32 0.0, %v4206
  %v4208 = vpop.f32.mrf.mxu0
  %4209 = vmatprep.mubr.f32.mxu0 0.0
  %4210 = vmatmul.mubr.f32.gmra.mxu0 %v4028
  %v4211 = vpop.f32.mrf.mxu0
  %v4212 = vadd.f32 0.0, %v4211
  %v4213 = vpop.f32.mrf.mxu0
  %4214 = vmatprep.mubr.f32.mxu0 0.0
  %4215 = vmatmul.mubr.f32.gmra.mxu0 %v4031
  %v4216 = vpop.f32.mrf.mxu0
  %v4217 = vadd.f32 0.0, %v4216
  %v4218 = vpop.f32.mrf.mxu0
  %4219 = vmatprep.mubr.f32.mxu0 0.0
  %4220 = vmatmul.mubr.f32.gmra.mxu0 %v4034
  %v4221 = vpop.f32.mrf.mxu0
  %v4222 = vadd.f32 0.0, %v4221
  %v4223 = vpop.f32.mrf.mxu0
  %4224 = vmatprep.mubr.f32.mxu0 0.0
  %4225 = vmatmul.mubr.f32.gmra.mxu0 %v4037
  %v4226 = vpop.f32.mrf.mxu0
  %v4227 = vadd.f32 0.0, %v4226
  %v4228 = vpop.f32.mrf.mxu0
  %4229 = vmatprep.mubr.f32.mxu0 0.0
  %4230 = vmatmul.mubr.f32.gmra.mxu0 %v4040
  %v4231 = vpop.f32.mrf.mxu0
  %v4232 = vadd.f32 0.0, %v4231
  %v4233 = vpop.f32.mrf.mxu0
  %4234 = vmatprep.mubr.f32.mxu0 0.0
  %4235 = vmatmul.mubr.f32.gmra.mxu0 %v4043
  %v4236 = vpop.f32.mrf.mxu0
  %v4237 = vadd.f32 0.0, %v4236
  %v4238 = vpop.f32.mrf.mxu0
  %4239 = vmatprep.mubr.f32.mxu0 0.0
  %4240 = vmatmul.mubr.f32.gmra.mxu0 %v4046
  %v4241 = vpop.f32.mrf.mxu0
  %v4242 = vadd.f32 0.0, %v4241
  %v4243 = vpop.f32.mrf.mxu0
  %4244 = vmatprep.mubr.f32.mxu0 0.0
  %4245 = vmatmul.mubr.f32.gmra.mxu0 %v4049
  %v4246 = vpop.f32.mrf.mxu0
  %v4247 = vadd.f32 0.0, %v4246
  %v4248 = vpop.f32.mrf.mxu0
  %4249 = vmatprep.mubr.f32.mxu0 0.0
  %4250 = vmatmul.mubr.f32.gmra.mxu0 %v4052
  %v4251 = vpop.f32.mrf.mxu0
  %v4252 = vadd.f32 0.0, %v4251
  %v4253 = vpop.f32.mrf.mxu0
  %4254 = vmatprep.mubr.f32.mxu0 0.0
  %4255 = vmatmul.mubr.f32.gmra.mxu0 %v4055
  %v4256 = vpop.f32.mrf.mxu0
  %v4257 = vadd.f32 0.0, %v4256
  %v4258 = vpop.f32.mrf.mxu0
  %4259 = vmatprep.mubr.f32.mxu0 0.0
  %4260 = vmatmul.mubr.f32.gmra.mxu0 %v4058
  %v4261 = vpop.f32.mrf.mxu0
  %v4262 = vadd.f32 0.0, %v4261
  %v4263 = vpop.f32.mrf.mxu0
  %4264 = vmatprep.mubr.f32.mxu0 0.0
  %4265 = vmatmul.mubr.f32.gmra.mxu0 %v4061
  %v4266 = vpop.f32.mrf.mxu0
  %v4267 = vadd.f32 0.0, %v4266
  %v4268 = vpop.f32.mrf.mxu0
  %4269 = vmatprep.mubr.f32.mxu0 0.0
  %4270 = vmatmul.mubr.f32.gmra.mxu0 %v4064
  %v4271 = vpop.f32.mrf.mxu0
  %v4272 = vadd.f32 0.0, %v4271
  %v4273 = vpop.f32.mrf.mxu0
  %4274 = vmatprep.mubr.f32.mxu0 0.0
  %4275 = vmatmul.mubr.f32.gmra.mxu0 %v4067
  %v4276 = vpop.f32.mrf.mxu0
  %v4277 = vadd.f32 0.0, %v4276
  %v4278 = vpop.f32.mrf.mxu0
  %4279 = vmatprep.mubr.f32.mxu0 0.0
  %4280 = vmatmul.mubr.f32.gmra.mxu0 %v4070
  %v4281 = vpop.f32.mrf.mxu0
  %v4282 = vadd.f32 0.0, %v4281
  %v4283 = vpop.f32.mrf.mxu0
  %4284 = vmatprep.mubr.f32.mxu0 0.0
  %4285 = vmatmul.mubr.f32.gmra.mxu0 %v4073
  %v4286 = vpop.f32.mrf.mxu0
  %v4287 = vadd.f32 0.0, %v4286
  %v4288 = vpop.f32.mrf.mxu0
  %4289 = vmatprep.mubr.f32.mxu0 0.0
  %4290 = vmatmul.mubr.f32.gmra.mxu0 %v4076
  %v4291 = vpop.f32.mrf.mxu0
  %v4292 = vadd.f32 0.0, %v4291
  %v4293 = vpop.f32.mrf.mxu0
  %4294 = vmatprep.mubr.f32.mxu0 0.0
  %4295 = vmatmul.mubr.f32.gmra.mxu0 %v4079
  %v4296 = vpop.f32.mrf.mxu0
  %v4297 = vadd.f32 0.0, %v4296
  %v4298 = vpop.f32.mrf.mxu0
  %4299 = vmatprep.mubr.f32.mxu0 0.0
  %4300 = vmatmul.mubr.f32.gmra.mxu0 %v4082
  %v4301 = vpop.f32.mrf.mxu0
  %v4302 = vadd.f32 0.0, %v4301
  %v4303 = vpop.f32.mrf.mxu0
  %4304 = vmatprep.mubr.f32.mxu0 0.0
  %4305 = vmatmul.mubr.f32.gmra.mxu0 %v4085
  %v4306 = vpop.f32.mrf.mxu0
  %v4307 = vadd.f32 0.0, %v4306
  %v4308 = vpop.f32.mrf.mxu0
  %4309 = vmatprep.mubr.f32.mxu0 0.0
  %4310 = vmatmul.mubr.f32.gmra.mxu0 %v4088
  %v4311 = vpop.f32.mrf.mxu0
  %v4312 = vadd.f32 0.0, %v4311
  %v4313 = vpop.f32.mrf.mxu0
  %4314 = vdwg.mxu0
  %v4315 = vsel %vm1799, %v4157, -inf
  %v4316 = vsel %vm1799, %v4162, -inf
  %v4317 = vsel %vm1799, %v4167, -inf
  %v4318 = vsel %vm1799, %v4172, -inf
  %v4319 = vsel %vm1799, %v4177, -inf
  %v4320 = vmax.f32 %v4315, %v4319
  %v4321 = vsel %vm1799, %v4182, -inf
  %v4322 = vmax.f32 %v4316, %v4321
  %v4323 = vsel %vm1799, %v4187, -inf
  %v4324 = vmax.f32 %v4317, %v4323
  %v4325 = vsel %vm1799, %v4192, -inf
  %v4326 = vmax.f32 %v4318, %v4325
  %v4327 = vsel %vm1799, %v4197, -inf
  %v4328 = vmax.f32 %v4320, %v4327
  %v4329 = vsel %vm1799, %v4202, -inf
  %v4330 = vmax.f32 %v4322, %v4329
  %v4331 = vsel %vm1799, %v4207, -inf
  %v4332 = vmax.f32 %v4324, %v4331
  %v4333 = vsel %vm1799, %v4212, -inf
  %v4334 = vmax.f32 %v4326, %v4333
  %v4335 = vsel %vm1799, %v4217, -inf
  %v4336 = vmax.f32 %v4328, %v4335
  %v4337 = vsel %vm1799, %v4222, -inf
  %v4338 = vmax.f32 %v4330, %v4337
  %v4339 = vsel %vm1799, %v4227, -inf
  %v4340 = vmax.f32 %v4332, %v4339
  %v4341 = vsel %vm1799, %v4232, -inf
  %v4342 = vmax.f32 %v4334, %v4341
  %v4343 = vsel %vm1799, %v4237, -inf
  %v4344 = vmax.f32 %v4336, %v4343
  %v4345 = vsel %vm1799, %v4242, -inf
  %v4346 = vmax.f32 %v4338, %v4345
  %v4347 = vsel %vm1799, %v4247, -inf
  %v4348 = vmax.f32 %v4340, %v4347
  %v4349 = vsel %vm1799, %v4252, -inf
  %v4350 = vmax.f32 %v4342, %v4349
  %v4351 = vsel %vm1799, %v4257, -inf
  %v4352 = vmax.f32 %v4344, %v4351
  %v4353 = vsel %vm1799, %v4262, -inf
  %v4354 = vmax.f32 %v4346, %v4353
  %v4355 = vsel %vm1799, %v4267, -inf
  %v4356 = vmax.f32 %v4348, %v4355
  %v4357 = vsel %vm1799, %v4272, -inf
  %v4358 = vmax.f32 %v4350, %v4357
  %v4359 = vsel %vm1799, %v4277, -inf
  %v4360 = vmax.f32 %v4352, %v4359
  %v4361 = vsel %vm1799, %v4282, -inf
  %v4362 = vmax.f32 %v4354, %v4361
  %v4363 = vsel %vm1799, %v4287, -inf
  %v4364 = vmax.f32 %v4356, %v4363
  %v4365 = vsel %vm1799, %v4292, -inf
  %v4366 = vmax.f32 %v4358, %v4365
  %v4367 = vsel %vm1799, %v4297, -inf
  %v4368 = vmax.f32 %v4360, %v4367
  %v4369 = vsel %vm1799, %v4302, -inf
  %v4370 = vmax.f32 %v4362, %v4369
  %v4371 = vsel %vm1799, %v4307, -inf
  %v4372 = vmax.f32 %v4364, %v4371
  %v4373 = vsel %vm1799, %v4312, -inf
  %v4374 = vmax.f32 %v4366, %v4373
  %v4375 = vmax.f32 %v4368, %v4370
  %v4376 = vmax.f32 %v4372, %v4374
  %v4377 = vmax.f32 %v4375, %v4376
  %v4378 = vrot.slane %v4377, 4
  %v4379 = vmax.f32 %v4377, %v4378
  %v4380 = vrot.slane %v4379, 2
  %v4381 = vmax.f32 %v4379, %v4380
  %v4382 = vrot.slane %v4381, 1
  %v4383 = vmax.f32 %v4381, %v4382
  %v4384 = vsub.f32 %v4157, %v4383
  %v4385 = vsub.f32 %v4162, %v4383
  %v4386 = vsub.f32 %v4167, %v4383
  %v4387 = vsub.f32 %v4172, %v4383
  %v4388 = vsub.f32 %v4177, %v4383
  %v4389 = vsub.f32 %v4182, %v4383
  %v4390 = vsub.f32 %v4187, %v4383
  %v4391 = vsub.f32 %v4192, %v4383
  %v4392 = vsub.f32 %v4197, %v4383
  %v4393 = vsub.f32 %v4202, %v4383
  %v4394 = vsub.f32 %v4207, %v4383
  %v4395 = vsub.f32 %v4212, %v4383
  %v4396 = vsub.f32 %v4217, %v4383
  %v4397 = vsub.f32 %v4222, %v4383
  %v4398 = vsub.f32 %v4227, %v4383
  %v4399 = vsub.f32 %v4232, %v4383
  %v4400 = vsub.f32 %v4237, %v4383
  %v4401 = vsub.f32 %v4242, %v4383
  %v4402 = vsub.f32 %v4247, %v4383
  %v4403 = vsub.f32 %v4252, %v4383
  %v4404 = vsub.f32 %v4257, %v4383
  %v4405 = vsub.f32 %v4262, %v4383
  %v4406 = vsub.f32 %v4267, %v4383
  %v4407 = vsub.f32 %v4272, %v4383
  %v4408 = vsub.f32 %v4277, %v4383
  %v4409 = vsub.f32 %v4282, %v4383
  %v4410 = vsub.f32 %v4287, %v4383
  %v4411 = vsub.f32 %v4292, %v4383
  %v4412 = vsub.f32 %v4297, %v4383
  %v4413 = vsub.f32 %v4302, %v4383
  %v4414 = vsub.f32 %v4307, %v4383
  %v4415 = vsub.f32 %v4312, %v4383
  %v4416 = vmul.f32 %v4384, 1.442695
  %v4417 = vpow.pop %v4416
  %v4418 = vmul.f32 %v4385, 1.442695
  %v4419 = vpow.pop %v4418
  %v4420 = vmul.f32 %v4386, 1.442695
  %v4421 = vpow.pop %v4420
  %v4422 = vmul.f32 %v4387, 1.442695
  %v4423 = vpow.pop %v4422
  %v4424 = vmul.f32 %v4388, 1.442695
  %v4425 = vpow.pop %v4424
  %v4426 = vmul.f32 %v4389, 1.442695
  %v4427 = vpow.pop %v4426
  %v4428 = vmul.f32 %v4390, 1.442695
  %v4429 = vpow.pop %v4428
  %v4430 = vmul.f32 %v4391, 1.442695
  %v4431 = vpow.pop %v4430
  %v4432 = vmul.f32 %v4392, 1.442695
  %v4433 = vpow.pop %v4432
  %v4434 = vmul.f32 %v4393, 1.442695
  %v4435 = vpow.pop %v4434
  %v4436 = vmul.f32 %v4394, 1.442695
  %v4437 = vpow.pop %v4436
  %v4438 = vmul.f32 %v4395, 1.442695
  %v4439 = vpow.pop %v4438
  %v4440 = vmul.f32 %v4396, 1.442695
  %v4441 = vpow.pop %v4440
  %v4442 = vmul.f32 %v4397, 1.442695
  %v4443 = vpow.pop %v4442
  %v4444 = vmul.f32 %v4398, 1.442695
  %v4445 = vpow.pop %v4444
  %v4446 = vmul.f32 %v4399, 1.442695
  %v4447 = vpow.pop %v4446
  %v4448 = vmul.f32 %v4400, 1.442695
  %v4449 = vpow.pop %v4448
  %v4450 = vmul.f32 %v4401, 1.442695
  %v4451 = vpow.pop %v4450
  %v4452 = vmul.f32 %v4402, 1.442695
  %v4453 = vpow.pop %v4452
  %v4454 = vmul.f32 %v4403, 1.442695
  %v4455 = vpow.pop %v4454
  %v4456 = vmul.f32 %v4404, 1.442695
  %v4457 = vpow.pop %v4456
  %v4458 = vmul.f32 %v4405, 1.442695
  %v4459 = vpow.pop %v4458
  %v4460 = vmul.f32 %v4406, 1.442695
  %v4461 = vpow.pop %v4460
  %v4462 = vmul.f32 %v4407, 1.442695
  %v4463 = vpow.pop %v4462
  %v4464 = vmul.f32 %v4408, 1.442695
  %v4465 = vpow.pop %v4464
  %v4466 = vmul.f32 %v4409, 1.442695
  %v4467 = vpow.pop %v4466
  %v4468 = vmul.f32 %v4410, 1.442695
  %v4469 = vpow.pop %v4468
  %v4470 = vmul.f32 %v4411, 1.442695
  %v4471 = vpow.pop %v4470
  %v4472 = vmul.f32 %v4412, 1.442695
  %v4473 = vpow.pop %v4472
  %v4474 = vmul.f32 %v4413, 1.442695
  %v4475 = vpow.pop %v4474
  %v4476 = vmul.f32 %v4414, 1.442695
  %v4477 = vpow.pop %v4476
  %v4478 = vmul.f32 %v4415, 1.442695
  %v4479 = vpow.pop %v4478
  %v4480 = vmul.f32 %v4417, %v1968
  %v4481 = vmul.f32 %v4419, %v1973
  %v4482 = vmul.f32 %v4421, %v1978
  %v4483 = vmul.f32 %v4423, %v1983
  %v4484 = vmul.f32 %v4425, %v1988
  %v4485 = vmul.f32 %v4427, %v1993
  %v4486 = vmul.f32 %v4429, %v1998
  %v4487 = vmul.f32 %v4431, %v2003
  %v4488 = vmul.f32 %v4433, %v2008
  %v4489 = vmul.f32 %v4435, %v2013
  %v4490 = vmul.f32 %v4437, %v2018
  %v4491 = vmul.f32 %v4439, %v2023
  %v4492 = vmul.f32 %v4441, %v2028
  %v4493 = vmul.f32 %v4443, %v2033
  %v4494 = vmul.f32 %v4445, %v2038
  %v4495 = vmul.f32 %v4447, %v2043
  %v4496 = vmul.f32 %v4449, %v2048
  %v4497 = vmul.f32 %v4451, %v2053
  %v4498 = vmul.f32 %v4453, %v2058
  %v4499 = vmul.f32 %v4455, %v2063
  %v4500 = vmul.f32 %v4457, %v2068
  %v4501 = vmul.f32 %v4459, %v2073
  %v4502 = vmul.f32 %v4461, %v2078
  %v4503 = vmul.f32 %v4463, %v2083
  %v4504 = vmul.f32 %v4465, %v2088
  %v4505 = vmul.f32 %v4467, %v2093
  %v4506 = vmul.f32 %v4469, %v2098
  %v4507 = vmul.f32 %v4471, %v2103
  %v4508 = vmul.f32 %v4473, %v2108
  %v4509 = vmul.f32 %v4475, %v2113
  %v4510 = vmul.f32 %v4477, %v2118
  %v4511 = vmul.f32 %v4479, %v2123
  %4512 = vmatprep.subr.mxu0 0.0
  %4513 = vmatpush1.msra.mxu0 %v4495
  %4514 = vmatprep.subr.mxu0 0.0
  %4515 = vmatpush1.msra.mxu0 %v4494
  %4516 = vmatprep.subr.mxu0 0.0
  %4517 = vmatpush1.msra.mxu0 %v4493
  %4518 = vmatprep.subr.mxu0 0.0
  %4519 = vmatpush1.msra.mxu0 %v4492
  %4520 = vmatprep.subr.mxu0 0.0
  %4521 = vmatpush1.msra.mxu0 %v4491
  %4522 = vmatprep.subr.mxu0 0.0
  %4523 = vmatpush1.msra.mxu0 %v4490
  %4524 = vmatprep.subr.mxu0 0.0
  %4525 = vmatpush1.msra.mxu0 %v4489
  %4526 = vmatprep.subr.mxu0 0.0
  %4527 = vmatpush1.msra.mxu0 %v4488
  %4528 = vmatprep.subr.mxu0 0.0
  %4529 = vmatpush1.msra.mxu0 %v4487
  %4530 = vmatprep.subr.mxu0 0.0
  %4531 = vmatpush1.msra.mxu0 %v4486
  %4532 = vmatprep.subr.mxu0 0.0
  %4533 = vmatpush1.msra.mxu0 %v4485
  %4534 = vmatprep.subr.mxu0 0.0
  %4535 = vmatpush1.msra.mxu0 %v4484
  %4536 = vmatprep.subr.mxu0 0.0
  %4537 = vmatpush1.msra.mxu0 %v4483
  %4538 = vmatprep.subr.mxu0 0.0
  %4539 = vmatpush1.msra.mxu0 %v4482
  %4540 = vmatprep.subr.mxu0 0.0
  %4541 = vmatpush1.msra.mxu0 %v4481
  %4542 = vmatprep.subr.mxu0 0.0
  %4543 = vmatpush1.msra.mxu0 %v4480
  %4544 = vmatprep.subr.mxu0 0.0
  %4545 = vmatpush2.msra.mxu0 %v4511
  %4546 = vmatprep.subr.mxu0 0.0
  %4547 = vmatpush2.msra.mxu0 %v4510
  %4548 = vmatprep.subr.mxu0 0.0
  %4549 = vmatpush2.msra.mxu0 %v4509
  %4550 = vmatprep.subr.mxu0 0.0
  %4551 = vmatpush2.msra.mxu0 %v4508
  %4552 = vmatprep.subr.mxu0 0.0
  %4553 = vmatpush2.msra.mxu0 %v4507
  %4554 = vmatprep.subr.mxu0 0.0
  %4555 = vmatpush2.msra.mxu0 %v4506
  %4556 = vmatprep.subr.mxu0 0.0
  %4557 = vmatpush2.msra.mxu0 %v4505
  %4558 = vmatprep.subr.mxu0 0.0
  %4559 = vmatpush2.msra.mxu0 %v4504
  %4560 = vmatprep.subr.mxu0 0.0
  %4561 = vmatpush2.msra.mxu0 %v4503
  %4562 = vmatprep.subr.mxu0 0.0
  %4563 = vmatpush2.msra.mxu0 %v4502
  %4564 = vmatprep.subr.mxu0 0.0
  %4565 = vmatpush2.msra.mxu0 %v4501
  %4566 = vmatprep.subr.mxu0 0.0
  %4567 = vmatpush2.msra.mxu0 %v4500
  %4568 = vmatprep.subr.mxu0 0.0
  %4569 = vmatpush2.msra.mxu0 %v4499
  %4570 = vmatprep.subr.mxu0 0.0
  %4571 = vmatpush2.msra.mxu0 %v4498
  %4572 = vmatprep.subr.mxu0 0.0
  %4573 = vmatpush2.msra.mxu0 %v4497
  %4574 = vmatprep.subr.mxu0 0.0
  %4575 = vmatpush2.msra.mxu0 %v4496
  %4576 = vmatprep.mubr.f32.mxu0 %v271
  %4577 = vmatmul.mubr.f32.gmra.mxu0 %v270
  %v4578 = vpop.f32.mrf.mxu0
  %v4579 = vadd.f32 0.0, %v4578
  %v4580 = vpop.f32.mrf.mxu0
  %4581 = vmatprep.mubr.f32.mxu0 %v273
  %4582 = vmatmul.mubr.f32.gmra.mxu0 %v272
  %v4583 = vpop.f32.mrf.mxu0
  %v4584 = vadd.f32 0.0, %v4583
  %v4585 = vpop.f32.mrf.mxu0
  %4586 = vdwg.mxu0
  %v4587 = vrcp.pop %v4579
  %v4588 = vmul.f32 1.0, %v4587
  %v4589 = vrcp.pop %v4584
  %v4590 = vmul.f32 1.0, %v4589
  %4591 = vmatprep.subr.mxu0 0.0
  %4592 = vmatpush1.msra.mxu0 0.0
  %4593 = vmatprep.subr.mxu0 0.0
  %4594 = vmatpush1.msra.mxu0 0.0
  %4595 = vmatprep.subr.mxu0 0.0
  %4596 = vmatpush1.msra.mxu0 0.0
  %4597 = vmatprep.subr.mxu0 0.0
  %4598 = vmatpush1.msra.mxu0 0.0
  %4599 = vmatprep.subr.mxu0 0.0
  %4600 = vmatpush1.msra.mxu0 0.0
  %4601 = vmatprep.subr.mxu0 0.0
  %4602 = vmatpush1.msra.mxu0 0.0
  %4603 = vmatprep.subr.mxu0 0.0
  %4604 = vmatpush1.msra.mxu0 0.0
  %4605 = vmatprep.subr.mxu0 0.0
  %4606 = vmatpush1.msra.mxu0 0.0
  %4607 = vmatprep.subr.mxu0 0.0
  %4608 = vmatpush1.msra.mxu0 0.0
  %4609 = vmatprep.subr.mxu0 0.0
  %4610 = vmatpush1.msra.mxu0 0.0
  %4611 = vmatprep.subr.mxu0 0.0
  %4612 = vmatpush1.msra.mxu0 0.0
  %4613 = vmatprep.subr.mxu0 0.0
  %4614 = vmatpush1.msra.mxu0 0.0
  %4615 = vmatprep.subr.mxu0 0.0
  %4616 = vmatpush1.msra.mxu0 0.0
  %4617 = vmatprep.subr.mxu0 0.0
  %4618 = vmatpush1.msra.mxu0 0.0
  %4619 = vmatprep.subr.mxu0 0.0
  %4620 = vmatpush1.msra.mxu0 %v4590
  %4621 = vmatprep.subr.mxu0 0.0
  %4622 = vmatpush1.msra.mxu0 %v4588
  %4623 = vmatprep.subr.mxu0 0.0
  %4624 = vmatpush2.msra.mxu0 0.0
  %4625 = vmatprep.subr.mxu0 0.0
  %4626 = vmatpush2.msra.mxu0 0.0
  %4627 = vmatprep.subr.mxu0 0.0
  %4628 = vmatpush2.msra.mxu0 0.0
  %4629 = vmatprep.subr.mxu0 0.0
  %4630 = vmatpush2.msra.mxu0 0.0
  %4631 = vmatprep.subr.mxu0 0.0
  %4632 = vmatpush2.msra.mxu0 0.0
  %4633 = vmatprep.subr.mxu0 0.0
  %4634 = vmatpush2.msra.mxu0 0.0
  %4635 = vmatprep.subr.mxu0 0.0
  %4636 = vmatpush2.msra.mxu0 0.0
  %4637 = vmatprep.subr.mxu0 0.0
  %4638 = vmatpush2.msra.mxu0 0.0
  %4639 = vmatprep.subr.mxu0 0.0
  %4640 = vmatpush2.msra.mxu0 0.0
  %4641 = vmatprep.subr.mxu0 0.0
  %4642 = vmatpush2.msra.mxu0 0.0
  %4643 = vmatprep.subr.mxu0 0.0
  %4644 = vmatpush2.msra.mxu0 0.0
  %4645 = vmatprep.subr.mxu0 0.0
  %4646 = vmatpush2.msra.mxu0 0.0
  %4647 = vmatprep.subr.mxu0 0.0
  %4648 = vmatpush2.msra.mxu0 0.0
  %4649 = vmatprep.subr.mxu0 0.0
  %4650 = vmatpush2.msra.mxu0 0.0
  %4651 = vmatprep.subr.mxu0 0.0
  %4652 = vmatpush2.msra.mxu0 0.0
  %4653 = vmatprep.subr.mxu0 0.0
  %4654 = vmatpush2.msra.mxu0 0.0
  %4655 = vmatprep.mubr.f32.mxu0 0.0
  %4656 = vmatmul.mubr.f32.gmra.mxu0 %v804
  %v4657 = vpop.f32.mrf.mxu0
  %v4658 = vadd.f32 0.0, %v4657
  %v4659 = vpop.f32.mrf.mxu0
  %4660 = vmatprep.mubr.f32.mxu0 0.0
  %4661 = vmatmul.mubr.f32.gmra.mxu0 %v807
  %v4662 = vpop.f32.mrf.mxu0
  %v4663 = vadd.f32 0.0, %v4662
  %v4664 = vpop.f32.mrf.mxu0
  %4665 = vmatprep.mubr.f32.mxu0 0.0
  %4666 = vmatmul.mubr.f32.gmra.mxu0 %v810
  %v4667 = vpop.f32.mrf.mxu0
  %v4668 = vadd.f32 0.0, %v4667
  %v4669 = vpop.f32.mrf.mxu0
  %4670 = vmatprep.mubr.f32.mxu0 0.0
  %4671 = vmatmul.mubr.f32.gmra.mxu0 %v813
  %v4672 = vpop.f32.mrf.mxu0
  %v4673 = vadd.f32 0.0, %v4672
  %v4674 = vpop.f32.mrf.mxu0
  %4675 = vmatprep.mubr.f32.mxu0 0.0
  %4676 = vmatmul.mubr.f32.gmra.mxu0 %v816
  %v4677 = vpop.f32.mrf.mxu0
  %v4678 = vadd.f32 0.0, %v4677
  %v4679 = vpop.f32.mrf.mxu0
  %4680 = vmatprep.mubr.f32.mxu0 0.0
  %4681 = vmatmul.mubr.f32.gmra.mxu0 %v819
  %v4682 = vpop.f32.mrf.mxu0
  %v4683 = vadd.f32 0.0, %v4682
  %v4684 = vpop.f32.mrf.mxu0
  %4685 = vmatprep.mubr.f32.mxu0 0.0
  %4686 = vmatmul.mubr.f32.gmra.mxu0 %v822
  %v4687 = vpop.f32.mrf.mxu0
  %v4688 = vadd.f32 0.0, %v4687
  %v4689 = vpop.f32.mrf.mxu0
  %4690 = vmatprep.mubr.f32.mxu0 0.0
  %4691 = vmatmul.mubr.f32.gmra.mxu0 %v825
  %v4692 = vpop.f32.mrf.mxu0
  %v4693 = vadd.f32 0.0, %v4692
  %v4694 = vpop.f32.mrf.mxu0
  %4695 = vmatprep.mubr.f32.mxu0 0.0
  %4696 = vmatmul.mubr.f32.gmra.mxu0 %v828
  %v4697 = vpop.f32.mrf.mxu0
  %v4698 = vadd.f32 0.0, %v4697
  %v4699 = vpop.f32.mrf.mxu0
  %4700 = vmatprep.mubr.f32.mxu0 0.0
  %4701 = vmatmul.mubr.f32.gmra.mxu0 %v831
  %v4702 = vpop.f32.mrf.mxu0
  %v4703 = vadd.f32 0.0, %v4702
  %v4704 = vpop.f32.mrf.mxu0
  %4705 = vmatprep.mubr.f32.mxu0 0.0
  %4706 = vmatmul.mubr.f32.gmra.mxu0 %v834
  %v4707 = vpop.f32.mrf.mxu0
  %v4708 = vadd.f32 0.0, %v4707
  %v4709 = vpop.f32.mrf.mxu0
  %4710 = vmatprep.mubr.f32.mxu0 0.0
  %4711 = vmatmul.mubr.f32.gmra.mxu0 %v837
  %v4712 = vpop.f32.mrf.mxu0
  %v4713 = vadd.f32 0.0, %v4712
  %v4714 = vpop.f32.mrf.mxu0
  %4715 = vmatprep.mubr.f32.mxu0 0.0
  %4716 = vmatmul.mubr.f32.gmra.mxu0 %v840
  %v4717 = vpop.f32.mrf.mxu0
  %v4718 = vadd.f32 0.0, %v4717
  %v4719 = vpop.f32.mrf.mxu0
  %4720 = vmatprep.mubr.f32.mxu0 0.0
  %4721 = vmatmul.mubr.f32.gmra.mxu0 %v843
  %v4722 = vpop.f32.mrf.mxu0
  %v4723 = vadd.f32 0.0, %v4722
  %v4724 = vpop.f32.mrf.mxu0
  %4725 = vmatprep.mubr.f32.mxu0 0.0
  %4726 = vmatmul.mubr.f32.gmra.mxu0 %v846
  %v4727 = vpop.f32.mrf.mxu0
  %v4728 = vadd.f32 0.0, %v4727
  %v4729 = vpop.f32.mrf.mxu0
  %4730 = vmatprep.mubr.f32.mxu0 0.0
  %4731 = vmatmul.mubr.f32.gmra.mxu0 %v849
  %v4732 = vpop.f32.mrf.mxu0
  %v4733 = vadd.f32 0.0, %v4732
  %v4734 = vpop.f32.mrf.mxu0
  %4735 = vmatprep.mubr.f32.mxu0 0.0
  %4736 = vmatmul.mubr.f32.gmra.mxu0 %v852
  %v4737 = vpop.f32.mrf.mxu0
  %v4738 = vadd.f32 0.0, %v4737
  %v4739 = vpop.f32.mrf.mxu0
  %4740 = vmatprep.mubr.f32.mxu0 0.0
  %4741 = vmatmul.mubr.f32.gmra.mxu0 %v855
  %v4742 = vpop.f32.mrf.mxu0
  %v4743 = vadd.f32 0.0, %v4742
  %v4744 = vpop.f32.mrf.mxu0
  %4745 = vmatprep.mubr.f32.mxu0 0.0
  %4746 = vmatmul.mubr.f32.gmra.mxu0 %v858
  %v4747 = vpop.f32.mrf.mxu0
  %v4748 = vadd.f32 0.0, %v4747
  %v4749 = vpop.f32.mrf.mxu0
  %4750 = vmatprep.mubr.f32.mxu0 0.0
  %4751 = vmatmul.mubr.f32.gmra.mxu0 %v861
  %v4752 = vpop.f32.mrf.mxu0
  %v4753 = vadd.f32 0.0, %v4752
  %v4754 = vpop.f32.mrf.mxu0
  %4755 = vmatprep.mubr.f32.mxu0 0.0
  %4756 = vmatmul.mubr.f32.gmra.mxu0 %v864
  %v4757 = vpop.f32.mrf.mxu0
  %v4758 = vadd.f32 0.0, %v4757
  %v4759 = vpop.f32.mrf.mxu0
  %4760 = vmatprep.mubr.f32.mxu0 0.0
  %4761 = vmatmul.mubr.f32.gmra.mxu0 %v867
  %v4762 = vpop.f32.mrf.mxu0
  %v4763 = vadd.f32 0.0, %v4762
  %v4764 = vpop.f32.mrf.mxu0
  %4765 = vmatprep.mubr.f32.mxu0 0.0
  %4766 = vmatmul.mubr.f32.gmra.mxu0 %v870
  %v4767 = vpop.f32.mrf.mxu0
  %v4768 = vadd.f32 0.0, %v4767
  %v4769 = vpop.f32.mrf.mxu0
  %4770 = vmatprep.mubr.f32.mxu0 0.0
  %4771 = vmatmul.mubr.f32.gmra.mxu0 %v873
  %v4772 = vpop.f32.mrf.mxu0
  %v4773 = vadd.f32 0.0, %v4772
  %v4774 = vpop.f32.mrf.mxu0
  %4775 = vmatprep.mubr.f32.mxu0 0.0
  %4776 = vmatmul.mubr.f32.gmra.mxu0 %v876
  %v4777 = vpop.f32.mrf.mxu0
  %v4778 = vadd.f32 0.0, %v4777
  %v4779 = vpop.f32.mrf.mxu0
  %4780 = vmatprep.mubr.f32.mxu0 0.0
  %4781 = vmatmul.mubr.f32.gmra.mxu0 %v879
  %v4782 = vpop.f32.mrf.mxu0
  %v4783 = vadd.f32 0.0, %v4782
  %v4784 = vpop.f32.mrf.mxu0
  %4785 = vmatprep.mubr.f32.mxu0 0.0
  %4786 = vmatmul.mubr.f32.gmra.mxu0 %v882
  %v4787 = vpop.f32.mrf.mxu0
  %v4788 = vadd.f32 0.0, %v4787
  %v4789 = vpop.f32.mrf.mxu0
  %4790 = vmatprep.mubr.f32.mxu0 0.0
  %4791 = vmatmul.mubr.f32.gmra.mxu0 %v885
  %v4792 = vpop.f32.mrf.mxu0
  %v4793 = vadd.f32 0.0, %v4792
  %v4794 = vpop.f32.mrf.mxu0
  %4795 = vmatprep.mubr.f32.mxu0 0.0
  %4796 = vmatmul.mubr.f32.gmra.mxu0 %v888
  %v4797 = vpop.f32.mrf.mxu0
  %v4798 = vadd.f32 0.0, %v4797
  %v4799 = vpop.f32.mrf.mxu0
  %4800 = vmatprep.mubr.f32.mxu0 0.0
  %4801 = vmatmul.mubr.f32.gmra.mxu0 %v891
  %v4802 = vpop.f32.mrf.mxu0
  %v4803 = vadd.f32 0.0, %v4802
  %v4804 = vpop.f32.mrf.mxu0
  %4805 = vmatprep.mubr.f32.mxu0 0.0
  %4806 = vmatmul.mubr.f32.gmra.mxu0 %v894
  %v4807 = vpop.f32.mrf.mxu0
  %v4808 = vadd.f32 0.0, %v4807
  %v4809 = vpop.f32.mrf.mxu0
  %4810 = vmatprep.mubr.f32.mxu0 0.0
  %4811 = vmatmul.mubr.f32.gmra.mxu0 %v897
  %v4812 = vpop.f32.mrf.mxu0
  %v4813 = vadd.f32 0.0, %v4812
  %v4814 = vpop.f32.mrf.mxu0
  %4815 = vdwg.mxu0
  %v4816 = vmul.f32 %v4480, %v4658
  %v4817 = vmul.f32 %v4481, %v4663
  %v4818 = vmul.f32 %v4482, %v4668
  %v4819 = vmul.f32 %v4483, %v4673
  %v4820 = vmul.f32 %v4484, %v4678
  %v4821 = vmul.f32 %v4485, %v4683
  %v4822 = vmul.f32 %v4486, %v4688
  %v4823 = vmul.f32 %v4487, %v4693
  %v4824 = vmul.f32 %v4488, %v4698
  %v4825 = vmul.f32 %v4489, %v4703
  %v4826 = vmul.f32 %v4490, %v4708
  %v4827 = vmul.f32 %v4491, %v4713
  %v4828 = vmul.f32 %v4492, %v4718
  %v4829 = vmul.f32 %v4493, %v4723
  %v4830 = vmul.f32 %v4494, %v4728
  %v4831 = vmul.f32 %v4495, %v4733
  %v4832 = vmul.f32 %v4496, %v4738
  %v4833 = vmul.f32 %v4497, %v4743
  %v4834 = vmul.f32 %v4498, %v4748
  %v4835 = vmul.f32 %v4499, %v4753
  %v4836 = vmul.f32 %v4500, %v4758
  %v4837 = vmul.f32 %v4501, %v4763
  %v4838 = vmul.f32 %v4502, %v4768
  %v4839 = vmul.f32 %v4503, %v4773
  %v4840 = vmul.f32 %v4504, %v4778
  %v4841 = vmul.f32 %v4505, %v4783
  %v4842 = vmul.f32 %v4506, %v4788
  %v4843 = vmul.f32 %v4507, %v4793
  %v4844 = vmul.f32 %v4508, %v4798
  %v4845 = vmul.f32 %v4509, %v4803
  %v4846 = vmul.f32 %v4510, %v4808
  %v4847 = vmul.f32 %v4511, %v4813
  %v4849 = vsel %vm1799, %v4816, 0
  %v4852 = vsel %vm1799, %v4817, 0
  %v4855 = vsel %vm1799, %v4818, 0
  %v4858 = vsel %vm1799, %v4819, 0
  %v4861 = vsel %vm1799, %v4820, 0
  %v4864 = vsel %vm1799, %v4821, 0
  %v4867 = vsel %vm1799, %v4822, 0
  %v4870 = vsel %vm1799, %v4823, 0
  %v4873 = vsel %vm1799, %v4824, 0
  %v4876 = vsel %vm1799, %v4825, 0
  %v4879 = vsel %vm1799, %v4826, 0
  %v4882 = vsel %vm1799, %v4827, 0
  %v4885 = vsel %vm1799, %v4828, 0
  %v4888 = vsel %vm1799, %v4829, 0
  %v4891 = vsel %vm1799, %v4830, 0
  %v4894 = vsel %vm1799, %v4831, 0
  %v4897 = vsel %vm1799, %v4832, 0
  %v4900 = vsel %vm1799, %v4833, 0
  %v4903 = vsel %vm1799, %v4834, 0
  %v4906 = vsel %vm1799, %v4835, 0
  %v4909 = vsel %vm1799, %v4836, 0
  %v4912 = vsel %vm1799, %v4837, 0
  %v4915 = vsel %vm1799, %v4838, 0
  %v4918 = vsel %vm1799, %v4839, 0
  %v4921 = vsel %vm1799, %v4840, 0
  %v4924 = vsel %vm1799, %v4841, 0
  %v4927 = vsel %vm1799, %v4842, 0
  %v4930 = vsel %vm1799, %v4843, 0
  %v4933 = vsel %vm1799, %v4844, 0
  %v4936 = vsel %vm1799, %v4845, 0
  %v4939 = vsel %vm1799, %v4846, 0
  %v4942 = vsel %vm1799, %v4847, 0
  %4944 = vmatprep.subr.mxu0 0.0
  %4945 = vmatpush1.msra.mxu0 0.0
  %4946 = vmatprep.subr.mxu0 0.0
  %4947 = vmatpush1.msra.mxu0 0.0
  %4948 = vmatprep.subr.mxu0 0.0
  %4949 = vmatpush1.msra.mxu0 0.0
  %4950 = vmatprep.subr.mxu0 0.0
  %4951 = vmatpush1.msra.mxu0 0.0
  %4952 = vmatprep.subr.mxu0 0.0
  %4953 = vmatpush1.msra.mxu0 0.0
  %4954 = vmatprep.subr.mxu0 0.0
  %4955 = vmatpush1.msra.mxu0 0.0
  %4956 = vmatprep.subr.mxu0 0.0
  %4957 = vmatpush1.msra.mxu0 0.0
  %4958 = vmatprep.subr.mxu0 0.0
  %4959 = vmatpush1.msra.mxu0 0.0
  %4960 = vmatprep.subr.mxu0 0.0
  %4961 = vmatpush1.msra.mxu0 0.0
  %4962 = vmatprep.subr.mxu0 0.0
  %4963 = vmatpush1.msra.mxu0 0.0
  %4964 = vmatprep.subr.mxu0 0.0
  %4965 = vmatpush1.msra.mxu0 0.0
  %4966 = vmatprep.subr.mxu0 0.0
  %4967 = vmatpush1.msra.mxu0 0.0
  %4968 = vmatprep.subr.mxu0 0.0
  %4969 = vmatpush1.msra.mxu0 0.0
  %4970 = vmatprep.subr.mxu0 0.0
  %4971 = vmatpush1.msra.mxu0 0.0
  %4972 = vmatprep.subr.mxu0 0.0
  %4973 = vmatpush1.msra.mxu0 0.0
  %4974 = vmatprep.subr.mxu0 0.0
  %4975 = vmatpush1.msra.mxu0 %v2590
  %4976 = vmatprep.subr.mxu0 0.0
  %4977 = vmatpush2.msra.mxu0 0.0
  %4978 = vmatprep.subr.mxu0 0.0
  %4979 = vmatpush2.msra.mxu0 0.0
  %4980 = vmatprep.subr.mxu0 0.0
  %4981 = vmatpush2.msra.mxu0 0.0
  %4982 = vmatprep.subr.mxu0 0.0
  %4983 = vmatpush2.msra.mxu0 0.0
  %4984 = vmatprep.subr.mxu0 0.0
  %4985 = vmatpush2.msra.mxu0 0.0
  %4986 = vmatprep.subr.mxu0 0.0
  %4987 = vmatpush2.msra.mxu0 0.0
  %4988 = vmatprep.subr.mxu0 0.0
  %4989 = vmatpush2.msra.mxu0 0.0
  %4990 = vmatprep.subr.mxu0 0.0
  %4991 = vmatpush2.msra.mxu0 0.0
  %4992 = vmatprep.subr.mxu0 0.0
  %4993 = vmatpush2.msra.mxu0 0.0
  %4994 = vmatprep.subr.mxu0 0.0
  %4995 = vmatpush2.msra.mxu0 0.0
  %4996 = vmatprep.subr.mxu0 0.0
  %4997 = vmatpush2.msra.mxu0 0.0
  %4998 = vmatprep.subr.mxu0 0.0
  %4999 = vmatpush2.msra.mxu0 0.0
  %5000 = vmatprep.subr.mxu0 0.0
  %5001 = vmatpush2.msra.mxu0 0.0
  %5002 = vmatprep.subr.mxu0 0.0
  %5003 = vmatpush2.msra.mxu0 0.0
  %5004 = vmatprep.subr.mxu0 0.0
  %5005 = vmatpush2.msra.mxu0 0.0
  %5006 = vmatprep.subr.mxu0 0.0
  %5007 = vmatpush2.msra.mxu0 0.0
  %5008 = vmatprep.mubr.f32.mxu0 0.0
  %5009 = vmatmul.mubr.f32.gmra.mxu0 %v4849
  %v5010 = vpop.f32.mrf.mxu0
  %v5011 = vadd.f32 0.0, %v5010
  %v5012 = vpop.f32.mrf.mxu0
  %5013 = vmatprep.mubr.f32.mxu0 0.0
  %5014 = vmatmul.mubr.f32.gmra.mxu0 %v4852
  %v5015 = vpop.f32.mrf.mxu0
  %v5016 = vadd.f32 0.0, %v5015
  %v5017 = vpop.f32.mrf.mxu0
  %5018 = vmatprep.mubr.f32.mxu0 0.0
  %5019 = vmatmul.mubr.f32.gmra.mxu0 %v4855
  %v5020 = vpop.f32.mrf.mxu0
  %v5021 = vadd.f32 0.0, %v5020
  %v5022 = vpop.f32.mrf.mxu0
  %5023 = vmatprep.mubr.f32.mxu0 0.0
  %5024 = vmatmul.mubr.f32.gmra.mxu0 %v4858
  %v5025 = vpop.f32.mrf.mxu0
  %v5026 = vadd.f32 0.0, %v5025
  %v5027 = vpop.f32.mrf.mxu0
  %5028 = vmatprep.mubr.f32.mxu0 0.0
  %5029 = vmatmul.mubr.f32.gmra.mxu0 %v4861
  %v5030 = vpop.f32.mrf.mxu0
  %v5031 = vadd.f32 0.0, %v5030
  %v5032 = vpop.f32.mrf.mxu0
  %5033 = vmatprep.mubr.f32.mxu0 0.0
  %5034 = vmatmul.mubr.f32.gmra.mxu0 %v4864
  %v5035 = vpop.f32.mrf.mxu0
  %v5036 = vadd.f32 0.0, %v5035
  %v5037 = vpop.f32.mrf.mxu0
  %5038 = vmatprep.mubr.f32.mxu0 0.0
  %5039 = vmatmul.mubr.f32.gmra.mxu0 %v4867
  %v5040 = vpop.f32.mrf.mxu0
  %v5041 = vadd.f32 0.0, %v5040
  %v5042 = vpop.f32.mrf.mxu0
  %5043 = vmatprep.mubr.f32.mxu0 0.0
  %5044 = vmatmul.mubr.f32.gmra.mxu0 %v4870
  %v5045 = vpop.f32.mrf.mxu0
  %v5046 = vadd.f32 0.0, %v5045
  %v5047 = vpop.f32.mrf.mxu0
  %5048 = vmatprep.mubr.f32.mxu0 0.0
  %5049 = vmatmul.mubr.f32.gmra.mxu0 %v4873
  %v5050 = vpop.f32.mrf.mxu0
  %v5051 = vadd.f32 0.0, %v5050
  %v5052 = vpop.f32.mrf.mxu0
  %5053 = vmatprep.mubr.f32.mxu0 0.0
  %5054 = vmatmul.mubr.f32.gmra.mxu0 %v4876
  %v5055 = vpop.f32.mrf.mxu0
  %v5056 = vadd.f32 0.0, %v5055
  %v5057 = vpop.f32.mrf.mxu0
  %5058 = vmatprep.mubr.f32.mxu0 0.0
  %5059 = vmatmul.mubr.f32.gmra.mxu0 %v4879
  %v5060 = vpop.f32.mrf.mxu0
  %v5061 = vadd.f32 0.0, %v5060
  %v5062 = vpop.f32.mrf.mxu0
  %5063 = vmatprep.mubr.f32.mxu0 0.0
  %5064 = vmatmul.mubr.f32.gmra.mxu0 %v4882
  %v5065 = vpop.f32.mrf.mxu0
  %v5066 = vadd.f32 0.0, %v5065
  %v5067 = vpop.f32.mrf.mxu0
  %5068 = vmatprep.mubr.f32.mxu0 0.0
  %5069 = vmatmul.mubr.f32.gmra.mxu0 %v4885
  %v5070 = vpop.f32.mrf.mxu0
  %v5071 = vadd.f32 0.0, %v5070
  %v5072 = vpop.f32.mrf.mxu0
  %5073 = vmatprep.mubr.f32.mxu0 0.0
  %5074 = vmatmul.mubr.f32.gmra.mxu0 %v4888
  %v5075 = vpop.f32.mrf.mxu0
  %v5076 = vadd.f32 0.0, %v5075
  %v5077 = vpop.f32.mrf.mxu0
  %5078 = vmatprep.mubr.f32.mxu0 0.0
  %5079 = vmatmul.mubr.f32.gmra.mxu0 %v4891
  %v5080 = vpop.f32.mrf.mxu0
  %v5081 = vadd.f32 0.0, %v5080
  %v5082 = vpop.f32.mrf.mxu0
  %5083 = vmatprep.mubr.f32.mxu0 0.0
  %5084 = vmatmul.mubr.f32.gmra.mxu0 %v4894
  %v5085 = vpop.f32.mrf.mxu0
  %v5086 = vadd.f32 0.0, %v5085
  %v5087 = vpop.f32.mrf.mxu0
  %5088 = vmatprep.mubr.f32.mxu0 0.0
  %5089 = vmatmul.mubr.f32.gmra.mxu0 %v4897
  %v5090 = vpop.f32.mrf.mxu0
  %v5091 = vadd.f32 0.0, %v5090
  %v5092 = vpop.f32.mrf.mxu0
  %5093 = vmatprep.mubr.f32.mxu0 0.0
  %5094 = vmatmul.mubr.f32.gmra.mxu0 %v4900
  %v5095 = vpop.f32.mrf.mxu0
  %v5096 = vadd.f32 0.0, %v5095
  %v5097 = vpop.f32.mrf.mxu0
  %5098 = vmatprep.mubr.f32.mxu0 0.0
  %5099 = vmatmul.mubr.f32.gmra.mxu0 %v4903
  %v5100 = vpop.f32.mrf.mxu0
  %v5101 = vadd.f32 0.0, %v5100
  %v5102 = vpop.f32.mrf.mxu0
  %5103 = vmatprep.mubr.f32.mxu0 0.0
  %5104 = vmatmul.mubr.f32.gmra.mxu0 %v4906
  %v5105 = vpop.f32.mrf.mxu0
  %v5106 = vadd.f32 0.0, %v5105
  %v5107 = vpop.f32.mrf.mxu0
  %5108 = vmatprep.mubr.f32.mxu0 0.0
  %5109 = vmatmul.mubr.f32.gmra.mxu0 %v4909
  %v5110 = vpop.f32.mrf.mxu0
  %v5111 = vadd.f32 0.0, %v5110
  %v5112 = vpop.f32.mrf.mxu0
  %5113 = vmatprep.mubr.f32.mxu0 0.0
  %5114 = vmatmul.mubr.f32.gmra.mxu0 %v4912
  %v5115 = vpop.f32.mrf.mxu0
  %v5116 = vadd.f32 0.0, %v5115
  %v5117 = vpop.f32.mrf.mxu0
  %5118 = vmatprep.mubr.f32.mxu0 0.0
  %5119 = vmatmul.mubr.f32.gmra.mxu0 %v4915
  %v5120 = vpop.f32.mrf.mxu0
  %v5121 = vadd.f32 0.0, %v5120
  %v5122 = vpop.f32.mrf.mxu0
  %5123 = vmatprep.mubr.f32.mxu0 0.0
  %5124 = vmatmul.mubr.f32.gmra.mxu0 %v4918
  %v5125 = vpop.f32.mrf.mxu0
  %v5126 = vadd.f32 0.0, %v5125
  %v5127 = vpop.f32.mrf.mxu0
  %5128 = vmatprep.mubr.f32.mxu0 0.0
  %5129 = vmatmul.mubr.f32.gmra.mxu0 %v4921
  %v5130 = vpop.f32.mrf.mxu0
  %v5131 = vadd.f32 0.0, %v5130
  %v5132 = vpop.f32.mrf.mxu0
  %5133 = vmatprep.mubr.f32.mxu0 0.0
  %5134 = vmatmul.mubr.f32.gmra.mxu0 %v4924
  %v5135 = vpop.f32.mrf.mxu0
  %v5136 = vadd.f32 0.0, %v5135
  %v5137 = vpop.f32.mrf.mxu0
  %5138 = vmatprep.mubr.f32.mxu0 0.0
  %5139 = vmatmul.mubr.f32.gmra.mxu0 %v4927
  %v5140 = vpop.f32.mrf.mxu0
  %v5141 = vadd.f32 0.0, %v5140
  %v5142 = vpop.f32.mrf.mxu0
  %5143 = vmatprep.mubr.f32.mxu0 0.0
  %5144 = vmatmul.mubr.f32.gmra.mxu0 %v4930
  %v5145 = vpop.f32.mrf.mxu0
  %v5146 = vadd.f32 0.0, %v5145
  %v5147 = vpop.f32.mrf.mxu0
  %5148 = vmatprep.mubr.f32.mxu0 0.0
  %5149 = vmatmul.mubr.f32.gmra.mxu0 %v4933
  %v5150 = vpop.f32.mrf.mxu0
  %v5151 = vadd.f32 0.0, %v5150
  %v5152 = vpop.f32.mrf.mxu0
  %5153 = vmatprep.mubr.f32.mxu0 0.0
  %5154 = vmatmul.mubr.f32.gmra.mxu0 %v4936
  %v5155 = vpop.f32.mrf.mxu0
  %v5156 = vadd.f32 0.0, %v5155
  %v5157 = vpop.f32.mrf.mxu0
  %5158 = vmatprep.mubr.f32.mxu0 0.0
  %5159 = vmatmul.mubr.f32.gmra.mxu0 %v4939
  %v5160 = vpop.f32.mrf.mxu0
  %v5161 = vadd.f32 0.0, %v5160
  %v5162 = vpop.f32.mrf.mxu0
  %5163 = vmatprep.mubr.f32.mxu0 0.0
  %5164 = vmatmul.mubr.f32.gmra.mxu0 %v4942
  %v5165 = vpop.f32.mrf.mxu0
  %v5166 = vadd.f32 0.0, %v5165
  %v5167 = vpop.f32.mrf.mxu0
  %5168 = vdwg.mxu0
  %v5169 = vmul.f32 %v5011, %v3258
  %v5170 = vmul.f32 %v5016, %v3263
  %v5171 = vmul.f32 %v5021, %v3268
  %v5172 = vmul.f32 %v5026, %v3273
  %v5173 = vmul.f32 %v5031, %v3278
  %v5174 = vmul.f32 %v5036, %v3283
  %v5175 = vmul.f32 %v5041, %v3288
  %v5176 = vmul.f32 %v5046, %v3293
  %v5177 = vmul.f32 %v5051, %v3298
  %v5178 = vmul.f32 %v5056, %v3303
  %v5179 = vmul.f32 %v5061, %v3308
  %v5180 = vmul.f32 %v5066, %v3313
  %v5181 = vmul.f32 %v5071, %v3318
  %v5182 = vmul.f32 %v5076, %v3323
  %v5183 = vmul.f32 %v5081, %v3328
  %v5184 = vmul.f32 %v5086, %v3333
  %v5185 = vmul.f32 %v5091, %v3338
  %v5186 = vmul.f32 %v5096, %v3343
  %v5187 = vmul.f32 %v5101, %v3348
  %v5188 = vmul.f32 %v5106, %v3353
  %v5189 = vmul.f32 %v5111, %v3358
  %v5190 = vmul.f32 %v5116, %v3363
  %v5191 = vmul.f32 %v5121, %v3368
  %v5192 = vmul.f32 %v5126, %v3373
  %v5193 = vmul.f32 %v5131, %v3378
  %v5194 = vmul.f32 %v5136, %v3383
  %v5195 = vmul.f32 %v5141, %v3388
  %v5196 = vmul.f32 %v5146, %v3393
  %v5197 = vmul.f32 %v5151, %v3398
  %v5198 = vmul.f32 %v5156, %v3403
  %v5199 = vmul.f32 %v5161, %v3408
  %v5200 = vmul.f32 %v5166, %v3413
  %v5202 = vlaneseq
  %v5203 = vshrl.u32 %v5202, 7
  %v5204 = vsub.s32 0, %v5203
  %v5205 = vrot.slane %v3019, %v5204
  %5207 = vmatprep.subr.mxu0 0.0
  %5208 = vmatpush1.msra.mxu0 %v5184
  %5209 = vmatprep.subr.mxu0 0.0
  %5210 = vmatpush1.msra.mxu0 %v5183
  %5211 = vmatprep.subr.mxu0 0.0
  %5212 = vmatpush1.msra.mxu0 %v5182
  %5213 = vmatprep.subr.mxu0 0.0
  %5214 = vmatpush1.msra.mxu0 %v5181
  %5215 = vmatprep.subr.mxu0 0.0
  %5216 = vmatpush1.msra.mxu0 %v5180
  %5217 = vmatprep.subr.mxu0 0.0
  %5218 = vmatpush1.msra.mxu0 %v5179
  %5219 = vmatprep.subr.mxu0 0.0
  %5220 = vmatpush1.msra.mxu0 %v5178
  %5221 = vmatprep.subr.mxu0 0.0
  %5222 = vmatpush1.msra.mxu0 %v5177
  %5223 = vmatprep.subr.mxu0 0.0
  %5224 = vmatpush1.msra.mxu0 %v5176
  %5225 = vmatprep.subr.mxu0 0.0
  %5226 = vmatpush1.msra.mxu0 %v5175
  %5227 = vmatprep.subr.mxu0 0.0
  %5228 = vmatpush1.msra.mxu0 %v5174
  %5229 = vmatprep.subr.mxu0 0.0
  %5230 = vmatpush1.msra.mxu0 %v5173
  %5231 = vmatprep.subr.mxu0 0.0
  %5232 = vmatpush1.msra.mxu0 %v5172
  %5233 = vmatprep.subr.mxu0 0.0
  %5234 = vmatpush1.msra.mxu0 %v5171
  %5235 = vmatprep.subr.mxu0 0.0
  %5236 = vmatpush1.msra.mxu0 %v5170
  %5237 = vmatprep.subr.mxu0 0.0
  %5238 = vmatpush1.msra.mxu0 %v5169
  %5239 = vmatprep.subr.mxu0 0.0
  %5240 = vmatpush2.msra.mxu0 %v5200
  %5241 = vmatprep.subr.mxu0 0.0
  %5242 = vmatpush2.msra.mxu0 %v5199
  %5243 = vmatprep.subr.mxu0 0.0
  %5244 = vmatpush2.msra.mxu0 %v5198
  %5245 = vmatprep.subr.mxu0 0.0
  %5246 = vmatpush2.msra.mxu0 %v5197
  %5247 = vmatprep.subr.mxu0 0.0
  %5248 = vmatpush2.msra.mxu0 %v5196
  %5249 = vmatprep.subr.mxu0 0.0
  %5250 = vmatpush2.msra.mxu0 %v5195
  %5251 = vmatprep.subr.mxu0 0.0
  %5252 = vmatpush2.msra.mxu0 %v5194
  %5253 = vmatprep.subr.mxu0 0.0
  %5254 = vmatpush2.msra.mxu0 %v5193
  %5255 = vmatprep.subr.mxu0 0.0
  %5256 = vmatpush2.msra.mxu0 %v5192
  %5257 = vmatprep.subr.mxu0 0.0
  %5258 = vmatpush2.msra.mxu0 %v5191
  %5259 = vmatprep.subr.mxu0 0.0
  %5260 = vmatpush2.msra.mxu0 %v5190
  %5261 = vmatprep.subr.mxu0 0.0
  %5262 = vmatpush2.msra.mxu0 %v5189
  %5263 = vmatprep.subr.mxu0 0.0
  %5264 = vmatpush2.msra.mxu0 %v5188
  %5265 = vmatprep.subr.mxu0 0.0
  %5266 = vmatpush2.msra.mxu0 %v5187
  %5267 = vmatprep.subr.mxu0 0.0
  %5268 = vmatpush2.msra.mxu0 %v5186
  %5269 = vmatprep.subr.mxu0 0.0
  %5270 = vmatpush2.msra.mxu0 %v5185
  %5271 = vmatprep.mubr.f32.mxu0 %v271
  %5272 = vmatmul.mubr.f32.gmra.mxu0 %v270
  %v5273 = vpop.f32.mrf.mxu0
  %v5274 = vadd.f32 %v5205, %v5273
  %v5275 = vpop.f32.mrf.mxu0
  %5276 = vmatprep.mubr.f32.mxu0 %v273
  %5277 = vmatmul.mubr.f32.gmra.mxu0 %v272
  %v5278 = vpop.f32.mrf.mxu0
  %v5279 = vadd.f32 %v5205, %v5278
  %v5280 = vpop.f32.mrf.mxu0
  %5281 = vdwg.mxu0
  %v5282 = vsel %vm1477, %v5274, 0.0
  %v5283 = vsel %vm1477, %v5279, 0.0
  %v5284 = vadd.f32 %v5282, %v5283
  %v5285 = vrot.slane %v5284, 4
  %v5286 = vadd.f32 %v5284, %v5285
  %v5287 = vrot.slane %v5286, 2
  %v5288 = vadd.f32 %v5286, %v5287
  %v5289 = vrot.slane %v5288, 1
  %v5290 = vadd.f32 %v5288, %v5289
  %v5291 = vmul.f32 %v5290, %v2939
  %v5292 = vmul.f32 %v5291, %v3022
  %v5293 = vlaneseq
  %v5294 = vshrl.u32 %v5293, 7
  %v5295 = vsub.s32 0, %v5294
  %v5296 = vrot.slane %v5292, %v5295
  %v5297 = vsub.f32 %v5274, %v5296
  %v5298 = vsub.f32 %v5279, %v5296
  %v5299 = vmul.f32 %v5297, %v5297
  %v5300 = vmul.f32 %v5298, %v5298
  %v5301 = vsel %vm1477, %v5299, 0.0
  %v5302 = vsel %vm1477, %v5300, 0.0
  %v5303 = vadd.f32 %v5301, %v5302
  %v5304 = vrot.slane %v5303, 4
  %v5305 = vadd.f32 %v5303, %v5304
  %v5306 = vrot.slane %v5305, 2
  %v5307 = vadd.f32 %v5305, %v5306
  %v5308 = vrot.slane %v5307, 1
  %v5309 = vadd.f32 %v5307, %v5308
  %v5310 = vmul.f32 %v5309, %v2939
  %v5312 = vlaneseq
  %v5313 = vshrl.u32 %v5312, 7
  %v5314 = vsub.s32 0, %v5313
  %v5315 = vrot.slane %v3020, %v5314
  %v5317 = vmul.f32 %v5315, %v5297
  %v5318 = vmul.f32 %v5315, %v5298
  %v5319 = vadd.f32 %v5310, 1e-05
  %v5320 = vrsqrt.pop %v5319
  %v5321 = vmul.f32 %v5319, %v5320
  %vm5322 = vcmp.eq.f32.partialorder %v5319, inf
  %v5323 = vsel %vm5322, %v5319, %v5321
  %vm5324 = vcmp.eq.f32.partialorder %v5319, 0.0
  %v5325 = vand.u32 %v5319, 2147483648
  %v5326 = vsel %vm5324, %v5325, %v5323
  %v5327 = vrcp.pop %v5326
  %v5328 = vmul.f32 %v5317, %v5327
  %v5329 = vmul.f32 %v5318, %v5327
  %v5331 = vlaneseq
  %v5332 = vshrl.u32 %v5331, 7
  %v5333 = vsub.s32 0, %v5332
  %v5334 = vrot.slane %v3021, %v5333
  %v5336 = vadd.f32 %v5328, %v5334
  %v5337 = vadd.f32 %v5329, %v5334
  %v5338 = vmax.f32 %v5336, 0.0
  %v5339 = vmax.f32 %v5337, 0.0
  %v5340 = vld [vmem:[%s55] sm:$0xff]
  %v5341 = vld [vmem:[%s55 + $0x8] sm:$0xff]
  %v5342 = vld [vmem:[%s55 + $0x10] sm:$0xff]
  %v5343 = vld [vmem:[%s55 + $0x18] sm:$0xff]
  %v5344 = vld [vmem:[%s57] sm:$0x1]
  %v5346 = vlaneseq
  %v5347 = vshrl.u32 %v5346, 7
  %v5348 = vsub.s32 0, %v5347
  %v5349 = vrot.slane %v5344, %v5348
  %v5352 = vsel %vm1477, %v5338, 0
  %v5355 = vsel %vm1477, %v5339, 0
  %5357 = vmatprep.subr.mxu0 0.0
  %5358 = vmatpush1.msra.mxu0 0.0
  %5359 = vmatprep.subr.mxu0 0.0
  %5360 = vmatpush1.msra.mxu0 0.0
  %5361 = vmatprep.subr.mxu0 0.0
  %5362 = vmatpush1.msra.mxu0 0.0
  %5363 = vmatprep.subr.mxu0 0.0
  %5364 = vmatpush1.msra.mxu0 0.0
  %5365 = vmatprep.subr.mxu0 0.0
  %5366 = vmatpush1.msra.mxu0 0.0
  %5367 = vmatprep.subr.mxu0 0.0
  %5368 = vmatpush1.msra.mxu0 0.0
  %5369 = vmatprep.subr.mxu0 0.0
  %5370 = vmatpush1.msra.mxu0 0.0
  %5371 = vmatprep.subr.mxu0 0.0
  %5372 = vmatpush1.msra.mxu0 0.0
  %5373 = vmatprep.subr.mxu0 0.0
  %5374 = vmatpush1.msra.mxu0 0.0
  %5375 = vmatprep.subr.mxu0 0.0
  %5376 = vmatpush1.msra.mxu0 0.0
  %5377 = vmatprep.subr.mxu0 0.0
  %5378 = vmatpush1.msra.mxu0 0.0
  %5379 = vmatprep.subr.mxu0 0.0
  %5380 = vmatpush1.msra.mxu0 0.0
  %5381 = vmatprep.subr.mxu0 0.0
  %5382 = vmatpush1.msra.mxu0 %v5343
  %5383 = vmatprep.subr.mxu0 0.0
  %5384 = vmatpush1.msra.mxu0 %v5342
  %5385 = vmatprep.subr.mxu0 0.0
  %5386 = vmatpush1.msra.mxu0 %v5341
  %5387 = vmatprep.subr.mxu0 0.0
  %5388 = vmatpush1.msra.mxu0 %v5340
  %5389 = vmatprep.subr.mxu0 0.0
  %5390 = vmatpush2.msra.mxu0 0.0
  %5391 = vmatprep.subr.mxu0 0.0
  %5392 = vmatpush2.msra.mxu0 0.0
  %5393 = vmatprep.subr.mxu0 0.0
  %5394 = vmatpush2.msra.mxu0 0.0
  %5395 = vmatprep.subr.mxu0 0.0
  %5396 = vmatpush2.msra.mxu0 0.0
  %5397 = vmatprep.subr.mxu0 0.0
  %5398 = vmatpush2.msra.mxu0 0.0
  %5399 = vmatprep.subr.mxu0 0.0
  %5400 = vmatpush2.msra.mxu0 0.0
  %5401 = vmatprep.subr.mxu0 0.0
  %5402 = vmatpush2.msra.mxu0 0.0
  %5403 = vmatprep.subr.mxu0 0.0
  %5404 = vmatpush2.msra.mxu0 0.0
  %5405 = vmatprep.subr.mxu0 0.0
  %5406 = vmatpush2.msra.mxu0 0.0
  %5407 = vmatprep.subr.mxu0 0.0
  %5408 = vmatpush2.msra.mxu0 0.0
  %5409 = vmatprep.subr.mxu0 0.0
  %5410 = vmatpush2.msra.mxu0 0.0
  %5411 = vmatprep.subr.mxu0 0.0
  %5412 = vmatpush2.msra.mxu0 0.0
  %5413 = vmatprep.subr.mxu0 0.0
  %5414 = vmatpush2.msra.mxu0 0.0
  %5415 = vmatprep.subr.mxu0 0.0
  %5416 = vmatpush2.msra.mxu0 0.0
  %5417 = vmatprep.subr.mxu0 0.0
  %5418 = vmatpush2.msra.mxu0 0.0
  %5419 = vmatprep.subr.mxu0 0.0
  %5420 = vmatpush2.msra.mxu0 0.0
  %5421 = vmatprep.mubr.f32.mxu0 0.0
  %5422 = vmatmul.mubr.f32.gmra.mxu0 %v5352
  %v5423 = vpop.f32.mrf.mxu0
  %v5424 = vadd.f32 %v5349, %v5423
  %v5425 = vpop.f32.mrf.mxu0
  %5426 = vmatprep.mubr.f32.mxu0 0.0
  %5427 = vmatmul.mubr.f32.gmra.mxu0 %v5355
  %v5428 = vpop.f32.mrf.mxu0
  %v5429 = vadd.f32 %v5349, %v5428
  %v5430 = vpop.f32.mrf.mxu0
  %5431 = vdwg.mxu0
  %v5432 = vmax.f32 %v5424, 0.0
  %v5433 = vmax.f32 %v5429, 0.0
  %v5434 = vld [vmem:[%s59] sm:$0xff]
  %v5435 = vld [vmem:[%s59 + $0x8] sm:$0xff]
  %v5436 = vld [vmem:[%s59 + $0x10] sm:$0xff]
  %v5437 = vld [vmem:[%s59 + $0x18] sm:$0xff]
  %v5438 = vld [vmem:[%s59 + $0x20] sm:$0xff]
  %v5439 = vld [vmem:[%s59 + $0x28] sm:$0xff]
  %v5440 = vld [vmem:[%s59 + $0x30] sm:$0xff]
  %v5441 = vld [vmem:[%s59 + $0x38] sm:$0xff]
  %v5442 = vld [vmem:[%s59 + $0x40] sm:$0xff]
  %v5443 = vld [vmem:[%s59 + $0x48] sm:$0xff]
  %v5444 = vld [vmem:[%s59 + $0x50] sm:$0xff]
  %v5445 = vld [vmem:[%s59 + $0x58] sm:$0xff]
  %v5446 = vld [vmem:[%s59 + $0x60] sm:$0xff]
  %v5447 = vld [vmem:[%s59 + $0x68] sm:$0xff]
  %v5448 = vld [vmem:[%s59 + $0x70] sm:$0xff]
  %v5449 = vld [vmem:[%s59 + $0x78] sm:$0xff]
  %v5450 = vld [vmem:[%s61] sm:$0x1]
  %v5452 = vlaneseq
  %v5453 = vshrl.u32 %v5452, 7
  %v5454 = vsub.s32 0, %v5453
  %v5455 = vrot.slane %v5450, %v5454
  %5457 = vmatprep.subr.mxu0 0.0
  %5458 = vmatpush1.msra.mxu0 %v5449
  %5459 = vmatprep.subr.mxu0 0.0
  %5460 = vmatpush1.msra.mxu0 %v5448
  %5461 = vmatprep.subr.mxu0 0.0
  %5462 = vmatpush1.msra.mxu0 %v5447
  %5463 = vmatprep.subr.mxu0 0.0
  %5464 = vmatpush1.msra.mxu0 %v5446
  %5465 = vmatprep.subr.mxu0 0.0
  %5466 = vmatpush1.msra.mxu0 %v5445
  %5467 = vmatprep.subr.mxu0 0.0
  %5468 = vmatpush1.msra.mxu0 %v5444
  %5469 = vmatprep.subr.mxu0 0.0
  %5470 = vmatpush1.msra.mxu0 %v5443
  %5471 = vmatprep.subr.mxu0 0.0
  %5472 = vmatpush1.msra.mxu0 %v5442
  %5473 = vmatprep.subr.mxu0 0.0
  %5474 = vmatpush1.msra.mxu0 %v5441
  %5475 = vmatprep.subr.mxu0 0.0
  %5476 = vmatpush1.msra.mxu0 %v5440
  %5477 = vmatprep.subr.mxu0 0.0
  %5478 = vmatpush1.msra.mxu0 %v5439
  %5479 = vmatprep.subr.mxu0 0.0
  %5480 = vmatpush1.msra.mxu0 %v5438
  %5481 = vmatprep.subr.mxu0 0.0
  %5482 = vmatpush1.msra.mxu0 %v5437
  %5483 = vmatprep.subr.mxu0 0.0
  %5484 = vmatpush1.msra.mxu0 %v5436
  %5485 = vmatprep.subr.mxu0 0.0
  %5486 = vmatpush1.msra.mxu0 %v5435
  %5487 = vmatprep.subr.mxu0 0.0
  %5488 = vmatpush1.msra.mxu0 %v5434
  %5489 = vmatprep.subr.mxu0 0.0
  %5490 = vmatpush2.msra.mxu0 0.0
  %5491 = vmatprep.subr.mxu0 0.0
  %5492 = vmatpush2.msra.mxu0 0.0
  %5493 = vmatprep.subr.mxu0 0.0
  %5494 = vmatpush2.msra.mxu0 0.0
  %5495 = vmatprep.subr.mxu0 0.0
  %5496 = vmatpush2.msra.mxu0 0.0
  %5497 = vmatprep.subr.mxu0 0.0
  %5498 = vmatpush2.msra.mxu0 0.0
  %5499 = vmatprep.subr.mxu0 0.0
  %5500 = vmatpush2.msra.mxu0 0.0
  %5501 = vmatprep.subr.mxu0 0.0
  %5502 = vmatpush2.msra.mxu0 0.0
  %5503 = vmatprep.subr.mxu0 0.0
  %5504 = vmatpush2.msra.mxu0 0.0
  %5505 = vmatprep.subr.mxu0 0.0
  %5506 = vmatpush2.msra.mxu0 0.0
  %5507 = vmatprep.subr.mxu0 0.0
  %5508 = vmatpush2.msra.mxu0 0.0
  %5509 = vmatprep.subr.mxu0 0.0
  %5510 = vmatpush2.msra.mxu0 0.0
  %5511 = vmatprep.subr.mxu0 0.0
  %5512 = vmatpush2.msra.mxu0 0.0
  %5513 = vmatprep.subr.mxu0 0.0
  %5514 = vmatpush2.msra.mxu0 0.0
  %5515 = vmatprep.subr.mxu0 0.0
  %5516 = vmatpush2.msra.mxu0 0.0
  %5517 = vmatprep.subr.mxu0 0.0
  %5518 = vmatpush2.msra.mxu0 0.0
  %5519 = vmatprep.subr.mxu0 0.0
  %5520 = vmatpush2.msra.mxu0 0.0
  %5521 = vmatprep.mubr.f32.mxu0 0.0
  %5522 = vmatmul.mubr.f32.gmra.mxu0 %v5432
  %v5523 = vpop.f32.mrf.mxu0
  %v5524 = vadd.f32 %v5455, %v5523
  %v5525 = vpop.f32.mrf.mxu0
  %5526 = vmatprep.mubr.f32.mxu0 0.0
  %5527 = vmatmul.mubr.f32.gmra.mxu0 %v5433
  %v5528 = vpop.f32.mrf.mxu0
  %v5529 = vadd.f32 %v5455, %v5528
  %v5530 = vpop.f32.mrf.mxu0
  %5531 = vdwg.mxu0
  %v5532 = vmax.f32 %v5524, 0.0
  %v5533 = vmax.f32 %v5529, 0.0
  %v5534 = vld [vmem:[%s63] sm:$0xff]
  %v5535 = vld [vmem:[%s63 + $0x8] sm:$0xff]
  %v5536 = vld [vmem:[%s63 + $0x10] sm:$0xff]
  %v5537 = vld [vmem:[%s63 + $0x18] sm:$0xff]
  %v5538 = vld [vmem:[%s63 + $0x20] sm:$0xff]
  %v5539 = vld [vmem:[%s63 + $0x28] sm:$0xff]
  %v5540 = vld [vmem:[%s63 + $0x30] sm:$0xff]
  %v5541 = vld [vmem:[%s63 + $0x38] sm:$0xff]
  %v5542 = vld [vmem:[#allocation2] sm:$0x1]
  %v5544 = vlaneseq
  %v5545 = vshrl.u32 %v5544, 7
  %v5546 = vsub.s32 0, %v5545
  %v5547 = vrot.slane %v5542, %v5546
  %vm5549 = vcmask 523264
  %v5551 = vsel %vm5549, %v5532, 0
  %v5554 = vsel %vm5549, %v5533, 0
  %5556 = vmatprep.subr.mxu0 0.0
  %5557 = vmatpush1.msra.mxu0 0.0
  %5558 = vmatprep.subr.mxu0 0.0
  %5559 = vmatpush1.msra.mxu0 0.0
  %5560 = vmatprep.subr.mxu0 0.0
  %5561 = vmatpush1.msra.mxu0 0.0
  %5562 = vmatprep.subr.mxu0 0.0
  %5563 = vmatpush1.msra.mxu0 0.0
  %5564 = vmatprep.subr.mxu0 0.0
  %5565 = vmatpush1.msra.mxu0 0.0
  %5566 = vmatprep.subr.mxu0 0.0
  %5567 = vmatpush1.msra.mxu0 0.0
  %5568 = vmatprep.subr.mxu0 0.0
  %5569 = vmatpush1.msra.mxu0 0.0
  %5570 = vmatprep.subr.mxu0 0.0
  %5571 = vmatpush1.msra.mxu0 0.0
  %5572 = vmatprep.subr.mxu0 0.0
  %5573 = vmatpush1.msra.mxu0 %v5541
  %5574 = vmatprep.subr.mxu0 0.0
  %5575 = vmatpush1.msra.mxu0 %v5540
  %5576 = vmatprep.subr.mxu0 0.0
  %5577 = vmatpush1.msra.mxu0 %v5539
  %5578 = vmatprep.subr.mxu0 0.0
  %5579 = vmatpush1.msra.mxu0 %v5538
  %5580 = vmatprep.subr.mxu0 0.0
  %5581 = vmatpush1.msra.mxu0 %v5537
  %5582 = vmatprep.subr.mxu0 0.0
  %5583 = vmatpush1.msra.mxu0 %v5536
  %5584 = vmatprep.subr.mxu0 0.0
  %5585 = vmatpush1.msra.mxu0 %v5535
  %5586 = vmatprep.subr.mxu0 0.0
  %5587 = vmatpush1.msra.mxu0 %v5534
  %5588 = vmatprep.subr.mxu0 0.0
  %5589 = vmatpush2.msra.mxu0 0.0
  %5590 = vmatprep.subr.mxu0 0.0
  %5591 = vmatpush2.msra.mxu0 0.0
  %5592 = vmatprep.subr.mxu0 0.0
  %5593 = vmatpush2.msra.mxu0 0.0
  %5594 = vmatprep.subr.mxu0 0.0
  %5595 = vmatpush2.msra.mxu0 0.0
  %5596 = vmatprep.subr.mxu0 0.0
  %5597 = vmatpush2.msra.mxu0 0.0
  %5598 = vmatprep.subr.mxu0 0.0
  %5599 = vmatpush2.msra.mxu0 0.0
  %5600 = vmatprep.subr.mxu0 0.0
  %5601 = vmatpush2.msra.mxu0 0.0
  %5602 = vmatprep.subr.mxu0 0.0
  %5603 = vmatpush2.msra.mxu0 0.0
  %5604 = vmatprep.subr.mxu0 0.0
  %5605 = vmatpush2.msra.mxu0 0.0
  %5606 = vmatprep.subr.mxu0 0.0
  %5607 = vmatpush2.msra.mxu0 0.0
  %5608 = vmatprep.subr.mxu0 0.0
  %5609 = vmatpush2.msra.mxu0 0.0
  %5610 = vmatprep.subr.mxu0 0.0
  %5611 = vmatpush2.msra.mxu0 0.0
  %5612 = vmatprep.subr.mxu0 0.0
  %5613 = vmatpush2.msra.mxu0 0.0
  %5614 = vmatprep.subr.mxu0 0.0
  %5615 = vmatpush2.msra.mxu0 0.0
  %5616 = vmatprep.subr.mxu0 0.0
  %5617 = vmatpush2.msra.mxu0 0.0
  %5618 = vmatprep.subr.mxu0 0.0
  %5619 = vmatpush2.msra.mxu0 0.0
  %5620 = vmatprep.mubr.f32.mxu0 0.0
  %5621 = vmatmul.mubr.f32.gmra.mxu0 %v5551
  %v5622 = vpop.f32.mrf.mxu0
  %v5623 = vadd.f32 %v5547, %v5622
  %v5624 = vpop.f32.mrf.mxu0
  %5625 = vmatprep.mubr.f32.mxu0 0.0
  %5626 = vmatmul.mubr.f32.gmra.mxu0 %v5554
  %v5627 = vpop.f32.mrf.mxu0
  %v5628 = vadd.f32 %v5547, %v5627
  %v5629 = vpop.f32.mrf.mxu0
  %5630 = vdwg.mxu0
  %vm5631 = vcmask 7168
  %5632 = vst.msk [vmem:[%s67] sm:$0xff] %vm5631, %v5623
  %5633 = vst.msk [vmem:[%s67 + $0x8] sm:$0xff] %vm5631, %v5628
  // Predicated region
  $region134: #{tpu_custom_call.1} parent=0 // pred_check
    _
  $region135: #{tpu_custom_call.1} parent=0 // pred_check_branch
    %5635 = sbr.rel (0) target = $region137
  $region136: #{tpu_custom_call.1} parent=0 // pred_region
    _
  $region137: #{tpu_custom_call.1} parent=0 // pred_fallthru
    _
  // Predicated region
  $region138: #{tpu_custom_call.1} parent=0 // pred_check
    _
  $region139: #{tpu_custom_call.1} parent=0 // pred_check_branch
    %5637 = sbr.rel (0) target = $region141
  $region140: #{tpu_custom_call.1} parent=0 // pred_region
    _
  $region141: #{tpu_custom_call.1} parent=0 // pred_fallthru
    _

</llo_original>
